<compile_context>
chip_gen: v5e
topology: v5e:2x2
jax: 0.10.0
libtpu: 0.0.40
codegen_flags: <defaults>
</compile_context>

<pallas_src>
import functools

import jax
import jax.numpy as jnp
from jax import lax
from jax.experimental import pallas as pl
from jax.experimental.pallas import tpu as pltpu


def _round_up(n, m):
    return ((n + m - 1) // m) * m


def _lstm_logsoftmax_kernel(x_ref, h0_ref, c0_ref, wih_ref, whh_ref, b_ref,
                            out_ref, h_out_ref, c_out_ref, xproj_sc):
    """Single invocation: whole (padded) problem resident in VMEM.

    x_ref   : (T, Bp, Ip)   time-major padded input (matmul dtype)
    wih_ref : (Ip, 4*Hp)    W_ih^T, gate-blocked & zero-padded (matmul dtype)
    whh_ref : (Hp, 4*Hp)    W_hh^T, gate-blocked & zero-padded (matmul dtype)
    b_ref   : (1, 4*Hp)     bias_ih + bias_hh, gate-blocked & zero-padded (f32)
    out_ref : (T, Bp, Hp)   LSTM outputs, then LogSoftmax over the time axis (f32)
    xproj_sc: (T, Bp, 4*Hp) hoisted input projection scratch (matmul dtype)
    """
    T, Bp, Ip = x_ref.shape
    Hp = h0_ref.shape[1]
    mm_dtype = whh_ref.dtype
    unroll = min(T, 8)

    bias = b_ref[...].astype(jnp.float32)                           # (1, 4Hp)

    # ---- Phase 1: hoisted input projection, time-chunked (<=512 MXU rows per chunk). ----
    tc = min(T, max(1, 512 // Bp))
    n_full = T // tc
    rem = T - n_full * tc

    def _project(t0, nt):
        xc = x_ref[pl.ds(t0, nt)]                                    # (nt, Bp, Ip)
        p = jnp.dot(xc.reshape(nt * Bp, Ip), wih_ref[...],
                    preferred_element_type=jnp.float32) + bias
        xproj_sc[pl.ds(t0, nt)] = p.reshape(nt, Bp, 4 * Hp).astype(xproj_sc.dtype)

    def proj_chunk(c, carry):
        _project(pl.multiple_of(c * tc, tc), tc)
        return carry

    lax.fori_loop(0, n_full, proj_chunk, 0)
    if rem:
        _project(n_full * tc, rem)

    # ---- Phase 2: sequential recurrence; h/c and the online-LSE stats carried in vregs. ----
    def step(t, carry):
        h, c, m, s = carry
        gates = (jnp.dot(h.astype(mm_dtype), whh_ref[...],
                         preferred_element_type=jnp.float32)
                 + xproj_sc[t].astype(jnp.float32))                  # (Bp, 4Hp)
        # Gate slices are whole 128-lane vregs (Hp is a multiple of 128).
        i_g = jax.nn.sigmoid(gates[:, 0 * Hp:1 * Hp])
        f_g = jax.nn.sigmoid(gates[:, 1 * Hp:2 * Hp])
        g_g = jnp.tanh(gates[:, 2 * Hp:3 * Hp])
        o_g = jax.nn.sigmoid(gates[:, 3 * Hp:4 * Hp])
        c_new = f_g * c + i_g * g_g
        h_new = o_g * jnp.tanh(c_new)
        out_ref[t] = h_new
        # Online logsumexp over the *time* axis (free VPU/EUP filler under the serial chain).
        m_new = jnp.maximum(m, h_new)
        s_new = s * jnp.exp(m - m_new) + jnp.exp(h_new - m_new)
        return h_new, c_new, m_new, s_new

    h0 = h0_ref[...]
    init = (h0, c0_ref[...], jnp.full_like(h0, -jnp.inf), jnp.zeros_like(h0))
    h_fin, c_fin, m_fin, s_fin = lax.fori_loop(0, T, step, init, unroll=unroll)
    h_out_ref[...] = h_fin
    c_out_ref[...] = c_fin

    # ---- Phase 3: LogSoftmax over the *time* axis (PyTorch dim=1 with batch_first). ----
    # TODO(synk): dim=1 normalizes across time steps, not over vocab/features — this is
    # almost certainly a bug in the original module, but it is reproduced faithfully.
    lse = m_fin + jnp.log(s_fin)                                     # (Bp, Hp)

    def sub(t, carry):
        out_ref[t] = out_ref[t] - lse
        return carry

    lax.fori_loop(0, T, sub, 0, unroll=unroll)


@functools.partial(jax.jit, static_argnames=("matmul_dtype",))
def decoder_rnn_forward(input_seq, hidden_state, params, matmul_dtype=jnp.bfloat16):
    """input_seq: (B, T, I) f32; hidden_state = (h0, c0) each (1, B, H)."""
    h0, c0 = hidden_state
    B, T, I = input_seq.shape
    H = h0.shape[-1]
    # .view(batch, seq_len, input_size) in the original module is only valid if I == H.
    assert I == H, "DecoderRNN.forward requires input_size == hidden_size"

    Bp = _round_up(max(B, 8), 8)     # full sublane group
    Hp = _round_up(H, 128)           # full lane width -> lane-dense stores, vreg-whole gates
    Ip = _round_up(I, 128)

    # ---- Plain-JAX glue: layout transpose + zero-padded, gate-blocked weight packing. ----
    x_tm = jnp.transpose(input_seq, (1, 0, 2))                       # (T, B, I) time-major
    x_p = jnp.zeros((T, Bp, Ip), matmul_dtype).at[:, :B, :I].set(
        x_tm.astype(matmul_dtype))

    def pack_w(w, in_dim, in_pad):
        # w: (4H, in_dim) PyTorch layout, gates stacked [i, f, g, o].
        wt = w.T.reshape(in_dim, 4, H)                               # (in, gate, H)
        wp = jnp.zeros((in_pad, 4, Hp), matmul_dtype)
        wp = wp.at[:in_dim, :, :H].set(wt.astype(matmul_dtype))
        return wp.reshape(in_pad, 4 * Hp)

    wih_p = pack_w(params["weight_ih"], I, Ip)                       # (Ip, 4Hp)
    whh_p = pack_w(params["weight_hh"], H, Hp)                       # (Hp, 4Hp)

    b = (params["bias_ih"] + params["bias_hh"]).reshape(4, H)
    b_p = jnp.zeros((4, Hp), jnp.float32).at[:, :H].set(b).reshape(1, 4 * Hp)

    h0_p = jnp.zeros((Bp, Hp), jnp.float32).at[:B, :H].set(h0[0])
    c0_p = jnp.zeros((Bp, Hp), jnp.float32).at[:B, :H].set(c0[0])

    # ---- Resident VMEM footprint (no double-buffering: grid-less call). ----
    mm_sz = jnp.dtype(matmul_dtype).itemsize
    f32_sz = 4
    footprint = (x_p.size * mm_sz                                    # x
                 + (wih_p.size + whh_p.size) * mm_sz                 # weights
                 + b_p.size * f32_sz                                 # bias
                 + 2 * Bp * Hp * f32_sz                              # h0, c0
                 + (T * Bp * Hp + 2 * Bp * Hp) * f32_sz              # outputs
                 + T * Bp * 4 * Hp * mm_sz)                          # xproj scratch
    vmem_cap = 48 * 1024 * 1024  # fits inside v7x's 64 MiB physical VMEM with headroom
    # TODO(synk): fall back to a time-chunked emit_pipeline path instead of asserting.
    assert footprint <= vmem_cap, (
        f"resident footprint {footprint} B exceeds {vmem_cap} B; sequence too long to stay "
        f"fully VMEM-resident")
    vmem_limit = int(min(max(2 * footprint, 32 * 1024 * 1024), vmem_cap))

    # Advisory cost estimate (padded shapes).
    flops = 2 * T * Bp * Ip * 4 * Hp + 2 * T * Bp * Hp * 4 * Hp
    transcendentals = T * Bp * (4 * Hp + Hp) + 2 * T * Bp * Hp
    bytes_accessed = footprint

    def vmem_spec():
        return pl.BlockSpec(memory_space=pltpu.MemorySpace.VMEM)

    out_p, h_out, c_out = pl.pallas_call(
        _lstm_logsoftmax_kernel,
        out_shape=(
            jax.ShapeDtypeStruct((T, Bp, Hp), jnp.float32),
            jax.ShapeDtypeStruct((Bp, Hp), jnp.float32),
            jax.ShapeDtypeStruct((Bp, Hp), jnp.float32),
        ),
        in_specs=[vmem_spec() for _ in range(6)],
        out_specs=(vmem_spec(), vmem_spec(), vmem_spec()),
        scratch_shapes=[pltpu.VMEM((T, Bp, 4 * Hp), matmul_dtype)],  # hoisted x-projection
        compiler_params=pltpu.CompilerParams(vmem_limit_bytes=vmem_limit),
        cost_estimate=pl.CostEstimate(
            flops=flops, transcendentals=transcendentals, bytes_accessed=bytes_accessed),
    )(x_p, h0_p, c0_p, wih_p, whh_p, b_p)

    # Un-pad and return to the PyTorch batch_first layout.
    output = jnp.transpose(out_p[:, :B, :H], (1, 0, 2)).reshape(B, T, I)
    h_n = h_out[:B, :H][None]
    c_n = c_out[:B, :H][None]
    return output, (h_n, c_n)


def init_params(key, input_size, hidden_size, vocab_size):
    """nn.LSTM-shaped params (uniform +/- 1/sqrt(H)).  Embedding / Linear(out) are created
    for module parity but are unused in forward(), exactly like the PyTorch module."""
    k = 1.0 / jnp.sqrt(jnp.float32(hidden_size))
    keys = jax.random.split(key, 6)
    return {
        "weight_ih": jax.random.uniform(keys[0], (4 * hidden_size, input_size),
                                        jnp.float32, -k, k),
        "weight_hh": jax.random.uniform(keys[1], (4 * hidden_size, hidden_size),
                                        jnp.float32, -k, k),
        "bias_ih": jax.random.uniform(keys[2], (4 * hidden_size,), jnp.float32, -k, k),
        "bias_hh": jax.random.uniform(keys[3], (4 * hidden_size,), jnp.float32, -k, k),
        # Unused in forward (kept for module parity):
        "embedding": jax.random.normal(keys[4], (vocab_size, input_size), jnp.float32),
        "out_w": jax.random.uniform(keys[5], (vocab_size, hidden_size),
                                    jnp.float32, -k, k),
    }


def _reference_forward(input_seq, hidden_state, params):
    """Pure-JAX reference matching the PyTorch module (for correctness check)."""
    h, c = hidden_state[0][0], hidden_state[1][0]
    W_ih, W_hh = params["weight_ih"], params["weight_hh"]
    b = params["bias_ih"] + params["bias_hh"]
    B, T, I = input_seq.shape
    H = h.shape[-1]
    outs = []
    for t in range(T):
        g = input_seq[:, t, :] @ W_ih.T + h @ W_hh.T + b
        i_g = jax.nn.sigmoid(g[:, 0 * H:1 * H])
        f_g = jax.nn.sigmoid(g[:, 1 * H:2 * H])
        g_g = jnp.tanh(g[:, 2 * H:3 * H])
        o_g = jax.nn.sigmoid(g[:, 3 * H:4 * H])
        c = f_g * c + i_g * g_g
        h = o_g * jnp.tanh(c)
        outs.append(h)
    out = jnp.stack(outs, axis=1)                      # (B, T, H)
    out = jax.nn.log_softmax(out, axis=1)              # dim=1 == sequence axis
    return out.reshape(B, T, I), (h[None], c[None])


if __name__ == "__main__":
    BATCH, SEQ, HIDDEN, VOCAB = 2, 8, 32, 40
    INPUT = HIDDEN  # required by the module's .view(batch, seq_len, input_size)

    root = jax.random.PRNGKey(0)
    k_param, k_x = jax.random.split(root)
    params = init_params(k_param, INPUT, HIDDEN, VOCAB)

    input_seq = jax.random.normal(k_x, (BATCH, SEQ, INPUT), jnp.float32)
    # init_hidden(): zeros of shape (n_layers, batch, hidden)
    h0 = jnp.zeros((1, BATCH, HIDDEN), jnp.float32)
    c0 = jnp.zeros((1, BATCH, HIDDEN), jnp.float32)

    output, (h_n, c_n) = decoder_rnn_forward(input_seq, (h0, c0), params)
    jax.block_until_ready((output, h_n, c_n))

    assert output.shape == (BATCH, SEQ, INPUT)
    assert h_n.shape == (1, BATCH, HIDDEN) and c_n.shape == (1, BATCH, HIDDEN)

    # Correctness vs. pure-JAX reference (tolerance covers bf16 MXU operands, f32 accumulate).
    ref_out, (ref_h, ref_c) = _reference_forward(input_seq, (h0, c0), params)
    assert float(jnp.max(jnp.abs(output - ref_out))) < 5e-2
    assert float(jnp.max(jnp.abs(h_n - ref_h))) < 5e-2
    assert float(jnp.max(jnp.abs(c_n - ref_c))) < 5e-2

    print("KERNEL_OK")
</pallas_src>

<mosaic_0001>
module attributes {stable_mosaic.version = 11 : i64} {
  func.func @_lstm_logsoftmax_kernel(%arg0: memref<8x8x128xbf16, #tpu.memory_space<vmem>>, %arg1: memref<8x128xf32, #tpu.memory_space<vmem>>, %arg2: memref<8x128xf32, #tpu.memory_space<vmem>>, %arg3: memref<128x512xbf16, #tpu.memory_space<vmem>>, %arg4: memref<128x512xbf16, #tpu.memory_space<vmem>>, %arg5: memref<1x512xf32, #tpu.memory_space<vmem>>, %arg6: memref<8x8x128xf32, #tpu.memory_space<vmem>>, %arg7: memref<8x128xf32, #tpu.memory_space<vmem>>, %arg8: memref<8x128xf32, #tpu.memory_space<vmem>>, %arg9: memref<8x8x512xbf16, #tpu.memory_space<vmem>>) attributes {dimension_semantics = [], scalar_prefetch = 0 : i64, scratch_operands = 1 : i64, tpu.core_type = #tpu.core_type<tc>} {
    %c0 = arith.constant 0 : index
    %c0_0 = arith.constant 0 : index
    %0 = vector.load %arg5[%c0, %c0_0] : memref<1x512xf32, #tpu.memory_space<vmem>>, vector<1x512xf32>
    %c0_i32 = arith.constant 0 : i32
    %c8_i32 = arith.constant 8 : i32
    %1 = arith.muli %c0_i32, %c8_i32 : i32
    %2 = tpu.assume_multiple %1, 8 : i32
    %3 = arith.index_cast %2 : i32 to index
    %c0_1 = arith.constant 0 : index
    %c0_2 = arith.constant 0 : index
    %4 = vector.load %arg0[%3, %c0_1, %c0_2] : memref<8x8x128xbf16, #tpu.memory_space<vmem>>, vector<8x8x128xbf16>
    %5 = vector.shape_cast %4 : vector<8x8x128xbf16> to vector<64x128xbf16>
    %c0_3 = arith.constant 0 : index
    %c0_4 = arith.constant 0 : index
    %6 = vector.load %arg3[%c0_3, %c0_4] : memref<128x512xbf16, #tpu.memory_space<vmem>>, vector<128x512xbf16>
    %cst = arith.constant dense<0.000000e+00> : vector<64x512xf32>
    %7 = tpu.matmul %5, %6, %cst {dimension_numbers = #tpu.dot_dimension_numbers<[1], [0], [0], [1], [0, 0, 1, 1], [], []>} : vector<64x128xbf16>, vector<128x512xbf16>, vector<64x512xf32> -> vector<64x512xf32>
    %8 = vector.broadcast %0 : vector<1x512xf32> to vector<64x512xf32>
    %9 = arith.addf %7, %8 : vector<64x512xf32>
    %10 = vector.shape_cast %9 : vector<64x512xf32> to vector<8x8x512xf32>
    %11 = arith.truncf %10 : vector<8x8x512xf32> to vector<8x8x512xbf16>
    %12 = arith.index_cast %2 : i32 to index
    %c0_5 = arith.constant 0 : index
    %c0_6 = arith.constant 0 : index
    %13 = vector.load %arg9[%12, %c0_5, %c0_6] : memref<8x8x512xbf16, #tpu.memory_space<vmem>>, vector<8x8x512xbf16>
    tpu.vector_store %arg9[%12, %c0_5, %c0_6], %11 {strides = array<i32>} : memref<8x8x512xbf16, #tpu.memory_space<vmem>>, vector<8x8x512xbf16>,
    %c1_i32 = arith.constant 1 : i32
    %c0_7 = arith.constant 0 : index
    %c0_8 = arith.constant 0 : index
    %14 = vector.load %arg1[%c0_7, %c0_8] : memref<8x128xf32, #tpu.memory_space<vmem>>, vector<8x128xf32>
    %c0_9 = arith.constant 0 : index
    %c0_10 = arith.constant 0 : index
    %15 = vector.load %arg2[%c0_9, %c0_10] : memref<8x128xf32, #tpu.memory_space<vmem>>, vector<8x128xf32>
    %cst_11 = arith.constant 0xFF800000 : f32
    %16 = vector.broadcast %cst_11 : f32 to vector<8x128xf32>
    %cst_12 = arith.constant 0.000000e+00 : f32
    %17 = vector.broadcast %cst_12 : f32 to vector<8x128xf32>
    %c0_i32_13 = arith.constant 0 : i32
    %18 = arith.truncf %14 : vector<8x128xf32> to vector<8x128xbf16>
    %c0_14 = arith.constant 0 : index
    %c0_15 = arith.constant 0 : index
    %19 = vector.load %arg4[%c0_14, %c0_15] : memref<128x512xbf16, #tpu.memory_space<vmem>>, vector<128x512xbf16>
    %cst_16 = arith.constant dense<0.000000e+00> : vector<8x512xf32>
    %20 = tpu.matmul %18, %19, %cst_16 {dimension_numbers = #tpu.dot_dimension_numbers<[1], [0], [0], [1], [0, 0, 1, 1], [], []>} : vector<8x128xbf16>, vector<128x512xbf16>, vector<8x512xf32> -> vector<8x512xf32>
    %21 = arith.index_cast %c0_i32_13 : i32 to index
    %c0_17 = arith.constant 0 : index
    %c0_18 = arith.constant 0 : index
    %22 = vector.load %arg9[%21, %c0_17, %c0_18] : memref<8x8x512xbf16, #tpu.memory_space<vmem>>, vector<1x8x512xbf16>
    %23 = vector.shape_cast %22 : vector<1x8x512xbf16> to vector<8x512xbf16>
    %24 = arith.extf %23 : vector<8x512xbf16> to vector<8x512xf32>
    %25 = arith.addf %20, %24 : vector<8x512xf32>
    %26 = vector.extract_strided_slice %25 {offsets = [0, 0], sizes = [8, 128], strides = [1, 1]} : vector<8x512xf32> to vector<8x128xf32>
    %27 = arith.negf %26 : vector<8x128xf32>
    %28 = math.exp %27 : vector<8x128xf32>
    %cst_19 = arith.constant 1.000000e+00 : f32
    %29 = vector.broadcast %cst_19 : f32 to vector<8x128xf32>
    %30 = arith.addf %29, %28 : vector<8x128xf32>
    %31 = arith.divf %29, %30 : vector<8x128xf32>
    %32 = vector.extract_strided_slice %25 {offsets = [0, 128], sizes = [8, 128], strides = [1, 1]} : vector<8x512xf32> to vector<8x128xf32>
    %33 = arith.negf %32 : vector<8x128xf32>
    %34 = math.exp %33 : vector<8x128xf32>
    %cst_20 = arith.constant 1.000000e+00 : f32
    %35 = vector.broadcast %cst_20 : f32 to vector<8x128xf32>
    %36 = arith.addf %35, %34 : vector<8x128xf32>
    %37 = arith.divf %35, %36 : vector<8x128xf32>
    %38 = vector.extract_strided_slice %25 {offsets = [0, 256], sizes = [8, 128], strides = [1, 1]} : vector<8x512xf32> to vector<8x128xf32>
    %39 = math.tanh %38 : vector<8x128xf32>
    %40 = vector.extract_strided_slice %25 {offsets = [0, 384], sizes = [8, 128], strides = [1, 1]} : vector<8x512xf32> to vector<8x128xf32>
    %41 = arith.negf %40 : vector<8x128xf32>
    %42 = math.exp %41 : vector<8x128xf32>
    %cst_21 = arith.constant 1.000000e+00 : f32
    %43 = vector.broadcast %cst_21 : f32 to vector<8x128xf32>
    %44 = arith.addf %43, %42 : vector<8x128xf32>
    %45 = arith.divf %43, %44 : vector<8x128xf32>
    %46 = arith.mulf %37, %15 : vector<8x128xf32>
    %47 = arith.mulf %31, %39 : vector<8x128xf32>
    %48 = arith.addf %46, %47 : vector<8x128xf32>
    %49 = math.tanh %48 : vector<8x128xf32>
    %50 = arith.mulf %45, %49 : vector<8x128xf32>
    %51 = arith.index_cast %c0_i32_13 : i32 to index
    %c0_22 = arith.constant 0 : index
    %c0_23 = arith.constant 0 : index
    %52 = vector.load %arg6[%51, %c0_22, %c0_23] : memref<8x8x128xf32, #tpu.memory_space<vmem>>, vector<1x8x128xf32>
    %53 = vector.shape_cast %52 : vector<1x8x128xf32> to vector<8x128xf32>
    %54 = vector.shape_cast %50 : vector<8x128xf32> to vector<1x8x128xf32>
    tpu.vector_store %arg6[%51, %c0_22, %c0_23], %54 {strides = array<i32>} : memref<8x8x128xf32, #tpu.memory_space<vmem>>, vector<1x8x128xf32>,
    %55 = arith.maximumf %16, %50 : vector<8x128xf32>
    %56 = arith.subf %16, %55 : vector<8x128xf32>
    %57 = math.exp %56 : vector<8x128xf32>
    %58 = arith.mulf %17, %57 : vector<8x128xf32>
    %59 = arith.subf %50, %55 : vector<8x128xf32>
    %60 = math.exp %59 : vector<8x128xf32>
    %61 = arith.addf %58, %60 : vector<8x128xf32>
    %c1_i32_24 = arith.constant 1 : i32
    %62 = arith.truncf %50 : vector<8x128xf32> to vector<8x128xbf16>
    %c0_25 = arith.constant 0 : index
    %c0_26 = arith.constant 0 : index
    %63 = vector.load %arg4[%c0_25, %c0_26] : memref<128x512xbf16, #tpu.memory_space<vmem>>, vector<128x512xbf16>
    %cst_27 = arith.constant dense<0.000000e+00> : vector<8x512xf32>
    %64 = tpu.matmul %62, %63, %cst_27 {dimension_numbers = #tpu.dot_dimension_numbers<[1], [0], [0], [1], [0, 0, 1, 1], [], []>} : vector<8x128xbf16>, vector<128x512xbf16>, vector<8x512xf32> -> vector<8x512xf32>
    %65 = arith.index_cast %c1_i32_24 : i32 to index
    %c0_28 = arith.constant 0 : index
    %c0_29 = arith.constant 0 : index
    %66 = vector.load %arg9[%65, %c0_28, %c0_29] : memref<8x8x512xbf16, #tpu.memory_space<vmem>>, vector<1x8x512xbf16>
    %67 = vector.shape_cast %66 : vector<1x8x512xbf16> to vector<8x512xbf16>
    %68 = arith.extf %67 : vector<8x512xbf16> to vector<8x512xf32>
    %69 = arith.addf %64, %68 : vector<8x512xf32>
    %70 = vector.extract_strided_slice %69 {offsets = [0, 0], sizes = [8, 128], strides = [1, 1]} : vector<8x512xf32> to vector<8x128xf32>
    %71 = arith.negf %70 : vector<8x128xf32>
    %72 = math.exp %71 : vector<8x128xf32>
    %cst_30 = arith.constant 1.000000e+00 : f32
    %73 = vector.broadcast %cst_30 : f32 to vector<8x128xf32>
    %74 = arith.addf %73, %72 : vector<8x128xf32>
    %75 = arith.divf %73, %74 : vector<8x128xf32>
    %76 = vector.extract_strided_slice %69 {offsets = [0, 128], sizes = [8, 128], strides = [1, 1]} : vector<8x512xf32> to vector<8x128xf32>
    %77 = arith.negf %76 : vector<8x128xf32>
    %78 = math.exp %77 : vector<8x128xf32>
    %cst_31 = arith.constant 1.000000e+00 : f32
    %79 = vector.broadcast %cst_31 : f32 to vector<8x128xf32>
    %80 = arith.addf %79, %78 : vector<8x128xf32>
    %81 = arith.divf %79, %80 : vector<8x128xf32>
    %82 = vector.extract_strided_slice %69 {offsets = [0, 256], sizes = [8, 128], strides = [1, 1]} : vector<8x512xf32> to vector<8x128xf32>
    %83 = math.tanh %82 : vector<8x128xf32>
    %84 = vector.extract_strided_slice %69 {offsets = [0, 384], sizes = [8, 128], strides = [1, 1]} : vector<8x512xf32> to vector<8x128xf32>
    %85 = arith.negf %84 : vector<8x128xf32>
    %86 = math.exp %85 : vector<8x128xf32>
    %cst_32 = arith.constant 1.000000e+00 : f32
    %87 = vector.broadcast %cst_32 : f32 to vector<8x128xf32>
    %88 = arith.addf %87, %86 : vector<8x128xf32>
    %89 = arith.divf %87, %88 : vector<8x128xf32>
    %90 = arith.mulf %81, %48 : vector<8x128xf32>
    %91 = arith.mulf %75, %83 : vector<8x128xf32>
    %92 = arith.addf %90, %91 : vector<8x128xf32>
    %93 = math.tanh %92 : vector<8x128xf32>
    %94 = arith.mulf %89, %93 : vector<8x128xf32>
    %95 = arith.index_cast %c1_i32_24 : i32 to index
    %c0_33 = arith.constant 0 : index
    %c0_34 = arith.constant 0 : index
    %96 = vector.load %arg6[%95, %c0_33, %c0_34] : memref<8x8x128xf32, #tpu.memory_space<vmem>>, vector<1x8x128xf32>
    %97 = vector.shape_cast %96 : vector<1x8x128xf32> to vector<8x128xf32>
    %98 = vector.shape_cast %94 : vector<8x128xf32> to vector<1x8x128xf32>
    tpu.vector_store %arg6[%95, %c0_33, %c0_34], %98 {strides = array<i32>} : memref<8x8x128xf32, #tpu.memory_space<vmem>>, vector<1x8x128xf32>,
    %99 = arith.maximumf %55, %94 : vector<8x128xf32>
    %100 = arith.subf %55, %99 : vector<8x128xf32>
    %101 = math.exp %100 : vector<8x128xf32>
    %102 = arith.mulf %61, %101 : vector<8x128xf32>
    %103 = arith.subf %94, %99 : vector<8x128xf32>
    %104 = math.exp %103 : vector<8x128xf32>
    %105 = arith.addf %102, %104 : vector<8x128xf32>
    %c2_i32 = arith.constant 2 : i32
    %106 = arith.truncf %94 : vector<8x128xf32> to vector<8x128xbf16>
    %c0_35 = arith.constant 0 : index
    %c0_36 = arith.constant 0 : index
    %107 = vector.load %arg4[%c0_35, %c0_36] : memref<128x512xbf16, #tpu.memory_space<vmem>>, vector<128x512xbf16>
    %cst_37 = arith.constant dense<0.000000e+00> : vector<8x512xf32>
    %108 = tpu.matmul %106, %107, %cst_37 {dimension_numbers = #tpu.dot_dimension_numbers<[1], [0], [0], [1], [0, 0, 1, 1], [], []>} : vector<8x128xbf16>, vector<128x512xbf16>, vector<8x512xf32> -> vector<8x512xf32>
    %109 = arith.index_cast %c2_i32 : i32 to index
    %c0_38 = arith.constant 0 : index
    %c0_39 = arith.constant 0 : index
    %110 = vector.load %arg9[%109, %c0_38, %c0_39] : memref<8x8x512xbf16, #tpu.memory_space<vmem>>, vector<1x8x512xbf16>
    %111 = vector.shape_cast %110 : vector<1x8x512xbf16> to vector<8x512xbf16>
    %112 = arith.extf %111 : vector<8x512xbf16> to vector<8x512xf32>
    %113 = arith.addf %108, %112 : vector<8x512xf32>
    %114 = vector.extract_strided_slice %113 {offsets = [0, 0], sizes = [8, 128], strides = [1, 1]} : vector<8x512xf32> to vector<8x128xf32>
    %115 = arith.negf %114 : vector<8x128xf32>
    %116 = math.exp %115 : vector<8x128xf32>
    %cst_40 = arith.constant 1.000000e+00 : f32
    %117 = vector.broadcast %cst_40 : f32 to vector<8x128xf32>
    %118 = arith.addf %117, %116 : vector<8x128xf32>
    %119 = arith.divf %117, %118 : vector<8x128xf32>
    %120 = vector.extract_strided_slice %113 {offsets = [0, 128], sizes = [8, 128], strides = [1, 1]} : vector<8x512xf32> to vector<8x128xf32>
    %121 = arith.negf %120 : vector<8x128xf32>
    %122 = math.exp %121 : vector<8x128xf32>
    %cst_41 = arith.constant 1.000000e+00 : f32
    %123 = vector.broadcast %cst_41 : f32 to vector<8x128xf32>
    %124 = arith.addf %123, %122 : vector<8x128xf32>
    %125 = arith.divf %123, %124 : vector<8x128xf32>
    %126 = vector.extract_strided_slice %113 {offsets = [0, 256], sizes = [8, 128], strides = [1, 1]} : vector<8x512xf32> to vector<8x128xf32>
    %127 = math.tanh %126 : vector<8x128xf32>
    %128 = vector.extract_strided_slice %113 {offsets = [0, 384], sizes = [8, 128], strides = [1, 1]} : vector<8x512xf32> to vector<8x128xf32>
    %129 = arith.negf %128 : vector<8x128xf32>
    %130 = math.exp %129 : vector<8x128xf32>
    %cst_42 = arith.constant 1.000000e+00 : f32
    %131 = vector.broadcast %cst_42 : f32 to vector<8x128xf32>
    %132 = arith.addf %131, %130 : vector<8x128xf32>
    %133 = arith.divf %131, %132 : vector<8x128xf32>
    %134 = arith.mulf %125, %92 : vector<8x128xf32>
    %135 = arith.mulf %119, %127 : vector<8x128xf32>
    %136 = arith.addf %134, %135 : vector<8x128xf32>
    %137 = math.tanh %136 : vector<8x128xf32>
    %138 = arith.mulf %133, %137 : vector<8x128xf32>
    %139 = arith.index_cast %c2_i32 : i32 to index
    %c0_43 = arith.constant 0 : index
    %c0_44 = arith.constant 0 : index
    %140 = vector.load %arg6[%139, %c0_43, %c0_44] : memref<8x8x128xf32, #tpu.memory_space<vmem>>, vector<1x8x128xf32>
    %141 = vector.shape_cast %140 : vector<1x8x128xf32> to vector<8x128xf32>
    %142 = vector.shape_cast %138 : vector<8x128xf32> to vector<1x8x128xf32>
    tpu.vector_store %arg6[%139, %c0_43, %c0_44], %142 {strides = array<i32>} : memref<8x8x128xf32, #tpu.memory_space<vmem>>, vector<1x8x128xf32>,
    %143 = arith.maximumf %99, %138 : vector<8x128xf32>
    %144 = arith.subf %99, %143 : vector<8x128xf32>
    %145 = math.exp %144 : vector<8x128xf32>
    %146 = arith.mulf %105, %145 : vector<8x128xf32>
    %147 = arith.subf %138, %143 : vector<8x128xf32>
    %148 = math.exp %147 : vector<8x128xf32>
    %149 = arith.addf %146, %148 : vector<8x128xf32>
    %c3_i32 = arith.constant 3 : i32
    %150 = arith.truncf %138 : vector<8x128xf32> to vector<8x128xbf16>
    %c0_45 = arith.constant 0 : index
    %c0_46 = arith.constant 0 : index
    %151 = vector.load %arg4[%c0_45, %c0_46] : memref<128x512xbf16, #tpu.memory_space<vmem>>, vector<128x512xbf16>
    %cst_47 = arith.constant dense<0.000000e+00> : vector<8x512xf32>
    %152 = tpu.matmul %150, %151, %cst_47 {dimension_numbers = #tpu.dot_dimension_numbers<[1], [0], [0], [1], [0, 0, 1, 1], [], []>} : vector<8x128xbf16>, vector<128x512xbf16>, vector<8x512xf32> -> vector<8x512xf32>
    %153 = arith.index_cast %c3_i32 : i32 to index
    %c0_48 = arith.constant 0 : index
    %c0_49 = arith.constant 0 : index
    %154 = vector.load %arg9[%153, %c0_48, %c0_49] : memref<8x8x512xbf16, #tpu.memory_space<vmem>>, vector<1x8x512xbf16>
    %155 = vector.shape_cast %154 : vector<1x8x512xbf16> to vector<8x512xbf16>
    %156 = arith.extf %155 : vector<8x512xbf16> to vector<8x512xf32>
    %157 = arith.addf %152, %156 : vector<8x512xf32>
    %158 = vector.extract_strided_slice %157 {offsets = [0, 0], sizes = [8, 128], strides = [1, 1]} : vector<8x512xf32> to vector<8x128xf32>
    %159 = arith.negf %158 : vector<8x128xf32>
    %160 = math.exp %159 : vector<8x128xf32>
    %cst_50 = arith.constant 1.000000e+00 : f32
    %161 = vector.broadcast %cst_50 : f32 to vector<8x128xf32>
    %162 = arith.addf %161, %160 : vector<8x128xf32>
    %163 = arith.divf %161, %162 : vector<8x128xf32>
    %164 = vector.extract_strided_slice %157 {offsets = [0, 128], sizes = [8, 128], strides = [1, 1]} : vector<8x512xf32> to vector<8x128xf32>
    %165 = arith.negf %164 : vector<8x128xf32>
    %166 = math.exp %165 : vector<8x128xf32>
    %cst_51 = arith.constant 1.000000e+00 : f32
    %167 = vector.broadcast %cst_51 : f32 to vector<8x128xf32>
    %168 = arith.addf %167, %166 : vector<8x128xf32>
    %169 = arith.divf %167, %168 : vector<8x128xf32>
    %170 = vector.extract_strided_slice %157 {offsets = [0, 256], sizes = [8, 128], strides = [1, 1]} : vector<8x512xf32> to vector<8x128xf32>
    %171 = math.tanh %170 : vector<8x128xf32>
    %172 = vector.extract_strided_slice %157 {offsets = [0, 384], sizes = [8, 128], strides = [1, 1]} : vector<8x512xf32> to vector<8x128xf32>
    %173 = arith.negf %172 : vector<8x128xf32>
    %174 = math.exp %173 : vector<8x128xf32>
    %cst_52 = arith.constant 1.000000e+00 : f32
    %175 = vector.broadcast %cst_52 : f32 to vector<8x128xf32>
    %176 = arith.addf %175, %174 : vector<8x128xf32>
    %177 = arith.divf %175, %176 : vector<8x128xf32>
    %178 = arith.mulf %169, %136 : vector<8x128xf32>
    %179 = arith.mulf %163, %171 : vector<8x128xf32>
    %180 = arith.addf %178, %179 : vector<8x128xf32>
    %181 = math.tanh %180 : vector<8x128xf32>
    %182 = arith.mulf %177, %181 : vector<8x128xf32>
    %183 = arith.index_cast %c3_i32 : i32 to index
    %c0_53 = arith.constant 0 : index
    %c0_54 = arith.constant 0 : index
    %184 = vector.load %arg6[%183, %c0_53, %c0_54] : memref<8x8x128xf32, #tpu.memory_space<vmem>>, vector<1x8x128xf32>
    %185 = vector.shape_cast %184 : vector<1x8x128xf32> to vector<8x128xf32>
    %186 = vector.shape_cast %182 : vector<8x128xf32> to vector<1x8x128xf32>
    tpu.vector_store %arg6[%183, %c0_53, %c0_54], %186 {strides = array<i32>} : memref<8x8x128xf32, #tpu.memory_space<vmem>>, vector<1x8x128xf32>,
    %187 = arith.maximumf %143, %182 : vector<8x128xf32>
    %188 = arith.subf %143, %187 : vector<8x128xf32>
    %189 = math.exp %188 : vector<8x128xf32>
    %190 = arith.mulf %149, %189 : vector<8x128xf32>
    %191 = arith.subf %182, %187 : vector<8x128xf32>
    %192 = math.exp %191 : vector<8x128xf32>
    %193 = arith.addf %190, %192 : vector<8x128xf32>
    %c4_i32 = arith.constant 4 : i32
    %194 = arith.truncf %182 : vector<8x128xf32> to vector<8x128xbf16>
    %c0_55 = arith.constant 0 : index
    %c0_56 = arith.constant 0 : index
    %195 = vector.load %arg4[%c0_55, %c0_56] : memref<128x512xbf16, #tpu.memory_space<vmem>>, vector<128x512xbf16>
    %cst_57 = arith.constant dense<0.000000e+00> : vector<8x512xf32>
    %196 = tpu.matmul %194, %195, %cst_57 {dimension_numbers = #tpu.dot_dimension_numbers<[1], [0], [0], [1], [0, 0, 1, 1], [], []>} : vector<8x128xbf16>, vector<128x512xbf16>, vector<8x512xf32> -> vector<8x512xf32>
    %197 = arith.index_cast %c4_i32 : i32 to index
    %c0_58 = arith.constant 0 : index
    %c0_59 = arith.constant 0 : index
    %198 = vector.load %arg9[%197, %c0_58, %c0_59] : memref<8x8x512xbf16, #tpu.memory_space<vmem>>, vector<1x8x512xbf16>
    %199 = vector.shape_cast %198 : vector<1x8x512xbf16> to vector<8x512xbf16>
    %200 = arith.extf %199 : vector<8x512xbf16> to vector<8x512xf32>
    %201 = arith.addf %196, %200 : vector<8x512xf32>
    %202 = vector.extract_strided_slice %201 {offsets = [0, 0], sizes = [8, 128], strides = [1, 1]} : vector<8x512xf32> to vector<8x128xf32>
    %203 = arith.negf %202 : vector<8x128xf32>
    %204 = math.exp %203 : vector<8x128xf32>
    %cst_60 = arith.constant 1.000000e+00 : f32
    %205 = vector.broadcast %cst_60 : f32 to vector<8x128xf32>
    %206 = arith.addf %205, %204 : vector<8x128xf32>
    %207 = arith.divf %205, %206 : vector<8x128xf32>
    %208 = vector.extract_strided_slice %201 {offsets = [0, 128], sizes = [8, 128], strides = [1, 1]} : vector<8x512xf32> to vector<8x128xf32>
    %209 = arith.negf %208 : vector<8x128xf32>
    %210 = math.exp %209 : vector<8x128xf32>
    %cst_61 = arith.constant 1.000000e+00 : f32
    %211 = vector.broadcast %cst_61 : f32 to vector<8x128xf32>
    %212 = arith.addf %211, %210 : vector<8x128xf32>
    %213 = arith.divf %211, %212 : vector<8x128xf32>
    %214 = vector.extract_strided_slice %201 {offsets = [0, 256], sizes = [8, 128], strides = [1, 1]} : vector<8x512xf32> to vector<8x128xf32>
    %215 = math.tanh %214 : vector<8x128xf32>
    %216 = vector.extract_strided_slice %201 {offsets = [0, 384], sizes = [8, 128], strides = [1, 1]} : vector<8x512xf32> to vector<8x128xf32>
    %217 = arith.negf %216 : vector<8x128xf32>
    %218 = math.exp %217 : vector<8x128xf32>
    %cst_62 = arith.constant 1.000000e+00 : f32
    %219 = vector.broadcast %cst_62 : f32 to vector<8x128xf32>
    %220 = arith.addf %219, %218 : vector<8x128xf32>
    %221 = arith.divf %219, %220 : vector<8x128xf32>
    %222 = arith.mulf %213, %180 : vector<8x128xf32>
    %223 = arith.mulf %207, %215 : vector<8x128xf32>
    %224 = arith.addf %222, %223 : vector<8x128xf32>
    %225 = math.tanh %224 : vector<8x128xf32>
    %226 = arith.mulf %221, %225 : vector<8x128xf32>
    %227 = arith.index_cast %c4_i32 : i32 to index
    %c0_63 = arith.constant 0 : index
    %c0_64 = arith.constant 0 : index
    %228 = vector.load %arg6[%227, %c0_63, %c0_64] : memref<8x8x128xf32, #tpu.memory_space<vmem>>, vector<1x8x128xf32>
    %229 = vector.shape_cast %228 : vector<1x8x128xf32> to vector<8x128xf32>
    %230 = vector.shape_cast %226 : vector<8x128xf32> to vector<1x8x128xf32>
    tpu.vector_store %arg6[%227, %c0_63, %c0_64], %230 {strides = array<i32>} : memref<8x8x128xf32, #tpu.memory_space<vmem>>, vector<1x8x128xf32>,
    %231 = arith.maximumf %187, %226 : vector<8x128xf32>
    %232 = arith.subf %187, %231 : vector<8x128xf32>
    %233 = math.exp %232 : vector<8x128xf32>
    %234 = arith.mulf %193, %233 : vector<8x128xf32>
    %235 = arith.subf %226, %231 : vector<8x128xf32>
    %236 = math.exp %235 : vector<8x128xf32>
    %237 = arith.addf %234, %236 : vector<8x128xf32>
    %c5_i32 = arith.constant 5 : i32
    %238 = arith.truncf %226 : vector<8x128xf32> to vector<8x128xbf16>
    %c0_65 = arith.constant 0 : index
    %c0_66 = arith.constant 0 : index
    %239 = vector.load %arg4[%c0_65, %c0_66] : memref<128x512xbf16, #tpu.memory_space<vmem>>, vector<128x512xbf16>
    %cst_67 = arith.constant dense<0.000000e+00> : vector<8x512xf32>
    %240 = tpu.matmul %238, %239, %cst_67 {dimension_numbers = #tpu.dot_dimension_numbers<[1], [0], [0], [1], [0, 0, 1, 1], [], []>} : vector<8x128xbf16>, vector<128x512xbf16>, vector<8x512xf32> -> vector<8x512xf32>
    %241 = arith.index_cast %c5_i32 : i32 to index
    %c0_68 = arith.constant 0 : index
    %c0_69 = arith.constant 0 : index
    %242 = vector.load %arg9[%241, %c0_68, %c0_69] : memref<8x8x512xbf16, #tpu.memory_space<vmem>>, vector<1x8x512xbf16>
    %243 = vector.shape_cast %242 : vector<1x8x512xbf16> to vector<8x512xbf16>
    %244 = arith.extf %243 : vector<8x512xbf16> to vector<8x512xf32>
    %245 = arith.addf %240, %244 : vector<8x512xf32>
    %246 = vector.extract_strided_slice %245 {offsets = [0, 0], sizes = [8, 128], strides = [1, 1]} : vector<8x512xf32> to vector<8x128xf32>
    %247 = arith.negf %246 : vector<8x128xf32>
    %248 = math.exp %247 : vector<8x128xf32>
    %cst_70 = arith.constant 1.000000e+00 : f32
    %249 = vector.broadcast %cst_70 : f32 to vector<8x128xf32>
    %250 = arith.addf %249, %248 : vector<8x128xf32>
    %251 = arith.divf %249, %250 : vector<8x128xf32>
    %252 = vector.extract_strided_slice %245 {offsets = [0, 128], sizes = [8, 128], strides = [1, 1]} : vector<8x512xf32> to vector<8x128xf32>
    %253 = arith.negf %252 : vector<8x128xf32>
    %254 = math.exp %253 : vector<8x128xf32>
    %cst_71 = arith.constant 1.000000e+00 : f32
    %255 = vector.broadcast %cst_71 : f32 to vector<8x128xf32>
    %256 = arith.addf %255, %254 : vector<8x128xf32>
    %257 = arith.divf %255, %256 : vector<8x128xf32>
    %258 = vector.extract_strided_slice %245 {offsets = [0, 256], sizes = [8, 128], strides = [1, 1]} : vector<8x512xf32> to vector<8x128xf32>
    %259 = math.tanh %258 : vector<8x128xf32>
    %260 = vector.extract_strided_slice %245 {offsets = [0, 384], sizes = [8, 128], strides = [1, 1]} : vector<8x512xf32> to vector<8x128xf32>
    %261 = arith.negf %260 : vector<8x128xf32>
    %262 = math.exp %261 : vector<8x128xf32>
    %cst_72 = arith.constant 1.000000e+00 : f32
    %263 = vector.broadcast %cst_72 : f32 to vector<8x128xf32>
    %264 = arith.addf %263, %262 : vector<8x128xf32>
    %265 = arith.divf %263, %264 : vector<8x128xf32>
    %266 = arith.mulf %257, %224 : vector<8x128xf32>
    %267 = arith.mulf %251, %259 : vector<8x128xf32>
    %268 = arith.addf %266, %267 : vector<8x128xf32>
    %269 = math.tanh %268 : vector<8x128xf32>
    %270 = arith.mulf %265, %269 : vector<8x128xf32>
    %271 = arith.index_cast %c5_i32 : i32 to index
    %c0_73 = arith.constant 0 : index
    %c0_74 = arith.constant 0 : index
    %272 = vector.load %arg6[%271, %c0_73, %c0_74] : memref<8x8x128xf32, #tpu.memory_space<vmem>>, vector<1x8x128xf32>
    %273 = vector.shape_cast %272 : vector<1x8x128xf32> to vector<8x128xf32>
    %274 = vector.shape_cast %270 : vector<8x128xf32> to vector<1x8x128xf32>
    tpu.vector_store %arg6[%271, %c0_73, %c0_74], %274 {strides = array<i32>} : memref<8x8x128xf32, #tpu.memory_space<vmem>>, vector<1x8x128xf32>,
    %275 = arith.maximumf %231, %270 : vector<8x128xf32>
    %276 = arith.subf %231, %275 : vector<8x128xf32>
    %277 = math.exp %276 : vector<8x128xf32>
    %278 = arith.mulf %237, %277 : vector<8x128xf32>
    %279 = arith.subf %270, %275 : vector<8x128xf32>
    %280 = math.exp %279 : vector<8x128xf32>
    %281 = arith.addf %278, %280 : vector<8x128xf32>
    %c6_i32 = arith.constant 6 : i32
    %282 = arith.truncf %270 : vector<8x128xf32> to vector<8x128xbf16>
    %c0_75 = arith.constant 0 : index
    %c0_76 = arith.constant 0 : index
    %283 = vector.load %arg4[%c0_75, %c0_76] : memref<128x512xbf16, #tpu.memory_space<vmem>>, vector<128x512xbf16>
    %cst_77 = arith.constant dense<0.000000e+00> : vector<8x512xf32>
    %284 = tpu.matmul %282, %283, %cst_77 {dimension_numbers = #tpu.dot_dimension_numbers<[1], [0], [0], [1], [0, 0, 1, 1], [], []>} : vector<8x128xbf16>, vector<128x512xbf16>, vector<8x512xf32> -> vector<8x512xf32>
    %285 = arith.index_cast %c6_i32 : i32 to index
    %c0_78 = arith.constant 0 : index
    %c0_79 = arith.constant 0 : index
    %286 = vector.load %arg9[%285, %c0_78, %c0_79] : memref<8x8x512xbf16, #tpu.memory_space<vmem>>, vector<1x8x512xbf16>
    %287 = vector.shape_cast %286 : vector<1x8x512xbf16> to vector<8x512xbf16>
    %288 = arith.extf %287 : vector<8x512xbf16> to vector<8x512xf32>
    %289 = arith.addf %284, %288 : vector<8x512xf32>
    %290 = vector.extract_strided_slice %289 {offsets = [0, 0], sizes = [8, 128], strides = [1, 1]} : vector<8x512xf32> to vector<8x128xf32>
    %291 = arith.negf %290 : vector<8x128xf32>
    %292 = math.exp %291 : vector<8x128xf32>
    %cst_80 = arith.constant 1.000000e+00 : f32
    %293 = vector.broadcast %cst_80 : f32 to vector<8x128xf32>
    %294 = arith.addf %293, %292 : vector<8x128xf32>
    %295 = arith.divf %293, %294 : vector<8x128xf32>
    %296 = vector.extract_strided_slice %289 {offsets = [0, 128], sizes = [8, 128], strides = [1, 1]} : vector<8x512xf32> to vector<8x128xf32>
    %297 = arith.negf %296 : vector<8x128xf32>
    %298 = math.exp %297 : vector<8x128xf32>
    %cst_81 = arith.constant 1.000000e+00 : f32
    %299 = vector.broadcast %cst_81 : f32 to vector<8x128xf32>
    %300 = arith.addf %299, %298 : vector<8x128xf32>
    %301 = arith.divf %299, %300 : vector<8x128xf32>
    %302 = vector.extract_strided_slice %289 {offsets = [0, 256], sizes = [8, 128], strides = [1, 1]} : vector<8x512xf32> to vector<8x128xf32>
    %303 = math.tanh %302 : vector<8x128xf32>
    %304 = vector.extract_strided_slice %289 {offsets = [0, 384], sizes = [8, 128], strides = [1, 1]} : vector<8x512xf32> to vector<8x128xf32>
    %305 = arith.negf %304 : vector<8x128xf32>
    %306 = math.exp %305 : vector<8x128xf32>
    %cst_82 = arith.constant 1.000000e+00 : f32
    %307 = vector.broadcast %cst_82 : f32 to vector<8x128xf32>
    %308 = arith.addf %307, %306 : vector<8x128xf32>
    %309 = arith.divf %307, %308 : vector<8x128xf32>
    %310 = arith.mulf %301, %268 : vector<8x128xf32>
    %311 = arith.mulf %295, %303 : vector<8x128xf32>
    %312 = arith.addf %310, %311 : vector<8x128xf32>
    %313 = math.tanh %312 : vector<8x128xf32>
    %314 = arith.mulf %309, %313 : vector<8x128xf32>
    %315 = arith.index_cast %c6_i32 : i32 to index
    %c0_83 = arith.constant 0 : index
    %c0_84 = arith.constant 0 : index
    %316 = vector.load %arg6[%315, %c0_83, %c0_84] : memref<8x8x128xf32, #tpu.memory_space<vmem>>, vector<1x8x128xf32>
    %317 = vector.shape_cast %316 : vector<1x8x128xf32> to vector<8x128xf32>
    %318 = vector.shape_cast %314 : vector<8x128xf32> to vector<1x8x128xf32>
    tpu.vector_store %arg6[%315, %c0_83, %c0_84], %318 {strides = array<i32>} : memref<8x8x128xf32, #tpu.memory_space<vmem>>, vector<1x8x128xf32>,
    %319 = arith.maximumf %275, %314 : vector<8x128xf32>
    %320 = arith.subf %275, %319 : vector<8x128xf32>
    %321 = math.exp %320 : vector<8x128xf32>
    %322 = arith.mulf %281, %321 : vector<8x128xf32>
    %323 = arith.subf %314, %319 : vector<8x128xf32>
    %324 = math.exp %323 : vector<8x128xf32>
    %325 = arith.addf %322, %324 : vector<8x128xf32>
    %c7_i32 = arith.constant 7 : i32
    %326 = arith.truncf %314 : vector<8x128xf32> to vector<8x128xbf16>
    %c0_85 = arith.constant 0 : index
    %c0_86 = arith.constant 0 : index
    %327 = vector.load %arg4[%c0_85, %c0_86] : memref<128x512xbf16, #tpu.memory_space<vmem>>, vector<128x512xbf16>
    %cst_87 = arith.constant dense<0.000000e+00> : vector<8x512xf32>
    %328 = tpu.matmul %326, %327, %cst_87 {dimension_numbers = #tpu.dot_dimension_numbers<[1], [0], [0], [1], [0, 0, 1, 1], [], []>} : vector<8x128xbf16>, vector<128x512xbf16>, vector<8x512xf32> -> vector<8x512xf32>
    %329 = arith.index_cast %c7_i32 : i32 to index
    %c0_88 = arith.constant 0 : index
    %c0_89 = arith.constant 0 : index
    %330 = vector.load %arg9[%329, %c0_88, %c0_89] : memref<8x8x512xbf16, #tpu.memory_space<vmem>>, vector<1x8x512xbf16>
    %331 = vector.shape_cast %330 : vector<1x8x512xbf16> to vector<8x512xbf16>
    %332 = arith.extf %331 : vector<8x512xbf16> to vector<8x512xf32>
    %333 = arith.addf %328, %332 : vector<8x512xf32>
    %334 = vector.extract_strided_slice %333 {offsets = [0, 0], sizes = [8, 128], strides = [1, 1]} : vector<8x512xf32> to vector<8x128xf32>
    %335 = arith.negf %334 : vector<8x128xf32>
    %336 = math.exp %335 : vector<8x128xf32>
    %cst_90 = arith.constant 1.000000e+00 : f32
    %337 = vector.broadcast %cst_90 : f32 to vector<8x128xf32>
    %338 = arith.addf %337, %336 : vector<8x128xf32>
    %339 = arith.divf %337, %338 : vector<8x128xf32>
    %340 = vector.extract_strided_slice %333 {offsets = [0, 128], sizes = [8, 128], strides = [1, 1]} : vector<8x512xf32> to vector<8x128xf32>
    %341 = arith.negf %340 : vector<8x128xf32>
    %342 = math.exp %341 : vector<8x128xf32>
    %cst_91 = arith.constant 1.000000e+00 : f32
    %343 = vector.broadcast %cst_91 : f32 to vector<8x128xf32>
    %344 = arith.addf %343, %342 : vector<8x128xf32>
    %345 = arith.divf %343, %344 : vector<8x128xf32>
    %346 = vector.extract_strided_slice %333 {offsets = [0, 256], sizes = [8, 128], strides = [1, 1]} : vector<8x512xf32> to vector<8x128xf32>
    %347 = math.tanh %346 : vector<8x128xf32>
    %348 = vector.extract_strided_slice %333 {offsets = [0, 384], sizes = [8, 128], strides = [1, 1]} : vector<8x512xf32> to vector<8x128xf32>
    %349 = arith.negf %348 : vector<8x128xf32>
    %350 = math.exp %349 : vector<8x128xf32>
    %cst_92 = arith.constant 1.000000e+00 : f32
    %351 = vector.broadcast %cst_92 : f32 to vector<8x128xf32>
    %352 = arith.addf %351, %350 : vector<8x128xf32>
    %353 = arith.divf %351, %352 : vector<8x128xf32>
    %354 = arith.mulf %345, %312 : vector<8x128xf32>
    %355 = arith.mulf %339, %347 : vector<8x128xf32>
    %356 = arith.addf %354, %355 : vector<8x128xf32>
    %357 = math.tanh %356 : vector<8x128xf32>
    %358 = arith.mulf %353, %357 : vector<8x128xf32>
    %359 = arith.index_cast %c7_i32 : i32 to index
    %c0_93 = arith.constant 0 : index
    %c0_94 = arith.constant 0 : index
    %360 = vector.load %arg6[%359, %c0_93, %c0_94] : memref<8x8x128xf32, #tpu.memory_space<vmem>>, vector<1x8x128xf32>
    %361 = vector.shape_cast %360 : vector<1x8x128xf32> to vector<8x128xf32>
    %362 = vector.shape_cast %358 : vector<8x128xf32> to vector<1x8x128xf32>
    tpu.vector_store %arg6[%359, %c0_93, %c0_94], %362 {strides = array<i32>} : memref<8x8x128xf32, #tpu.memory_space<vmem>>, vector<1x8x128xf32>,
    %363 = arith.maximumf %319, %358 : vector<8x128xf32>
    %364 = arith.subf %319, %363 : vector<8x128xf32>
    %365 = math.exp %364 : vector<8x128xf32>
    %366 = arith.mulf %325, %365 : vector<8x128xf32>
    %367 = arith.subf %358, %363 : vector<8x128xf32>
    %368 = math.exp %367 : vector<8x128xf32>
    %369 = arith.addf %366, %368 : vector<8x128xf32>
    %c8_i32_95 = arith.constant 8 : i32
    %c0_96 = arith.constant 0 : index
    %c0_97 = arith.constant 0 : index
    %370 = vector.load %arg7[%c0_96, %c0_97] : memref<8x128xf32, #tpu.memory_space<vmem>>, vector<8x128xf32>
    tpu.vector_store %arg7[%c0_96, %c0_97], %358 {strides = array<i32>} : memref<8x128xf32, #tpu.memory_space<vmem>>, vector<8x128xf32>,
    %c0_98 = arith.constant 0 : index
    %c0_99 = arith.constant 0 : index
    %371 = vector.load %arg8[%c0_98, %c0_99] : memref<8x128xf32, #tpu.memory_space<vmem>>, vector<8x128xf32>
    tpu.vector_store %arg8[%c0_98, %c0_99], %356 {strides = array<i32>} : memref<8x128xf32, #tpu.memory_space<vmem>>, vector<8x128xf32>,
    %372 = math.log %369 : vector<8x128xf32>
    %373 = arith.addf %363, %372 : vector<8x128xf32>
    %c0_i32_100 = arith.constant 0 : i32
    %374 = arith.index_cast %c0_i32_100 : i32 to index
    %c0_101 = arith.constant 0 : index
    %c0_102 = arith.constant 0 : index
    %375 = vector.load %arg6[%374, %c0_101, %c0_102] : memref<8x8x128xf32, #tpu.memory_space<vmem>>, vector<1x8x128xf32>
    %376 = vector.shape_cast %375 : vector<1x8x128xf32> to vector<8x128xf32>
    %377 = arith.subf %376, %373 : vector<8x128xf32>
    %378 = arith.index_cast %c0_i32_100 : i32 to index
    %c0_103 = arith.constant 0 : index
    %c0_104 = arith.constant 0 : index
    %379 = vector.load %arg6[%378, %c0_103, %c0_104] : memref<8x8x128xf32, #tpu.memory_space<vmem>>, vector<1x8x128xf32>
    %380 = vector.shape_cast %379 : vector<1x8x128xf32> to vector<8x128xf32>
    %381 = vector.shape_cast %377 : vector<8x128xf32> to vector<1x8x128xf32>
    tpu.vector_store %arg6[%378, %c0_103, %c0_104], %381 {strides = array<i32>} : memref<8x8x128xf32, #tpu.memory_space<vmem>>, vector<1x8x128xf32>,
    %c1_i32_105 = arith.constant 1 : i32
    %382 = arith.index_cast %c1_i32_105 : i32 to index
    %c0_106 = arith.constant 0 : index
    %c0_107 = arith.constant 0 : index
    %383 = vector.load %arg6[%382, %c0_106, %c0_107] : memref<8x8x128xf32, #tpu.memory_space<vmem>>, vector<1x8x128xf32>
    %384 = vector.shape_cast %383 : vector<1x8x128xf32> to vector<8x128xf32>
    %385 = arith.subf %384, %373 : vector<8x128xf32>
    %386 = arith.index_cast %c1_i32_105 : i32 to index
    %c0_108 = arith.constant 0 : index
    %c0_109 = arith.constant 0 : index
    %387 = vector.load %arg6[%386, %c0_108, %c0_109] : memref<8x8x128xf32, #tpu.memory_space<vmem>>, vector<1x8x128xf32>
    %388 = vector.shape_cast %387 : vector<1x8x128xf32> to vector<8x128xf32>
    %389 = vector.shape_cast %385 : vector<8x128xf32> to vector<1x8x128xf32>
    tpu.vector_store %arg6[%386, %c0_108, %c0_109], %389 {strides = array<i32>} : memref<8x8x128xf32, #tpu.memory_space<vmem>>, vector<1x8x128xf32>,
    %c2_i32_110 = arith.constant 2 : i32
    %390 = arith.index_cast %c2_i32_110 : i32 to index
    %c0_111 = arith.constant 0 : index
    %c0_112 = arith.constant 0 : index
    %391 = vector.load %arg6[%390, %c0_111, %c0_112] : memref<8x8x128xf32, #tpu.memory_space<vmem>>, vector<1x8x128xf32>
    %392 = vector.shape_cast %391 : vector<1x8x128xf32> to vector<8x128xf32>
    %393 = arith.subf %392, %373 : vector<8x128xf32>
    %394 = arith.index_cast %c2_i32_110 : i32 to index
    %c0_113 = arith.constant 0 : index
    %c0_114 = arith.constant 0 : index
    %395 = vector.load %arg6[%394, %c0_113, %c0_114] : memref<8x8x128xf32, #tpu.memory_space<vmem>>, vector<1x8x128xf32>
    %396 = vector.shape_cast %395 : vector<1x8x128xf32> to vector<8x128xf32>
    %397 = vector.shape_cast %393 : vector<8x128xf32> to vector<1x8x128xf32>
    tpu.vector_store %arg6[%394, %c0_113, %c0_114], %397 {strides = array<i32>} : memref<8x8x128xf32, #tpu.memory_space<vmem>>, vector<1x8x128xf32>,
    %c3_i32_115 = arith.constant 3 : i32
    %398 = arith.index_cast %c3_i32_115 : i32 to index
    %c0_116 = arith.constant 0 : index
    %c0_117 = arith.constant 0 : index
    %399 = vector.load %arg6[%398, %c0_116, %c0_117] : memref<8x8x128xf32, #tpu.memory_space<vmem>>, vector<1x8x128xf32>
    %400 = vector.shape_cast %399 : vector<1x8x128xf32> to vector<8x128xf32>
    %401 = arith.subf %400, %373 : vector<8x128xf32>
    %402 = arith.index_cast %c3_i32_115 : i32 to index
    %c0_118 = arith.constant 0 : index
    %c0_119 = arith.constant 0 : index
    %403 = vector.load %arg6[%402, %c0_118, %c0_119] : memref<8x8x128xf32, #tpu.memory_space<vmem>>, vector<1x8x128xf32>
    %404 = vector.shape_cast %403 : vector<1x8x128xf32> to vector<8x128xf32>
    %405 = vector.shape_cast %401 : vector<8x128xf32> to vector<1x8x128xf32>
    tpu.vector_store %arg6[%402, %c0_118, %c0_119], %405 {strides = array<i32>} : memref<8x8x128xf32, #tpu.memory_space<vmem>>, vector<1x8x128xf32>,
    %c4_i32_120 = arith.constant 4 : i32
    %406 = arith.index_cast %c4_i32_120 : i32 to index
    %c0_121 = arith.constant 0 : index
    %c0_122 = arith.constant 0 : index
    %407 = vector.load %arg6[%406, %c0_121, %c0_122] : memref<8x8x128xf32, #tpu.memory_space<vmem>>, vector<1x8x128xf32>
    %408 = vector.shape_cast %407 : vector<1x8x128xf32> to vector<8x128xf32>
    %409 = arith.subf %408, %373 : vector<8x128xf32>
    %410 = arith.index_cast %c4_i32_120 : i32 to index
    %c0_123 = arith.constant 0 : index
    %c0_124 = arith.constant 0 : index
    %411 = vector.load %arg6[%410, %c0_123, %c0_124] : memref<8x8x128xf32, #tpu.memory_space<vmem>>, vector<1x8x128xf32>
    %412 = vector.shape_cast %411 : vector<1x8x128xf32> to vector<8x128xf32>
    %413 = vector.shape_cast %409 : vector<8x128xf32> to vector<1x8x128xf32>
    tpu.vector_store %arg6[%410, %c0_123, %c0_124], %413 {strides = array<i32>} : memref<8x8x128xf32, #tpu.memory_space<vmem>>, vector<1x8x128xf32>,
    %c5_i32_125 = arith.constant 5 : i32
    %414 = arith.index_cast %c5_i32_125 : i32 to index
    %c0_126 = arith.constant 0 : index
    %c0_127 = arith.constant 0 : index
    %415 = vector.load %arg6[%414, %c0_126, %c0_127] : memref<8x8x128xf32, #tpu.memory_space<vmem>>, vector<1x8x128xf32>
    %416 = vector.shape_cast %415 : vector<1x8x128xf32> to vector<8x128xf32>
    %417 = arith.subf %416, %373 : vector<8x128xf32>
    %418 = arith.index_cast %c5_i32_125 : i32 to index
    %c0_128 = arith.constant 0 : index
    %c0_129 = arith.constant 0 : index
    %419 = vector.load %arg6[%418, %c0_128, %c0_129] : memref<8x8x128xf32, #tpu.memory_space<vmem>>, vector<1x8x128xf32>
    %420 = vector.shape_cast %419 : vector<1x8x128xf32> to vector<8x128xf32>
    %421 = vector.shape_cast %417 : vector<8x128xf32> to vector<1x8x128xf32>
    tpu.vector_store %arg6[%418, %c0_128, %c0_129], %421 {strides = array<i32>} : memref<8x8x128xf32, #tpu.memory_space<vmem>>, vector<1x8x128xf32>,
    %c6_i32_130 = arith.constant 6 : i32
    %422 = arith.index_cast %c6_i32_130 : i32 to index
    %c0_131 = arith.constant 0 : index
    %c0_132 = arith.constant 0 : index
    %423 = vector.load %arg6[%422, %c0_131, %c0_132] : memref<8x8x128xf32, #tpu.memory_space<vmem>>, vector<1x8x128xf32>
    %424 = vector.shape_cast %423 : vector<1x8x128xf32> to vector<8x128xf32>
    %425 = arith.subf %424, %373 : vector<8x128xf32>
    %426 = arith.index_cast %c6_i32_130 : i32 to index
    %c0_133 = arith.constant 0 : index
    %c0_134 = arith.constant 0 : index
    %427 = vector.load %arg6[%426, %c0_133, %c0_134] : memref<8x8x128xf32, #tpu.memory_space<vmem>>, vector<1x8x128xf32>
    %428 = vector.shape_cast %427 : vector<1x8x128xf32> to vector<8x128xf32>
    %429 = vector.shape_cast %425 : vector<8x128xf32> to vector<1x8x128xf32>
    tpu.vector_store %arg6[%426, %c0_133, %c0_134], %429 {strides = array<i32>} : memref<8x8x128xf32, #tpu.memory_space<vmem>>, vector<1x8x128xf32>,
    %c7_i32_135 = arith.constant 7 : i32
    %430 = arith.index_cast %c7_i32_135 : i32 to index
    %c0_136 = arith.constant 0 : index
    %c0_137 = arith.constant 0 : index
    %431 = vector.load %arg6[%430, %c0_136, %c0_137] : memref<8x8x128xf32, #tpu.memory_space<vmem>>, vector<1x8x128xf32>
    %432 = vector.shape_cast %431 : vector<1x8x128xf32> to vector<8x128xf32>
    %433 = arith.subf %432, %373 : vector<8x128xf32>
    %434 = arith.index_cast %c7_i32_135 : i32 to index
    %c0_138 = arith.constant 0 : index
    %c0_139 = arith.constant 0 : index
    %435 = vector.load %arg6[%434, %c0_138, %c0_139] : memref<8x8x128xf32, #tpu.memory_space<vmem>>, vector<1x8x128xf32>
    %436 = vector.shape_cast %435 : vector<1x8x128xf32> to vector<8x128xf32>
    %437 = vector.shape_cast %433 : vector<8x128xf32> to vector<1x8x128xf32>
    tpu.vector_store %arg6[%434, %c0_138, %c0_139], %437 {strides = array<i32>} : memref<8x8x128xf32, #tpu.memory_space<vmem>>, vector<1x8x128xf32>,
    %c8_i32_140 = arith.constant 8 : i32
    return
  }
}

</mosaic_0001>

<llo_original>
// kernel: decoder_rnn_forward.1
$region0: #{decoder_rnn_forward.1}
  #allocation0 [shape = 'u32[]', space=smem, size = 0x4, offset = 0x4, fixed_abs, tag = 'smem constant byte address 0x4 - core index']
  #allocation1 [shape = 'u32[72,128]{1,0:T(1,128)}', space=vmem, size = 0x9000, scoped, tag = 'internal scratch']
  #allocation2 [shape = 'bf16[8,8,512]{2,1,0:T(8,128)(2,1)}', space=vmem, size = 0x10000, scoped, tag = 'scratch operand']
  %s0 = inlined_call_operand.vmem [shape: bf16[8,8,128], index: 0, kind: input, shape index: {}]
  %s1 = inlined_call_operand.vmem [shape: f32[8,128], index: 1, kind: input, shape index: {}]
  %s2 = inlined_call_operand.vmem [shape: f32[8,128], index: 2, kind: input, shape index: {}]
  %s3 = inlined_call_operand.vmem [shape: bf16[128,512], index: 3, kind: input, shape index: {}]
  %s4 = inlined_call_operand.vmem [shape: bf16[128,512], index: 4, kind: input, shape index: {}]
  %s5 = inlined_call_operand.vmem [shape: f32[1,512], index: 5, kind: input, shape index: {}]
  %s6 = inlined_call_operand.vmem [shape: f32[8,8,128], index: 6, kind: output, shape index: {0}]
  %s7 = inlined_call_operand.vmem [shape: f32[8,128], index: 7, kind: output, shape index: {1}]
  %s8 = inlined_call_operand.vmem [shape: f32[8,128], index: 8, kind: output, shape index: {2}]
  %9 = xla_tuple %s6, %s7, %s8
  %s10 = sld [smem:[#allocation0]]
  $region50: #{decoder_rnn_forward.1} parent=0
    _
  %s12 = ssub.s32 1, %s10
  %s13 = scalar_select 0, %s12, %s10
  // Predicated region
  $region2: #{decoder_rnn_forward.1} parent=0 // pred_check
    _
  $region3: #{decoder_rnn_forward.1} parent=0 // pred_check_branch
    %15 = sbr.rel (0) target = $region5
  $region4: #{decoder_rnn_forward.1} parent=0 // pred_region
    _
  $region5: #{decoder_rnn_forward.1} parent=0 // pred_fallthru
    _
  // Predicated region
  $region6: #{decoder_rnn_forward.1} parent=0 // pred_check
    _
  $region7: #{decoder_rnn_forward.1} parent=0 // pred_check_branch
    %17 = sbr.rel (0) target = $region9
  $region8: #{decoder_rnn_forward.1} parent=0 // pred_region
    _
  $region9: #{decoder_rnn_forward.1} parent=0 // pred_fallthru
    _
  // Predicated region
  $region10: #{decoder_rnn_forward.1} parent=0 // pred_check
    _
  $region11: #{decoder_rnn_forward.1} parent=0 // pred_check_branch
    %19 = sbr.rel (0) target = $region13
  $region12: #{decoder_rnn_forward.1} parent=0 // pred_region
    _
  $region13: #{decoder_rnn_forward.1} parent=0 // pred_fallthru
    _
  // Predicated region
  $region14: #{decoder_rnn_forward.1} parent=0 // pred_check
    _
  $region15: #{decoder_rnn_forward.1} parent=0 // pred_check_branch
    %21 = sbr.rel (0) target = $region17
  $region16: #{decoder_rnn_forward.1} parent=0 // pred_region
    _
  $region17: #{decoder_rnn_forward.1} parent=0 // pred_fallthru
    _
  // Predicated region
  $region18: #{decoder_rnn_forward.1} parent=0 // pred_check
    _
  $region19: #{decoder_rnn_forward.1} parent=0 // pred_check_branch
    %23 = sbr.rel (0) target = $region21
  $region20: #{decoder_rnn_forward.1} parent=0 // pred_region
    _
  $region21: #{decoder_rnn_forward.1} parent=0 // pred_fallthru
    _
  // Predicated region
  $region22: #{decoder_rnn_forward.1} parent=0 // pred_check
    _
  $region23: #{decoder_rnn_forward.1} parent=0 // pred_check_branch
    %25 = sbr.rel (0) target = $region25
  $region24: #{decoder_rnn_forward.1} parent=0 // pred_region
    _
  $region25: #{decoder_rnn_forward.1} parent=0 // pred_fallthru
    _
  %v26 = vld [vmem:[%s5] sm:$0xf]
  %v27 = vld [vmem:[%s0] sm:$0xf]
  %v28 = vld [vmem:[%s0 + $0x4] sm:$0xf]
  %v29 = vld [vmem:[%s0 + $0x8] sm:$0xf]
  %v30 = vld [vmem:[%s0 + $0xc] sm:$0xf]
  %v31 = vld [vmem:[%s0 + $0x10] sm:$0xf]
  %v32 = vld [vmem:[%s0 + $0x14] sm:$0xf]
  %v33 = vld [vmem:[%s0 + $0x18] sm:$0xf]
  %v34 = vld [vmem:[%s0 + $0x1c] sm:$0xf]
  %v35 = vld [vmem:[%s3] sm:$0xff]
  %v36 = vld [vmem:[%s3 + $0x8] sm:$0xff]
  %v37 = vld [vmem:[%s3 + $0x10] sm:$0xff]
  %v38 = vld [vmem:[%s3 + $0x18] sm:$0xff]
  %v39 = vld [vmem:[%s3 + $0x20] sm:$0xff]
  %v40 = vld [vmem:[%s3 + $0x28] sm:$0xff]
  %v41 = vld [vmem:[%s3 + $0x30] sm:$0xff]
  %v42 = vld [vmem:[%s3 + $0x38] sm:$0xff]
  %v43 = vld [vmem:[%s3 + $0x40] sm:$0xff]
  %v44 = vld [vmem:[%s3 + $0x48] sm:$0xff]
  %v45 = vld [vmem:[%s3 + $0x50] sm:$0xff]
  %v46 = vld [vmem:[%s3 + $0x58] sm:$0xff]
  %v47 = vld [vmem:[%s3 + $0x60] sm:$0xff]
  %v48 = vld [vmem:[%s3 + $0x68] sm:$0xff]
  %v49 = vld [vmem:[%s3 + $0x70] sm:$0xff]
  %v50 = vld [vmem:[%s3 + $0x78] sm:$0xff]
  %v51 = vld [vmem:[%s3 + $0x80] sm:$0xff]
  %v52 = vld [vmem:[%s3 + $0x88] sm:$0xff]
  %v53 = vld [vmem:[%s3 + $0x90] sm:$0xff]
  %v54 = vld [vmem:[%s3 + $0x98] sm:$0xff]
  %v55 = vld [vmem:[%s3 + $0xa0] sm:$0xff]
  %v56 = vld [vmem:[%s3 + $0xa8] sm:$0xff]
  %v57 = vld [vmem:[%s3 + $0xb0] sm:$0xff]
  %v58 = vld [vmem:[%s3 + $0xb8] sm:$0xff]
  %v59 = vld [vmem:[%s3 + $0xc0] sm:$0xff]
  %v60 = vld [vmem:[%s3 + $0xc8] sm:$0xff]
  %v61 = vld [vmem:[%s3 + $0xd0] sm:$0xff]
  %v62 = vld [vmem:[%s3 + $0xd8] sm:$0xff]
  %v63 = vld [vmem:[%s3 + $0xe0] sm:$0xff]
  %v64 = vld [vmem:[%s3 + $0xe8] sm:$0xff]
  %v65 = vld [vmem:[%s3 + $0xf0] sm:$0xff]
  %v66 = vld [vmem:[%s3 + $0xf8] sm:$0xff]
  %v68 = vperm.slane %v26, 0
  %v69 = vperm.slane %v26, 1
  %v70 = vperm.slane %v26, 2
  %v71 = vperm.slane %v26, 3
  %v84 = vunpack.c.l.b16 %v27
  %v85 = vunpack.c.l.b16 %v28
  %v86 = vunpack.c.l.b16 %v29
  %v87 = vunpack.c.l.b16 %v30
  %v88 = vunpack.c.l.b16 %v31
  %v89 = vunpack.c.l.b16 %v32
  %v90 = vunpack.c.l.b16 %v33
  %v91 = vunpack.c.l.b16 %v34
  %v92 = vpack.c.b16 %v85, %v84
  %v93 = vpack.c.b16 %v87, %v86
  %v94 = vpack.c.b16 %v89, %v88
  %v95 = vpack.c.b16 %v91, %v90
  %v132 = vunpack.c.l.b16 %v35
  %v133 = vunpack.c.h.b16 %v35
  %v134 = vunpack.c.l.b16 %v36
  %v135 = vunpack.c.h.b16 %v36
  %v136 = vunpack.c.l.b16 %v37
  %v137 = vunpack.c.h.b16 %v37
  %v138 = vunpack.c.l.b16 %v38
  %v139 = vunpack.c.h.b16 %v38
  %v140 = vunpack.c.l.b16 %v39
  %v141 = vunpack.c.h.b16 %v39
  %v142 = vunpack.c.l.b16 %v40
  %v143 = vunpack.c.h.b16 %v40
  %v144 = vunpack.c.l.b16 %v41
  %v145 = vunpack.c.h.b16 %v41
  %v146 = vunpack.c.l.b16 %v42
  %v147 = vunpack.c.h.b16 %v42
  %v148 = vunpack.c.l.b16 %v43
  %v149 = vunpack.c.h.b16 %v43
  %v150 = vunpack.c.l.b16 %v44
  %v151 = vunpack.c.h.b16 %v44
  %v152 = vunpack.c.l.b16 %v45
  %v153 = vunpack.c.h.b16 %v45
  %v154 = vunpack.c.l.b16 %v46
  %v155 = vunpack.c.h.b16 %v46
  %v156 = vunpack.c.l.b16 %v47
  %v157 = vunpack.c.h.b16 %v47
  %v158 = vunpack.c.l.b16 %v48
  %v159 = vunpack.c.h.b16 %v48
  %v160 = vunpack.c.l.b16 %v49
  %v161 = vunpack.c.h.b16 %v49
  %v162 = vunpack.c.l.b16 %v50
  %v163 = vunpack.c.h.b16 %v50
  %v164 = vunpack.c.l.b16 %v51
  %v165 = vunpack.c.h.b16 %v51
  %v166 = vunpack.c.l.b16 %v52
  %v167 = vunpack.c.h.b16 %v52
  %v168 = vunpack.c.l.b16 %v53
  %v169 = vunpack.c.h.b16 %v53
  %v170 = vunpack.c.l.b16 %v54
  %v171 = vunpack.c.h.b16 %v54
  %v172 = vunpack.c.l.b16 %v55
  %v173 = vunpack.c.h.b16 %v55
  %v174 = vunpack.c.l.b16 %v56
  %v175 = vunpack.c.h.b16 %v56
  %v176 = vunpack.c.l.b16 %v57
  %v177 = vunpack.c.h.b16 %v57
  %v178 = vunpack.c.l.b16 %v58
  %v179 = vunpack.c.h.b16 %v58
  %v180 = vunpack.c.l.b16 %v59
  %v181 = vunpack.c.h.b16 %v59
  %v182 = vunpack.c.l.b16 %v60
  %v183 = vunpack.c.h.b16 %v60
  %v184 = vunpack.c.l.b16 %v61
  %v185 = vunpack.c.h.b16 %v61
  %v186 = vunpack.c.l.b16 %v62
  %v187 = vunpack.c.h.b16 %v62
  %v188 = vunpack.c.l.b16 %v63
  %v189 = vunpack.c.h.b16 %v63
  %v190 = vunpack.c.l.b16 %v64
  %v191 = vunpack.c.h.b16 %v64
  %v192 = vunpack.c.l.b16 %v65
  %v193 = vunpack.c.h.b16 %v65
  %v194 = vunpack.c.l.b16 %v66
  %v195 = vunpack.c.h.b16 %v66
  %v196 = vpack.c.b16 %v136, %v132
  %v197 = vpack.c.b16 %v137, %v133
  %v198 = vpack.c.b16 %v138, %v134
  %v199 = vpack.c.b16 %v139, %v135
  %v200 = vpack.c.b16 %v144, %v140
  %v201 = vpack.c.b16 %v145, %v141
  %v202 = vpack.c.b16 %v146, %v142
  %v203 = vpack.c.b16 %v147, %v143
  %v204 = vpack.c.b16 %v152, %v148
  %v205 = vpack.c.b16 %v153, %v149
  %v206 = vpack.c.b16 %v154, %v150
  %v207 = vpack.c.b16 %v155, %v151
  %v208 = vpack.c.b16 %v160, %v156
  %v209 = vpack.c.b16 %v161, %v157
  %v210 = vpack.c.b16 %v162, %v158
  %v211 = vpack.c.b16 %v163, %v159
  %v212 = vpack.c.b16 %v168, %v164
  %v213 = vpack.c.b16 %v169, %v165
  %v214 = vpack.c.b16 %v170, %v166
  %v215 = vpack.c.b16 %v171, %v167
  %v216 = vpack.c.b16 %v176, %v172
  %v217 = vpack.c.b16 %v177, %v173
  %v218 = vpack.c.b16 %v178, %v174
  %v219 = vpack.c.b16 %v179, %v175
  %v220 = vpack.c.b16 %v184, %v180
  %v221 = vpack.c.b16 %v185, %v181
  %v222 = vpack.c.b16 %v186, %v182
  %v223 = vpack.c.b16 %v187, %v183
  %v224 = vpack.c.b16 %v192, %v188
  %v225 = vpack.c.b16 %v193, %v189
  %v226 = vpack.c.b16 %v194, %v190
  %v227 = vpack.c.b16 %v195, %v191
  %260 = vmatpush.bf16.msra.mxu0 %v224
  %261 = vmatpush.bf16.msra.mxu0 %v220
  %262 = vmatpush.bf16.msra.mxu0 %v216
  %263 = vmatpush.bf16.msra.mxu0 %v212
  %264 = vmatpush.bf16.msra.mxu0 %v208
  %265 = vmatpush.bf16.msra.mxu0 %v204
  %266 = vmatpush.bf16.msra.mxu0 %v200
  %267 = vmatpush.bf16.msra.mxu0 %v196
  %268 = vmatmul.bf16.gmra.mxu0 %v92
  %v269 = vpop.f32.mrf.mxu0
  %v270 = vadd.f32 %v68, %v269
  %v271 = vpop.f32.mrf.mxu0
  %v272 = vadd.f32 %v68, %v271
  %273 = vmatmul.bf16.gmra.mxu0 %v93
  %v274 = vpop.f32.mrf.mxu0
  %v275 = vadd.f32 %v68, %v274
  %v276 = vpop.f32.mrf.mxu0
  %v277 = vadd.f32 %v68, %v276
  %278 = vmatmul.bf16.gmra.mxu0 %v94
  %v279 = vpop.f32.mrf.mxu0
  %v280 = vadd.f32 %v68, %v279
  %v281 = vpop.f32.mrf.mxu0
  %v282 = vadd.f32 %v68, %v281
  %283 = vmatmul.bf16.gmra.mxu0 %v95
  %v284 = vpop.f32.mrf.mxu0
  %v285 = vadd.f32 %v68, %v284
  %v286 = vpop.f32.mrf.mxu0
  %v287 = vadd.f32 %v68, %v286
  %288 = vdwg.mxu0
  %289 = vmatpush.bf16.msra.mxu0 %v225
  %290 = vmatpush.bf16.msra.mxu0 %v221
  %291 = vmatpush.bf16.msra.mxu0 %v217
  %292 = vmatpush.bf16.msra.mxu0 %v213
  %293 = vmatpush.bf16.msra.mxu0 %v209
  %294 = vmatpush.bf16.msra.mxu0 %v205
  %295 = vmatpush.bf16.msra.mxu0 %v201
  %296 = vmatpush.bf16.msra.mxu0 %v197
  %297 = vmatmul.bf16.gmra.mxu0 %v92
  %v298 = vpop.f32.mrf.mxu0
  %v299 = vadd.f32 %v69, %v298
  %v300 = vpop.f32.mrf.mxu0
  %v301 = vadd.f32 %v69, %v300
  %302 = vmatmul.bf16.gmra.mxu0 %v93
  %v303 = vpop.f32.mrf.mxu0
  %v304 = vadd.f32 %v69, %v303
  %v305 = vpop.f32.mrf.mxu0
  %v306 = vadd.f32 %v69, %v305
  %307 = vmatmul.bf16.gmra.mxu0 %v94
  %v308 = vpop.f32.mrf.mxu0
  %v309 = vadd.f32 %v69, %v308
  %v310 = vpop.f32.mrf.mxu0
  %v311 = vadd.f32 %v69, %v310
  %312 = vmatmul.bf16.gmra.mxu0 %v95
  %v313 = vpop.f32.mrf.mxu0
  %v314 = vadd.f32 %v69, %v313
  %v315 = vpop.f32.mrf.mxu0
  %v316 = vadd.f32 %v69, %v315
  %317 = vdwg.mxu0
  %318 = vmatpush.bf16.msra.mxu0 %v226
  %319 = vmatpush.bf16.msra.mxu0 %v222
  %320 = vmatpush.bf16.msra.mxu0 %v218
  %321 = vmatpush.bf16.msra.mxu0 %v214
  %322 = vmatpush.bf16.msra.mxu0 %v210
  %323 = vmatpush.bf16.msra.mxu0 %v206
  %324 = vmatpush.bf16.msra.mxu0 %v202
  %325 = vmatpush.bf16.msra.mxu0 %v198
  %326 = vmatmul.bf16.gmra.mxu0 %v92
  %v327 = vpop.f32.mrf.mxu0
  %v328 = vadd.f32 %v70, %v327
  %v329 = vpop.f32.mrf.mxu0
  %v330 = vadd.f32 %v70, %v329
  %331 = vmatmul.bf16.gmra.mxu0 %v93
  %v332 = vpop.f32.mrf.mxu0
  %v333 = vadd.f32 %v70, %v332
  %v334 = vpop.f32.mrf.mxu0
  %v335 = vadd.f32 %v70, %v334
  %336 = vmatmul.bf16.gmra.mxu0 %v94
  %v337 = vpop.f32.mrf.mxu0
  %v338 = vadd.f32 %v70, %v337
  %v339 = vpop.f32.mrf.mxu0
  %v340 = vadd.f32 %v70, %v339
  %341 = vmatmul.bf16.gmra.mxu0 %v95
  %v342 = vpop.f32.mrf.mxu0
  %v343 = vadd.f32 %v70, %v342
  %v344 = vpop.f32.mrf.mxu0
  %v345 = vadd.f32 %v70, %v344
  %346 = vdwg.mxu0
  %347 = vmatpush.bf16.msra.mxu0 %v227
  %348 = vmatpush.bf16.msra.mxu0 %v223
  %349 = vmatpush.bf16.msra.mxu0 %v219
  %350 = vmatpush.bf16.msra.mxu0 %v215
  %351 = vmatpush.bf16.msra.mxu0 %v211
  %352 = vmatpush.bf16.msra.mxu0 %v207
  %353 = vmatpush.bf16.msra.mxu0 %v203
  %354 = vmatpush.bf16.msra.mxu0 %v199
  %355 = vmatmul.bf16.gmra.mxu0 %v92
  %v356 = vpop.f32.mrf.mxu0
  %v357 = vadd.f32 %v71, %v356
  %v358 = vpop.f32.mrf.mxu0
  %v359 = vadd.f32 %v71, %v358
  %360 = vmatmul.bf16.gmra.mxu0 %v93
  %v361 = vpop.f32.mrf.mxu0
  %v362 = vadd.f32 %v71, %v361
  %v363 = vpop.f32.mrf.mxu0
  %v364 = vadd.f32 %v71, %v363
  %365 = vmatmul.bf16.gmra.mxu0 %v94
  %v366 = vpop.f32.mrf.mxu0
  %v367 = vadd.f32 %v71, %v366
  %v368 = vpop.f32.mrf.mxu0
  %v369 = vadd.f32 %v71, %v368
  %370 = vmatmul.bf16.gmra.mxu0 %v95
  %v371 = vpop.f32.mrf.mxu0
  %v372 = vadd.f32 %v71, %v371
  %v373 = vpop.f32.mrf.mxu0
  %v374 = vadd.f32 %v71, %v373
  %375 = vdwg.mxu0
  %v376 = vpack.c.bf16 %v299, %v270
  %v377 = vpack.c.bf16 %v357, %v328
  %v378 = vpack.c.bf16 %v301, %v272
  %v379 = vpack.c.bf16 %v359, %v330
  %v380 = vpack.c.bf16 %v304, %v275
  %v381 = vpack.c.bf16 %v362, %v333
  %v382 = vpack.c.bf16 %v306, %v277
  %v383 = vpack.c.bf16 %v364, %v335
  %v384 = vpack.c.bf16 %v309, %v280
  %v385 = vpack.c.bf16 %v367, %v338
  %v386 = vpack.c.bf16 %v311, %v282
  %v387 = vpack.c.bf16 %v369, %v340
  %v388 = vpack.c.bf16 %v314, %v285
  %v389 = vpack.c.bf16 %v372, %v343
  %v390 = vpack.c.bf16 %v316, %v287
  %v391 = vpack.c.bf16 %v374, %v345
  %s392 = smul.u32 0, 4
  %s393 = smul.addr %s392, 4
  %s394 = scalar_lea.vmem [#allocation2], %s393
  %395 = vst [vmem:[%s394] sm:$0xff] %v376
  %396 = vst [vmem:[%s394 + $0x8] sm:$0xff] %v377
  %397 = vst [vmem:[%s394 + $0x10] sm:$0xff] %v378
  %398 = vst [vmem:[%s394 + $0x18] sm:$0xff] %v379
  %399 = vst [vmem:[%s394 + $0x20] sm:$0xff] %v380
  %400 = vst [vmem:[%s394 + $0x28] sm:$0xff] %v381
  %401 = vst [vmem:[%s394 + $0x30] sm:$0xff] %v382
  %402 = vst [vmem:[%s394 + $0x38] sm:$0xff] %v383
  %403 = vst [vmem:[%s394 + $0x40] sm:$0xff] %v384
  %404 = vst [vmem:[%s394 + $0x48] sm:$0xff] %v385
  %405 = vst [vmem:[%s394 + $0x50] sm:$0xff] %v386
  %406 = vst [vmem:[%s394 + $0x58] sm:$0xff] %v387
  %407 = vst [vmem:[%s394 + $0x60] sm:$0xff] %v388
  %408 = vst [vmem:[%s394 + $0x68] sm:$0xff] %v389
  %409 = vst [vmem:[%s394 + $0x70] sm:$0xff] %v390
  %410 = vst [vmem:[%s394 + $0x78] sm:$0xff] %v391
  %v411 = vld [vmem:[%s1] sm:$0xff]
  %v412 = vld [vmem:[%s2] sm:$0xff]
  %v413 = vpack.c.bf16 %v411, %v411
  %v414 = vld [vmem:[%s4] sm:$0xff]
  %v415 = vld [vmem:[%s4 + $0x8] sm:$0xff]
  %v416 = vld [vmem:[%s4 + $0x10] sm:$0xff]
  %v417 = vld [vmem:[%s4 + $0x18] sm:$0xff]
  %v418 = vld [vmem:[%s4 + $0x20] sm:$0xff]
  %v419 = vld [vmem:[%s4 + $0x28] sm:$0xff]
  %v420 = vld [vmem:[%s4 + $0x30] sm:$0xff]
  %v421 = vld [vmem:[%s4 + $0x38] sm:$0xff]
  %v422 = vld [vmem:[%s4 + $0x40] sm:$0xff]
  %v423 = vld [vmem:[%s4 + $0x48] sm:$0xff]
  %v424 = vld [vmem:[%s4 + $0x50] sm:$0xff]
  %v425 = vld [vmem:[%s4 + $0x58] sm:$0xff]
  %v426 = vld [vmem:[%s4 + $0x60] sm:$0xff]
  %v427 = vld [vmem:[%s4 + $0x68] sm:$0xff]
  %v428 = vld [vmem:[%s4 + $0x70] sm:$0xff]
  %v429 = vld [vmem:[%s4 + $0x78] sm:$0xff]
  %v430 = vld [vmem:[%s4 + $0x80] sm:$0xff]
  %v431 = vld [vmem:[%s4 + $0x88] sm:$0xff]
  %v432 = vld [vmem:[%s4 + $0x90] sm:$0xff]
  %v433 = vld [vmem:[%s4 + $0x98] sm:$0xff]
  %v434 = vld [vmem:[%s4 + $0xa0] sm:$0xff]
  %v435 = vld [vmem:[%s4 + $0xa8] sm:$0xff]
  %v436 = vld [vmem:[%s4 + $0xb0] sm:$0xff]
  %v437 = vld [vmem:[%s4 + $0xb8] sm:$0xff]
  %v438 = vld [vmem:[%s4 + $0xc0] sm:$0xff]
  %v439 = vld [vmem:[%s4 + $0xc8] sm:$0xff]
  %v440 = vld [vmem:[%s4 + $0xd0] sm:$0xff]
  %v441 = vld [vmem:[%s4 + $0xd8] sm:$0xff]
  %v442 = vld [vmem:[%s4 + $0xe0] sm:$0xff]
  %v443 = vld [vmem:[%s4 + $0xe8] sm:$0xff]
  %v444 = vld [vmem:[%s4 + $0xf0] sm:$0xff]
  %v445 = vld [vmem:[%s4 + $0xf8] sm:$0xff]
  %v446 = vld [vmem:[#allocation2] sm:$0xff]
  %v447 = vld [vmem:[#allocation2 + $0x8] sm:$0xff]
  %v448 = vunpack.c.l.bf16 %v446
  %v449 = vunpack.c.h.bf16 %v446
  %v450 = vunpack.c.l.bf16 %v447
  %v451 = vunpack.c.h.bf16 %v447
  %v484 = vunpack.c.l.b16 %v414
  %v485 = vunpack.c.h.b16 %v414
  %v486 = vunpack.c.l.b16 %v415
  %v487 = vunpack.c.h.b16 %v415
  %v488 = vunpack.c.l.b16 %v416
  %v489 = vunpack.c.h.b16 %v416
  %v490 = vunpack.c.l.b16 %v417
  %v491 = vunpack.c.h.b16 %v417
  %v492 = vunpack.c.l.b16 %v418
  %v493 = vunpack.c.h.b16 %v418
  %v494 = vunpack.c.l.b16 %v419
  %v495 = vunpack.c.h.b16 %v419
  %v496 = vunpack.c.l.b16 %v420
  %v497 = vunpack.c.h.b16 %v420
  %v498 = vunpack.c.l.b16 %v421
  %v499 = vunpack.c.h.b16 %v421
  %v500 = vunpack.c.l.b16 %v422
  %v501 = vunpack.c.h.b16 %v422
  %v502 = vunpack.c.l.b16 %v423
  %v503 = vunpack.c.h.b16 %v423
  %v504 = vunpack.c.l.b16 %v424
  %v505 = vunpack.c.h.b16 %v424
  %v506 = vunpack.c.l.b16 %v425
  %v507 = vunpack.c.h.b16 %v425
  %v508 = vunpack.c.l.b16 %v426
  %v509 = vunpack.c.h.b16 %v426
  %v510 = vunpack.c.l.b16 %v427
  %v511 = vunpack.c.h.b16 %v427
  %v512 = vunpack.c.l.b16 %v428
  %v513 = vunpack.c.h.b16 %v428
  %v514 = vunpack.c.l.b16 %v429
  %v515 = vunpack.c.h.b16 %v429
  %v516 = vunpack.c.l.b16 %v430
  %v517 = vunpack.c.h.b16 %v430
  %v518 = vunpack.c.l.b16 %v431
  %v519 = vunpack.c.h.b16 %v431
  %v520 = vunpack.c.l.b16 %v432
  %v521 = vunpack.c.h.b16 %v432
  %v522 = vunpack.c.l.b16 %v433
  %v523 = vunpack.c.h.b16 %v433
  %v524 = vunpack.c.l.b16 %v434
  %v525 = vunpack.c.h.b16 %v434
  %v526 = vunpack.c.l.b16 %v435
  %v527 = vunpack.c.h.b16 %v435
  %v528 = vunpack.c.l.b16 %v436
  %v529 = vunpack.c.h.b16 %v436
  %v530 = vunpack.c.l.b16 %v437
  %v531 = vunpack.c.h.b16 %v437
  %v532 = vunpack.c.l.b16 %v438
  %v533 = vunpack.c.h.b16 %v438
  %v534 = vunpack.c.l.b16 %v439
  %v535 = vunpack.c.h.b16 %v439
  %v536 = vunpack.c.l.b16 %v440
  %v537 = vunpack.c.h.b16 %v440
  %v538 = vunpack.c.l.b16 %v441
  %v539 = vunpack.c.h.b16 %v441
  %v540 = vunpack.c.l.b16 %v442
  %v541 = vunpack.c.h.b16 %v442
  %v542 = vunpack.c.l.b16 %v443
  %v543 = vunpack.c.h.b16 %v443
  %v544 = vunpack.c.l.b16 %v444
  %v545 = vunpack.c.h.b16 %v444
  %v546 = vunpack.c.l.b16 %v445
  %v547 = vunpack.c.h.b16 %v445
  %v548 = vpack.c.b16 %v488, %v484
  %v549 = vpack.c.b16 %v489, %v485
  %v550 = vpack.c.b16 %v490, %v486
  %v551 = vpack.c.b16 %v491, %v487
  %v552 = vpack.c.b16 %v496, %v492
  %v553 = vpack.c.b16 %v497, %v493
  %v554 = vpack.c.b16 %v498, %v494
  %v555 = vpack.c.b16 %v499, %v495
  %v556 = vpack.c.b16 %v504, %v500
  %v557 = vpack.c.b16 %v505, %v501
  %v558 = vpack.c.b16 %v506, %v502
  %v559 = vpack.c.b16 %v507, %v503
  %v560 = vpack.c.b16 %v512, %v508
  %v561 = vpack.c.b16 %v513, %v509
  %v562 = vpack.c.b16 %v514, %v510
  %v563 = vpack.c.b16 %v515, %v511
  %v564 = vpack.c.b16 %v520, %v516
  %v565 = vpack.c.b16 %v521, %v517
  %v566 = vpack.c.b16 %v522, %v518
  %v567 = vpack.c.b16 %v523, %v519
  %v568 = vpack.c.b16 %v528, %v524
  %v569 = vpack.c.b16 %v529, %v525
  %v570 = vpack.c.b16 %v530, %v526
  %v571 = vpack.c.b16 %v531, %v527
  %v572 = vpack.c.b16 %v536, %v532
  %v573 = vpack.c.b16 %v537, %v533
  %v574 = vpack.c.b16 %v538, %v534
  %v575 = vpack.c.b16 %v539, %v535
  %v576 = vpack.c.b16 %v544, %v540
  %v577 = vpack.c.b16 %v545, %v541
  %v578 = vpack.c.b16 %v546, %v542
  %v579 = vpack.c.b16 %v547, %v543
  %612 = vmatpush.bf16.msra.mxu0 %v576
  %613 = vmatpush.bf16.msra.mxu0 %v572
  %614 = vmatpush.bf16.msra.mxu0 %v568
  %615 = vmatpush.bf16.msra.mxu0 %v564
  %616 = vmatpush.bf16.msra.mxu0 %v560
  %617 = vmatpush.bf16.msra.mxu0 %v556
  %618 = vmatpush.bf16.msra.mxu0 %v552
  %619 = vmatpush.bf16.msra.mxu0 %v548
  %620 = vmatmul.bf16.gmra.mxu0 %v413
  %v621 = vpop.f32.mrf.mxu0
  %v622 = vadd.f32 %v448, %v621
  %v623 = vpop.f32.mrf.mxu0
  %624 = vdwg.mxu0
  %625 = vmatpush.bf16.msra.mxu0 %v577
  %626 = vmatpush.bf16.msra.mxu0 %v573
  %627 = vmatpush.bf16.msra.mxu0 %v569
  %628 = vmatpush.bf16.msra.mxu0 %v565
  %629 = vmatpush.bf16.msra.mxu0 %v561
  %630 = vmatpush.bf16.msra.mxu0 %v557
  %631 = vmatpush.bf16.msra.mxu0 %v553
  %632 = vmatpush.bf16.msra.mxu0 %v549
  %633 = vmatmul.bf16.gmra.mxu0 %v413
  %v634 = vpop.f32.mrf.mxu0
  %v635 = vadd.f32 %v449, %v634
  %v636 = vpop.f32.mrf.mxu0
  %637 = vdwg.mxu0
  %638 = vmatpush.bf16.msra.mxu0 %v578
  %639 = vmatpush.bf16.msra.mxu0 %v574
  %640 = vmatpush.bf16.msra.mxu0 %v570
  %641 = vmatpush.bf16.msra.mxu0 %v566
  %642 = vmatpush.bf16.msra.mxu0 %v562
  %643 = vmatpush.bf16.msra.mxu0 %v558
  %644 = vmatpush.bf16.msra.mxu0 %v554
  %645 = vmatpush.bf16.msra.mxu0 %v550
  %646 = vmatmul.bf16.gmra.mxu0 %v413
  %v647 = vpop.f32.mrf.mxu0
  %v648 = vadd.f32 %v450, %v647
  %v649 = vpop.f32.mrf.mxu0
  %650 = vdwg.mxu0
  %651 = vmatpush.bf16.msra.mxu0 %v579
  %652 = vmatpush.bf16.msra.mxu0 %v575
  %653 = vmatpush.bf16.msra.mxu0 %v571
  %654 = vmatpush.bf16.msra.mxu0 %v567
  %655 = vmatpush.bf16.msra.mxu0 %v563
  %656 = vmatpush.bf16.msra.mxu0 %v559
  %657 = vmatpush.bf16.msra.mxu0 %v555
  %658 = vmatpush.bf16.msra.mxu0 %v551
  %659 = vmatmul.bf16.gmra.mxu0 %v413
  %v660 = vpop.f32.mrf.mxu0
  %v661 = vadd.f32 %v451, %v660
  %v662 = vpop.f32.mrf.mxu0
  %663 = vdwg.mxu0
  %v664 = vxor.u32 %v622, 2147483648
  %v665 = vmul.f32 %v664, 1.442695
  %v666 = vpow.pop %v665
  %v667 = vadd.f32 %v666, 1.0
  %v668 = vrcp.pop %v667
  %v669 = vmul.f32 %v667, %v668
  %v670 = vsub.f32 1.0, %v669
  %v671 = vmul.f32 %v668, %v670
  %v672 = vadd.f32 %v668, %v671
  %vm673 = vweird.f32 %v667
  %vm674 = vweird.f32 %v668
  %vm675 = vmor %vm673, %vm674
  %v676 = vsel %vm675, %v668, %v672
  %v677 = vand.u32 2147483647, %v667
  %vm678 = vcmp.eq.f32.partialorder %v677, 8.507059e+37
  %v679 = vand.u32 %v667, 2147483648
  %v680 = vor.u32 1.1754944e-38, %v679
  %v681 = vsel %vm678, %v680, %v676
  %v682 = vmul.f32 1.0, %v681
  %v683 = vxor.u32 %v635, 2147483648
  %v684 = vmul.f32 %v683, 1.442695
  %v685 = vpow.pop %v684
  %v686 = vadd.f32 %v685, 1.0
  %v687 = vrcp.pop %v686
  %v688 = vmul.f32 %v686, %v687
  %v689 = vsub.f32 1.0, %v688
  %v690 = vmul.f32 %v687, %v689
  %v691 = vadd.f32 %v687, %v690
  %vm692 = vweird.f32 %v686
  %vm693 = vweird.f32 %v687
  %vm694 = vmor %vm692, %vm693
  %v695 = vsel %vm694, %v687, %v691
  %v696 = vand.u32 2147483647, %v686
  %vm697 = vcmp.eq.f32.partialorder %v696, 8.507059e+37
  %v698 = vand.u32 %v686, 2147483648
  %v699 = vor.u32 1.1754944e-38, %v698
  %v700 = vsel %vm697, %v699, %v695
  %v701 = vmul.f32 1.0, %v700
  %v702 = vtanh.pop %v648
  %v703 = vxor.u32 %v661, 2147483648
  %v704 = vmul.f32 %v703, 1.442695
  %v705 = vpow.pop %v704
  %v706 = vadd.f32 %v705, 1.0
  %v707 = vrcp.pop %v706
  %v708 = vmul.f32 %v706, %v707
  %v709 = vsub.f32 1.0, %v708
  %v710 = vmul.f32 %v707, %v709
  %v711 = vadd.f32 %v707, %v710
  %vm712 = vweird.f32 %v706
  %vm713 = vweird.f32 %v707
  %vm714 = vmor %vm712, %vm713
  %v715 = vsel %vm714, %v707, %v711
  %v716 = vand.u32 2147483647, %v706
  %vm717 = vcmp.eq.f32.partialorder %v716, 8.507059e+37
  %v718 = vand.u32 %v706, 2147483648
  %v719 = vor.u32 1.1754944e-38, %v718
  %v720 = vsel %vm717, %v719, %v715
  %v721 = vmul.f32 1.0, %v720
  %v722 = vmul.f32 %v701, %v412
  %v723 = vmul.f32 %v682, %v702
  %v724 = vadd.f32 %v722, %v723
  %v725 = vtanh.pop %v724
  %v726 = vmul.f32 %v721, %v725
  %727 = vst [vmem:[%s6] sm:$0xff] %v726
  %v728 = vsub.f32 -inf, %v726
  %v729 = vmul.f32 %v728, 1.442695
  %v730 = vpow.pop %v729
  %v731 = vmul.f32 %v730, 0.0
  %v732 = vsub.f32 %v726, %v726
  %v733 = vmul.f32 %v732, 1.442695
  %v734 = vpow.pop %v733
  %v735 = vadd.f32 %v731, %v734
  %v736 = vpack.c.bf16 %v726, %v726
  %v737 = vld [vmem:[%s4] sm:$0xff]
  %v738 = vld [vmem:[%s4 + $0x8] sm:$0xff]
  %v739 = vld [vmem:[%s4 + $0x10] sm:$0xff]
  %v740 = vld [vmem:[%s4 + $0x18] sm:$0xff]
  %v741 = vld [vmem:[%s4 + $0x20] sm:$0xff]
  %v742 = vld [vmem:[%s4 + $0x28] sm:$0xff]
  %v743 = vld [vmem:[%s4 + $0x30] sm:$0xff]
  %v744 = vld [vmem:[%s4 + $0x38] sm:$0xff]
  %v745 = vld [vmem:[%s4 + $0x40] sm:$0xff]
  %v746 = vld [vmem:[%s4 + $0x48] sm:$0xff]
  %v747 = vld [vmem:[%s4 + $0x50] sm:$0xff]
  %v748 = vld [vmem:[%s4 + $0x58] sm:$0xff]
  %v749 = vld [vmem:[%s4 + $0x60] sm:$0xff]
  %v750 = vld [vmem:[%s4 + $0x68] sm:$0xff]
  %v751 = vld [vmem:[%s4 + $0x70] sm:$0xff]
  %v752 = vld [vmem:[%s4 + $0x78] sm:$0xff]
  %v753 = vld [vmem:[%s4 + $0x80] sm:$0xff]
  %v754 = vld [vmem:[%s4 + $0x88] sm:$0xff]
  %v755 = vld [vmem:[%s4 + $0x90] sm:$0xff]
  %v756 = vld [vmem:[%s4 + $0x98] sm:$0xff]
  %v757 = vld [vmem:[%s4 + $0xa0] sm:$0xff]
  %v758 = vld [vmem:[%s4 + $0xa8] sm:$0xff]
  %v759 = vld [vmem:[%s4 + $0xb0] sm:$0xff]
  %v760 = vld [vmem:[%s4 + $0xb8] sm:$0xff]
  %v761 = vld [vmem:[%s4 + $0xc0] sm:$0xff]
  %v762 = vld [vmem:[%s4 + $0xc8] sm:$0xff]
  %v763 = vld [vmem:[%s4 + $0xd0] sm:$0xff]
  %v764 = vld [vmem:[%s4 + $0xd8] sm:$0xff]
  %v765 = vld [vmem:[%s4 + $0xe0] sm:$0xff]
  %v766 = vld [vmem:[%s4 + $0xe8] sm:$0xff]
  %v767 = vld [vmem:[%s4 + $0xf0] sm:$0xff]
  %v768 = vld [vmem:[%s4 + $0xf8] sm:$0xff]
  %s769 = scalar_lea.vmem [#allocation2], 16
  %v770 = vld [vmem:[%s769] sm:$0xff]
  %v771 = vld [vmem:[%s769 + $0x8] sm:$0xff]
  %v772 = vunpack.c.l.bf16 %v770
  %v773 = vunpack.c.h.bf16 %v770
  %v774 = vunpack.c.l.bf16 %v771
  %v775 = vunpack.c.h.bf16 %v771
  %v808 = vunpack.c.l.b16 %v737
  %v809 = vunpack.c.h.b16 %v737
  %v810 = vunpack.c.l.b16 %v738
  %v811 = vunpack.c.h.b16 %v738
  %v812 = vunpack.c.l.b16 %v739
  %v813 = vunpack.c.h.b16 %v739
  %v814 = vunpack.c.l.b16 %v740
  %v815 = vunpack.c.h.b16 %v740
  %v816 = vunpack.c.l.b16 %v741
  %v817 = vunpack.c.h.b16 %v741
  %v818 = vunpack.c.l.b16 %v742
  %v819 = vunpack.c.h.b16 %v742
  %v820 = vunpack.c.l.b16 %v743
  %v821 = vunpack.c.h.b16 %v743
  %v822 = vunpack.c.l.b16 %v744
  %v823 = vunpack.c.h.b16 %v744
  %v824 = vunpack.c.l.b16 %v745
  %v825 = vunpack.c.h.b16 %v745
  %v826 = vunpack.c.l.b16 %v746
  %v827 = vunpack.c.h.b16 %v746
  %v828 = vunpack.c.l.b16 %v747
  %v829 = vunpack.c.h.b16 %v747
  %v830 = vunpack.c.l.b16 %v748
  %v831 = vunpack.c.h.b16 %v748
  %v832 = vunpack.c.l.b16 %v749
  %v833 = vunpack.c.h.b16 %v749
  %v834 = vunpack.c.l.b16 %v750
  %v835 = vunpack.c.h.b16 %v750
  %v836 = vunpack.c.l.b16 %v751
  %v837 = vunpack.c.h.b16 %v751
  %v838 = vunpack.c.l.b16 %v752
  %v839 = vunpack.c.h.b16 %v752
  %v840 = vunpack.c.l.b16 %v753
  %v841 = vunpack.c.h.b16 %v753
  %v842 = vunpack.c.l.b16 %v754
  %v843 = vunpack.c.h.b16 %v754
  %v844 = vunpack.c.l.b16 %v755
  %v845 = vunpack.c.h.b16 %v755
  %v846 = vunpack.c.l.b16 %v756
  %v847 = vunpack.c.h.b16 %v756
  %v848 = vunpack.c.l.b16 %v757
  %v849 = vunpack.c.h.b16 %v757
  %v850 = vunpack.c.l.b16 %v758
  %v851 = vunpack.c.h.b16 %v758
  %v852 = vunpack.c.l.b16 %v759
  %v853 = vunpack.c.h.b16 %v759
  %v854 = vunpack.c.l.b16 %v760
  %v855 = vunpack.c.h.b16 %v760
  %v856 = vunpack.c.l.b16 %v761
  %v857 = vunpack.c.h.b16 %v761
  %v858 = vunpack.c.l.b16 %v762
  %v859 = vunpack.c.h.b16 %v762
  %v860 = vunpack.c.l.b16 %v763
  %v861 = vunpack.c.h.b16 %v763
  %v862 = vunpack.c.l.b16 %v764
  %v863 = vunpack.c.h.b16 %v764
  %v864 = vunpack.c.l.b16 %v765
  %v865 = vunpack.c.h.b16 %v765
  %v866 = vunpack.c.l.b16 %v766
  %v867 = vunpack.c.h.b16 %v766
  %v868 = vunpack.c.l.b16 %v767
  %v869 = vunpack.c.h.b16 %v767
  %v870 = vunpack.c.l.b16 %v768
  %v871 = vunpack.c.h.b16 %v768
  %v872 = vpack.c.b16 %v812, %v808
  %v873 = vpack.c.b16 %v813, %v809
  %v874 = vpack.c.b16 %v814, %v810
  %v875 = vpack.c.b16 %v815, %v811
  %v876 = vpack.c.b16 %v820, %v816
  %v877 = vpack.c.b16 %v821, %v817
  %v878 = vpack.c.b16 %v822, %v818
  %v879 = vpack.c.b16 %v823, %v819
  %v880 = vpack.c.b16 %v828, %v824
  %v881 = vpack.c.b16 %v829, %v825
  %v882 = vpack.c.b16 %v830, %v826
  %v883 = vpack.c.b16 %v831, %v827
  %v884 = vpack.c.b16 %v836, %v832
  %v885 = vpack.c.b16 %v837, %v833
  %v886 = vpack.c.b16 %v838, %v834
  %v887 = vpack.c.b16 %v839, %v835
  %v888 = vpack.c.b16 %v844, %v840
  %v889 = vpack.c.b16 %v845, %v841
  %v890 = vpack.c.b16 %v846, %v842
  %v891 = vpack.c.b16 %v847, %v843
  %v892 = vpack.c.b16 %v852, %v848
  %v893 = vpack.c.b16 %v853, %v849
  %v894 = vpack.c.b16 %v854, %v850
  %v895 = vpack.c.b16 %v855, %v851
  %v896 = vpack.c.b16 %v860, %v856
  %v897 = vpack.c.b16 %v861, %v857
  %v898 = vpack.c.b16 %v862, %v858
  %v899 = vpack.c.b16 %v863, %v859
  %v900 = vpack.c.b16 %v868, %v864
  %v901 = vpack.c.b16 %v869, %v865
  %v902 = vpack.c.b16 %v870, %v866
  %v903 = vpack.c.b16 %v871, %v867
  %936 = vmatpush.bf16.msra.mxu0 %v900
  %937 = vmatpush.bf16.msra.mxu0 %v896
  %938 = vmatpush.bf16.msra.mxu0 %v892
  %939 = vmatpush.bf16.msra.mxu0 %v888
  %940 = vmatpush.bf16.msra.mxu0 %v884
  %941 = vmatpush.bf16.msra.mxu0 %v880
  %942 = vmatpush.bf16.msra.mxu0 %v876
  %943 = vmatpush.bf16.msra.mxu0 %v872
  %944 = vmatmul.bf16.gmra.mxu0 %v736
  %v945 = vpop.f32.mrf.mxu0
  %v946 = vadd.f32 %v772, %v945
  %v947 = vpop.f32.mrf.mxu0
  %948 = vdwg.mxu0
  %949 = vmatpush.bf16.msra.mxu0 %v901
  %950 = vmatpush.bf16.msra.mxu0 %v897
  %951 = vmatpush.bf16.msra.mxu0 %v893
  %952 = vmatpush.bf16.msra.mxu0 %v889
  %953 = vmatpush.bf16.msra.mxu0 %v885
  %954 = vmatpush.bf16.msra.mxu0 %v881
  %955 = vmatpush.bf16.msra.mxu0 %v877
  %956 = vmatpush.bf16.msra.mxu0 %v873
  %957 = vmatmul.bf16.gmra.mxu0 %v736
  %v958 = vpop.f32.mrf.mxu0
  %v959 = vadd.f32 %v773, %v958
  %v960 = vpop.f32.mrf.mxu0
  %961 = vdwg.mxu0
  %962 = vmatpush.bf16.msra.mxu0 %v902
  %963 = vmatpush.bf16.msra.mxu0 %v898
  %964 = vmatpush.bf16.msra.mxu0 %v894
  %965 = vmatpush.bf16.msra.mxu0 %v890
  %966 = vmatpush.bf16.msra.mxu0 %v886
  %967 = vmatpush.bf16.msra.mxu0 %v882
  %968 = vmatpush.bf16.msra.mxu0 %v878
  %969 = vmatpush.bf16.msra.mxu0 %v874
  %970 = vmatmul.bf16.gmra.mxu0 %v736
  %v971 = vpop.f32.mrf.mxu0
  %v972 = vadd.f32 %v774, %v971
  %v973 = vpop.f32.mrf.mxu0
  %974 = vdwg.mxu0
  %975 = vmatpush.bf16.msra.mxu0 %v903
  %976 = vmatpush.bf16.msra.mxu0 %v899
  %977 = vmatpush.bf16.msra.mxu0 %v895
  %978 = vmatpush.bf16.msra.mxu0 %v891
  %979 = vmatpush.bf16.msra.mxu0 %v887
  %980 = vmatpush.bf16.msra.mxu0 %v883
  %981 = vmatpush.bf16.msra.mxu0 %v879
  %982 = vmatpush.bf16.msra.mxu0 %v875
  %983 = vmatmul.bf16.gmra.mxu0 %v736
  %v984 = vpop.f32.mrf.mxu0
  %v985 = vadd.f32 %v775, %v984
  %v986 = vpop.f32.mrf.mxu0
  %987 = vdwg.mxu0
  %v988 = vxor.u32 %v946, 2147483648
  %v989 = vmul.f32 %v988, 1.442695
  %v990 = vpow.pop %v989
  %v991 = vadd.f32 %v990, 1.0
  %v992 = vrcp.pop %v991
  %v993 = vmul.f32 %v991, %v992
  %v994 = vsub.f32 1.0, %v993
  %v995 = vmul.f32 %v992, %v994
  %v996 = vadd.f32 %v992, %v995
  %vm997 = vweird.f32 %v991
  %vm998 = vweird.f32 %v992
  %vm999 = vmor %vm997, %vm998
  %v1000 = vsel %vm999, %v992, %v996
  %v1001 = vand.u32 2147483647, %v991
  %vm1002 = vcmp.eq.f32.partialorder %v1001, 8.507059e+37
  %v1003 = vand.u32 %v991, 2147483648
  %v1004 = vor.u32 1.1754944e-38, %v1003
  %v1005 = vsel %vm1002, %v1004, %v1000
  %v1006 = vmul.f32 1.0, %v1005
  %v1007 = vxor.u32 %v959, 2147483648
  %v1008 = vmul.f32 %v1007, 1.442695
  %v1009 = vpow.pop %v1008
  %v1010 = vadd.f32 %v1009, 1.0
  %v1011 = vrcp.pop %v1010
  %v1012 = vmul.f32 %v1010, %v1011
  %v1013 = vsub.f32 1.0, %v1012
  %v1014 = vmul.f32 %v1011, %v1013
  %v1015 = vadd.f32 %v1011, %v1014
  %vm1016 = vweird.f32 %v1010
  %vm1017 = vweird.f32 %v1011
  %vm1018 = vmor %vm1016, %vm1017
  %v1019 = vsel %vm1018, %v1011, %v1015
  %v1020 = vand.u32 2147483647, %v1010
  %vm1021 = vcmp.eq.f32.partialorder %v1020, 8.507059e+37
  %v1022 = vand.u32 %v1010, 2147483648
  %v1023 = vor.u32 1.1754944e-38, %v1022
  %v1024 = vsel %vm1021, %v1023, %v1019
  %v1025 = vmul.f32 1.0, %v1024
  %v1026 = vtanh.pop %v972
  %v1027 = vxor.u32 %v985, 2147483648
  %v1028 = vmul.f32 %v1027, 1.442695
  %v1029 = vpow.pop %v1028
  %v1030 = vadd.f32 %v1029, 1.0
  %v1031 = vrcp.pop %v1030
  %v1032 = vmul.f32 %v1030, %v1031
  %v1033 = vsub.f32 1.0, %v1032
  %v1034 = vmul.f32 %v1031, %v1033
  %v1035 = vadd.f32 %v1031, %v1034
  %vm1036 = vweird.f32 %v1030
  %vm1037 = vweird.f32 %v1031
  %vm1038 = vmor %vm1036, %vm1037
  %v1039 = vsel %vm1038, %v1031, %v1035
  %v1040 = vand.u32 2147483647, %v1030
  %vm1041 = vcmp.eq.f32.partialorder %v1040, 8.507059e+37
  %v1042 = vand.u32 %v1030, 2147483648
  %v1043 = vor.u32 1.1754944e-38, %v1042
  %v1044 = vsel %vm1041, %v1043, %v1039
  %v1045 = vmul.f32 1.0, %v1044
  %v1046 = vmul.f32 %v1025, %v724
  %v1047 = vmul.f32 %v1006, %v1026
  %v1048 = vadd.f32 %v1046, %v1047
  %v1049 = vtanh.pop %v1048
  %v1050 = vmul.f32 %v1045, %v1049
  %s1051 = scalar_lea.vmem %s6, 8
  %1052 = vst [vmem:[%s1051] sm:$0xff] %v1050
  %v1053 = vmax.f32 %v726, %v1050
  %v1054 = vsub.f32 %v726, %v1053
  %v1055 = vmul.f32 %v1054, 1.442695
  %v1056 = vpow.pop %v1055
  %v1057 = vmul.f32 %v735, %v1056
  %v1058 = vsub.f32 %v1050, %v1053
  %v1059 = vmul.f32 %v1058, 1.442695
  %v1060 = vpow.pop %v1059
  %v1061 = vadd.f32 %v1057, %v1060
  %v1062 = vpack.c.bf16 %v1050, %v1050
  %v1063 = vld [vmem:[%s4] sm:$0xff]
  %v1064 = vld [vmem:[%s4 + $0x8] sm:$0xff]
  %v1065 = vld [vmem:[%s4 + $0x10] sm:$0xff]
  %v1066 = vld [vmem:[%s4 + $0x18] sm:$0xff]
  %v1067 = vld [vmem:[%s4 + $0x20] sm:$0xff]
  %v1068 = vld [vmem:[%s4 + $0x28] sm:$0xff]
  %v1069 = vld [vmem:[%s4 + $0x30] sm:$0xff]
  %v1070 = vld [vmem:[%s4 + $0x38] sm:$0xff]
  %v1071 = vld [vmem:[%s4 + $0x40] sm:$0xff]
  %v1072 = vld [vmem:[%s4 + $0x48] sm:$0xff]
  %v1073 = vld [vmem:[%s4 + $0x50] sm:$0xff]
  %v1074 = vld [vmem:[%s4 + $0x58] sm:$0xff]
  %v1075 = vld [vmem:[%s4 + $0x60] sm:$0xff]
  %v1076 = vld [vmem:[%s4 + $0x68] sm:$0xff]
  %v1077 = vld [vmem:[%s4 + $0x70] sm:$0xff]
  %v1078 = vld [vmem:[%s4 + $0x78] sm:$0xff]
  %v1079 = vld [vmem:[%s4 + $0x80] sm:$0xff]
  %v1080 = vld [vmem:[%s4 + $0x88] sm:$0xff]
  %v1081 = vld [vmem:[%s4 + $0x90] sm:$0xff]
  %v1082 = vld [vmem:[%s4 + $0x98] sm:$0xff]
  %v1083 = vld [vmem:[%s4 + $0xa0] sm:$0xff]
  %v1084 = vld [vmem:[%s4 + $0xa8] sm:$0xff]
  %v1085 = vld [vmem:[%s4 + $0xb0] sm:$0xff]
  %v1086 = vld [vmem:[%s4 + $0xb8] sm:$0xff]
  %v1087 = vld [vmem:[%s4 + $0xc0] sm:$0xff]
  %v1088 = vld [vmem:[%s4 + $0xc8] sm:$0xff]
  %v1089 = vld [vmem:[%s4 + $0xd0] sm:$0xff]
  %v1090 = vld [vmem:[%s4 + $0xd8] sm:$0xff]
  %v1091 = vld [vmem:[%s4 + $0xe0] sm:$0xff]
  %v1092 = vld [vmem:[%s4 + $0xe8] sm:$0xff]
  %v1093 = vld [vmem:[%s4 + $0xf0] sm:$0xff]
  %v1094 = vld [vmem:[%s4 + $0xf8] sm:$0xff]
  %s1095 = scalar_lea.vmem [#allocation2], 32
  %v1096 = vld [vmem:[%s1095] sm:$0xff]
  %v1097 = vld [vmem:[%s1095 + $0x8] sm:$0xff]
  %v1098 = vunpack.c.l.bf16 %v1096
  %v1099 = vunpack.c.h.bf16 %v1096
  %v1100 = vunpack.c.l.bf16 %v1097
  %v1101 = vunpack.c.h.bf16 %v1097
  %v1134 = vunpack.c.l.b16 %v1063
  %v1135 = vunpack.c.h.b16 %v1063
  %v1136 = vunpack.c.l.b16 %v1064
  %v1137 = vunpack.c.h.b16 %v1064
  %v1138 = vunpack.c.l.b16 %v1065
  %v1139 = vunpack.c.h.b16 %v1065
  %v1140 = vunpack.c.l.b16 %v1066
  %v1141 = vunpack.c.h.b16 %v1066
  %v1142 = vunpack.c.l.b16 %v1067
  %v1143 = vunpack.c.h.b16 %v1067
  %v1144 = vunpack.c.l.b16 %v1068
  %v1145 = vunpack.c.h.b16 %v1068
  %v1146 = vunpack.c.l.b16 %v1069
  %v1147 = vunpack.c.h.b16 %v1069
  %v1148 = vunpack.c.l.b16 %v1070
  %v1149 = vunpack.c.h.b16 %v1070
  %v1150 = vunpack.c.l.b16 %v1071
  %v1151 = vunpack.c.h.b16 %v1071
  %v1152 = vunpack.c.l.b16 %v1072
  %v1153 = vunpack.c.h.b16 %v1072
  %v1154 = vunpack.c.l.b16 %v1073
  %v1155 = vunpack.c.h.b16 %v1073
  %v1156 = vunpack.c.l.b16 %v1074
  %v1157 = vunpack.c.h.b16 %v1074
  %v1158 = vunpack.c.l.b16 %v1075
  %v1159 = vunpack.c.h.b16 %v1075
  %v1160 = vunpack.c.l.b16 %v1076
  %v1161 = vunpack.c.h.b16 %v1076
  %v1162 = vunpack.c.l.b16 %v1077
  %v1163 = vunpack.c.h.b16 %v1077
  %v1164 = vunpack.c.l.b16 %v1078
  %v1165 = vunpack.c.h.b16 %v1078
  %v1166 = vunpack.c.l.b16 %v1079
  %v1167 = vunpack.c.h.b16 %v1079
  %v1168 = vunpack.c.l.b16 %v1080
  %v1169 = vunpack.c.h.b16 %v1080
  %v1170 = vunpack.c.l.b16 %v1081
  %v1171 = vunpack.c.h.b16 %v1081
  %v1172 = vunpack.c.l.b16 %v1082
  %v1173 = vunpack.c.h.b16 %v1082
  %v1174 = vunpack.c.l.b16 %v1083
  %v1175 = vunpack.c.h.b16 %v1083
  %v1176 = vunpack.c.l.b16 %v1084
  %v1177 = vunpack.c.h.b16 %v1084
  %v1178 = vunpack.c.l.b16 %v1085
  %v1179 = vunpack.c.h.b16 %v1085
  %v1180 = vunpack.c.l.b16 %v1086
  %v1181 = vunpack.c.h.b16 %v1086
  %v1182 = vunpack.c.l.b16 %v1087
  %v1183 = vunpack.c.h.b16 %v1087
  %v1184 = vunpack.c.l.b16 %v1088
  %v1185 = vunpack.c.h.b16 %v1088
  %v1186 = vunpack.c.l.b16 %v1089
  %v1187 = vunpack.c.h.b16 %v1089
  %v1188 = vunpack.c.l.b16 %v1090
  %v1189 = vunpack.c.h.b16 %v1090
  %v1190 = vunpack.c.l.b16 %v1091
  %v1191 = vunpack.c.h.b16 %v1091
  %v1192 = vunpack.c.l.b16 %v1092
  %v1193 = vunpack.c.h.b16 %v1092
  %v1194 = vunpack.c.l.b16 %v1093
  %v1195 = vunpack.c.h.b16 %v1093
  %v1196 = vunpack.c.l.b16 %v1094
  %v1197 = vunpack.c.h.b16 %v1094
  %v1198 = vpack.c.b16 %v1138, %v1134
  %v1199 = vpack.c.b16 %v1139, %v1135
  %v1200 = vpack.c.b16 %v1140, %v1136
  %v1201 = vpack.c.b16 %v1141, %v1137
  %v1202 = vpack.c.b16 %v1146, %v1142
  %v1203 = vpack.c.b16 %v1147, %v1143
  %v1204 = vpack.c.b16 %v1148, %v1144
  %v1205 = vpack.c.b16 %v1149, %v1145
  %v1206 = vpack.c.b16 %v1154, %v1150
  %v1207 = vpack.c.b16 %v1155, %v1151
  %v1208 = vpack.c.b16 %v1156, %v1152
  %v1209 = vpack.c.b16 %v1157, %v1153
  %v1210 = vpack.c.b16 %v1162, %v1158
  %v1211 = vpack.c.b16 %v1163, %v1159
  %v1212 = vpack.c.b16 %v1164, %v1160
  %v1213 = vpack.c.b16 %v1165, %v1161
  %v1214 = vpack.c.b16 %v1170, %v1166
  %v1215 = vpack.c.b16 %v1171, %v1167
  %v1216 = vpack.c.b16 %v1172, %v1168
  %v1217 = vpack.c.b16 %v1173, %v1169
  %v1218 = vpack.c.b16 %v1178, %v1174
  %v1219 = vpack.c.b16 %v1179, %v1175
  %v1220 = vpack.c.b16 %v1180, %v1176
  %v1221 = vpack.c.b16 %v1181, %v1177
  %v1222 = vpack.c.b16 %v1186, %v1182
  %v1223 = vpack.c.b16 %v1187, %v1183
  %v1224 = vpack.c.b16 %v1188, %v1184
  %v1225 = vpack.c.b16 %v1189, %v1185
  %v1226 = vpack.c.b16 %v1194, %v1190
  %v1227 = vpack.c.b16 %v1195, %v1191
  %v1228 = vpack.c.b16 %v1196, %v1192
  %v1229 = vpack.c.b16 %v1197, %v1193
  %1262 = vmatpush.bf16.msra.mxu0 %v1226
  %1263 = vmatpush.bf16.msra.mxu0 %v1222
  %1264 = vmatpush.bf16.msra.mxu0 %v1218
  %1265 = vmatpush.bf16.msra.mxu0 %v1214
  %1266 = vmatpush.bf16.msra.mxu0 %v1210
  %1267 = vmatpush.bf16.msra.mxu0 %v1206
  %1268 = vmatpush.bf16.msra.mxu0 %v1202
  %1269 = vmatpush.bf16.msra.mxu0 %v1198
  %1270 = vmatmul.bf16.gmra.mxu0 %v1062
  %v1271 = vpop.f32.mrf.mxu0
  %v1272 = vadd.f32 %v1098, %v1271
  %v1273 = vpop.f32.mrf.mxu0
  %1274 = vdwg.mxu0
  %1275 = vmatpush.bf16.msra.mxu0 %v1227
  %1276 = vmatpush.bf16.msra.mxu0 %v1223
  %1277 = vmatpush.bf16.msra.mxu0 %v1219
  %1278 = vmatpush.bf16.msra.mxu0 %v1215
  %1279 = vmatpush.bf16.msra.mxu0 %v1211
  %1280 = vmatpush.bf16.msra.mxu0 %v1207
  %1281 = vmatpush.bf16.msra.mxu0 %v1203
  %1282 = vmatpush.bf16.msra.mxu0 %v1199
  %1283 = vmatmul.bf16.gmra.mxu0 %v1062
  %v1284 = vpop.f32.mrf.mxu0
  %v1285 = vadd.f32 %v1099, %v1284
  %v1286 = vpop.f32.mrf.mxu0
  %1287 = vdwg.mxu0
  %1288 = vmatpush.bf16.msra.mxu0 %v1228
  %1289 = vmatpush.bf16.msra.mxu0 %v1224
  %1290 = vmatpush.bf16.msra.mxu0 %v1220
  %1291 = vmatpush.bf16.msra.mxu0 %v1216
  %1292 = vmatpush.bf16.msra.mxu0 %v1212
  %1293 = vmatpush.bf16.msra.mxu0 %v1208
  %1294 = vmatpush.bf16.msra.mxu0 %v1204
  %1295 = vmatpush.bf16.msra.mxu0 %v1200
  %1296 = vmatmul.bf16.gmra.mxu0 %v1062
  %v1297 = vpop.f32.mrf.mxu0
  %v1298 = vadd.f32 %v1100, %v1297
  %v1299 = vpop.f32.mrf.mxu0
  %1300 = vdwg.mxu0
  %1301 = vmatpush.bf16.msra.mxu0 %v1229
  %1302 = vmatpush.bf16.msra.mxu0 %v1225
  %1303 = vmatpush.bf16.msra.mxu0 %v1221
  %1304 = vmatpush.bf16.msra.mxu0 %v1217
  %1305 = vmatpush.bf16.msra.mxu0 %v1213
  %1306 = vmatpush.bf16.msra.mxu0 %v1209
  %1307 = vmatpush.bf16.msra.mxu0 %v1205
  %1308 = vmatpush.bf16.msra.mxu0 %v1201
  %1309 = vmatmul.bf16.gmra.mxu0 %v1062
  %v1310 = vpop.f32.mrf.mxu0
  %v1311 = vadd.f32 %v1101, %v1310
  %v1312 = vpop.f32.mrf.mxu0
  %1313 = vdwg.mxu0
  %v1314 = vxor.u32 %v1272, 2147483648
  %v1315 = vmul.f32 %v1314, 1.442695
  %v1316 = vpow.pop %v1315
  %v1317 = vadd.f32 %v1316, 1.0
  %v1318 = vrcp.pop %v1317
  %v1319 = vmul.f32 %v1317, %v1318
  %v1320 = vsub.f32 1.0, %v1319
  %v1321 = vmul.f32 %v1318, %v1320
  %v1322 = vadd.f32 %v1318, %v1321
  %vm1323 = vweird.f32 %v1317
  %vm1324 = vweird.f32 %v1318
  %vm1325 = vmor %vm1323, %vm1324
  %v1326 = vsel %vm1325, %v1318, %v1322
  %v1327 = vand.u32 2147483647, %v1317
  %vm1328 = vcmp.eq.f32.partialorder %v1327, 8.507059e+37
  %v1329 = vand.u32 %v1317, 2147483648
  %v1330 = vor.u32 1.1754944e-38, %v1329
  %v1331 = vsel %vm1328, %v1330, %v1326
  %v1332 = vmul.f32 1.0, %v1331
  %v1333 = vxor.u32 %v1285, 2147483648
  %v1334 = vmul.f32 %v1333, 1.442695
  %v1335 = vpow.pop %v1334
  %v1336 = vadd.f32 %v1335, 1.0
  %v1337 = vrcp.pop %v1336
  %v1338 = vmul.f32 %v1336, %v1337
  %v1339 = vsub.f32 1.0, %v1338
  %v1340 = vmul.f32 %v1337, %v1339
  %v1341 = vadd.f32 %v1337, %v1340
  %vm1342 = vweird.f32 %v1336
  %vm1343 = vweird.f32 %v1337
  %vm1344 = vmor %vm1342, %vm1343
  %v1345 = vsel %vm1344, %v1337, %v1341
  %v1346 = vand.u32 2147483647, %v1336
  %vm1347 = vcmp.eq.f32.partialorder %v1346, 8.507059e+37
  %v1348 = vand.u32 %v1336, 2147483648
  %v1349 = vor.u32 1.1754944e-38, %v1348
  %v1350 = vsel %vm1347, %v1349, %v1345
  %v1351 = vmul.f32 1.0, %v1350
  %v1352 = vtanh.pop %v1298
  %v1353 = vxor.u32 %v1311, 2147483648
  %v1354 = vmul.f32 %v1353, 1.442695
  %v1355 = vpow.pop %v1354
  %v1356 = vadd.f32 %v1355, 1.0
  %v1357 = vrcp.pop %v1356
  %v1358 = vmul.f32 %v1356, %v1357
  %v1359 = vsub.f32 1.0, %v1358
  %v1360 = vmul.f32 %v1357, %v1359
  %v1361 = vadd.f32 %v1357, %v1360
  %vm1362 = vweird.f32 %v1356
  %vm1363 = vweird.f32 %v1357
  %vm1364 = vmor %vm1362, %vm1363
  %v1365 = vsel %vm1364, %v1357, %v1361
  %v1366 = vand.u32 2147483647, %v1356
  %vm1367 = vcmp.eq.f32.partialorder %v1366, 8.507059e+37
  %v1368 = vand.u32 %v1356, 2147483648
  %v1369 = vor.u32 1.1754944e-38, %v1368
  %v1370 = vsel %vm1367, %v1369, %v1365
  %v1371 = vmul.f32 1.0, %v1370
  %v1372 = vmul.f32 %v1351, %v1048
  %v1373 = vmul.f32 %v1332, %v1352
  %v1374 = vadd.f32 %v1372, %v1373
  %v1375 = vtanh.pop %v1374
  %v1376 = vmul.f32 %v1371, %v1375
  %s1377 = scalar_lea.vmem %s6, 16
  %1378 = vst [vmem:[%s1377] sm:$0xff] %v1376
  %v1379 = vmax.f32 %v1053, %v1376
  %v1380 = vsub.f32 %v1053, %v1379
  %v1381 = vmul.f32 %v1380, 1.442695
  %v1382 = vpow.pop %v1381
  %v1383 = vmul.f32 %v1061, %v1382
  %v1384 = vsub.f32 %v1376, %v1379
  %v1385 = vmul.f32 %v1384, 1.442695
  %v1386 = vpow.pop %v1385
  %v1387 = vadd.f32 %v1383, %v1386
  %v1388 = vpack.c.bf16 %v1376, %v1376
  %v1389 = vld [vmem:[%s4] sm:$0xff]
  %v1390 = vld [vmem:[%s4 + $0x8] sm:$0xff]
  %v1391 = vld [vmem:[%s4 + $0x10] sm:$0xff]
  %v1392 = vld [vmem:[%s4 + $0x18] sm:$0xff]
  %v1393 = vld [vmem:[%s4 + $0x20] sm:$0xff]
  %v1394 = vld [vmem:[%s4 + $0x28] sm:$0xff]
  %v1395 = vld [vmem:[%s4 + $0x30] sm:$0xff]
  %v1396 = vld [vmem:[%s4 + $0x38] sm:$0xff]
  %v1397 = vld [vmem:[%s4 + $0x40] sm:$0xff]
  %v1398 = vld [vmem:[%s4 + $0x48] sm:$0xff]
  %v1399 = vld [vmem:[%s4 + $0x50] sm:$0xff]
  %v1400 = vld [vmem:[%s4 + $0x58] sm:$0xff]
  %v1401 = vld [vmem:[%s4 + $0x60] sm:$0xff]
  %v1402 = vld [vmem:[%s4 + $0x68] sm:$0xff]
  %v1403 = vld [vmem:[%s4 + $0x70] sm:$0xff]
  %v1404 = vld [vmem:[%s4 + $0x78] sm:$0xff]
  %v1405 = vld [vmem:[%s4 + $0x80] sm:$0xff]
  %v1406 = vld [vmem:[%s4 + $0x88] sm:$0xff]
  %v1407 = vld [vmem:[%s4 + $0x90] sm:$0xff]
  %v1408 = vld [vmem:[%s4 + $0x98] sm:$0xff]
  %v1409 = vld [vmem:[%s4 + $0xa0] sm:$0xff]
  %v1410 = vld [vmem:[%s4 + $0xa8] sm:$0xff]
  %v1411 = vld [vmem:[%s4 + $0xb0] sm:$0xff]
  %v1412 = vld [vmem:[%s4 + $0xb8] sm:$0xff]
  %v1413 = vld [vmem:[%s4 + $0xc0] sm:$0xff]
  %v1414 = vld [vmem:[%s4 + $0xc8] sm:$0xff]
  %v1415 = vld [vmem:[%s4 + $0xd0] sm:$0xff]
  %v1416 = vld [vmem:[%s4 + $0xd8] sm:$0xff]
  %v1417 = vld [vmem:[%s4 + $0xe0] sm:$0xff]
  %v1418 = vld [vmem:[%s4 + $0xe8] sm:$0xff]
  %v1419 = vld [vmem:[%s4 + $0xf0] sm:$0xff]
  %v1420 = vld [vmem:[%s4 + $0xf8] sm:$0xff]
  %s1421 = scalar_lea.vmem [#allocation2], 48
  %v1422 = vld [vmem:[%s1421] sm:$0xff]
  %v1423 = vld [vmem:[%s1421 + $0x8] sm:$0xff]
  %v1424 = vunpack.c.l.bf16 %v1422
  %v1425 = vunpack.c.h.bf16 %v1422
  %v1426 = vunpack.c.l.bf16 %v1423
  %v1427 = vunpack.c.h.bf16 %v1423
  %v1460 = vunpack.c.l.b16 %v1389
  %v1461 = vunpack.c.h.b16 %v1389
  %v1462 = vunpack.c.l.b16 %v1390
  %v1463 = vunpack.c.h.b16 %v1390
  %v1464 = vunpack.c.l.b16 %v1391
  %v1465 = vunpack.c.h.b16 %v1391
  %v1466 = vunpack.c.l.b16 %v1392
  %v1467 = vunpack.c.h.b16 %v1392
  %v1468 = vunpack.c.l.b16 %v1393
  %v1469 = vunpack.c.h.b16 %v1393
  %v1470 = vunpack.c.l.b16 %v1394
  %v1471 = vunpack.c.h.b16 %v1394
  %v1472 = vunpack.c.l.b16 %v1395
  %v1473 = vunpack.c.h.b16 %v1395
  %v1474 = vunpack.c.l.b16 %v1396
  %v1475 = vunpack.c.h.b16 %v1396
  %v1476 = vunpack.c.l.b16 %v1397
  %v1477 = vunpack.c.h.b16 %v1397
  %v1478 = vunpack.c.l.b16 %v1398
  %v1479 = vunpack.c.h.b16 %v1398
  %v1480 = vunpack.c.l.b16 %v1399
  %v1481 = vunpack.c.h.b16 %v1399
  %v1482 = vunpack.c.l.b16 %v1400
  %v1483 = vunpack.c.h.b16 %v1400
  %v1484 = vunpack.c.l.b16 %v1401
  %v1485 = vunpack.c.h.b16 %v1401
  %v1486 = vunpack.c.l.b16 %v1402
  %v1487 = vunpack.c.h.b16 %v1402
  %v1488 = vunpack.c.l.b16 %v1403
  %v1489 = vunpack.c.h.b16 %v1403
  %v1490 = vunpack.c.l.b16 %v1404
  %v1491 = vunpack.c.h.b16 %v1404
  %v1492 = vunpack.c.l.b16 %v1405
  %v1493 = vunpack.c.h.b16 %v1405
  %v1494 = vunpack.c.l.b16 %v1406
  %v1495 = vunpack.c.h.b16 %v1406
  %v1496 = vunpack.c.l.b16 %v1407
  %v1497 = vunpack.c.h.b16 %v1407
  %v1498 = vunpack.c.l.b16 %v1408
  %v1499 = vunpack.c.h.b16 %v1408
  %v1500 = vunpack.c.l.b16 %v1409
  %v1501 = vunpack.c.h.b16 %v1409
  %v1502 = vunpack.c.l.b16 %v1410
  %v1503 = vunpack.c.h.b16 %v1410
  %v1504 = vunpack.c.l.b16 %v1411
  %v1505 = vunpack.c.h.b16 %v1411
  %v1506 = vunpack.c.l.b16 %v1412
  %v1507 = vunpack.c.h.b16 %v1412
  %v1508 = vunpack.c.l.b16 %v1413
  %v1509 = vunpack.c.h.b16 %v1413
  %v1510 = vunpack.c.l.b16 %v1414
  %v1511 = vunpack.c.h.b16 %v1414
  %v1512 = vunpack.c.l.b16 %v1415
  %v1513 = vunpack.c.h.b16 %v1415
  %v1514 = vunpack.c.l.b16 %v1416
  %v1515 = vunpack.c.h.b16 %v1416
  %v1516 = vunpack.c.l.b16 %v1417
  %v1517 = vunpack.c.h.b16 %v1417
  %v1518 = vunpack.c.l.b16 %v1418
  %v1519 = vunpack.c.h.b16 %v1418
  %v1520 = vunpack.c.l.b16 %v1419
  %v1521 = vunpack.c.h.b16 %v1419
  %v1522 = vunpack.c.l.b16 %v1420
  %v1523 = vunpack.c.h.b16 %v1420
  %v1524 = vpack.c.b16 %v1464, %v1460
  %v1525 = vpack.c.b16 %v1465, %v1461
  %v1526 = vpack.c.b16 %v1466, %v1462
  %v1527 = vpack.c.b16 %v1467, %v1463
  %v1528 = vpack.c.b16 %v1472, %v1468
  %v1529 = vpack.c.b16 %v1473, %v1469
  %v1530 = vpack.c.b16 %v1474, %v1470
  %v1531 = vpack.c.b16 %v1475, %v1471
  %v1532 = vpack.c.b16 %v1480, %v1476
  %v1533 = vpack.c.b16 %v1481, %v1477
  %v1534 = vpack.c.b16 %v1482, %v1478
  %v1535 = vpack.c.b16 %v1483, %v1479
  %v1536 = vpack.c.b16 %v1488, %v1484
  %v1537 = vpack.c.b16 %v1489, %v1485
  %v1538 = vpack.c.b16 %v1490, %v1486
  %v1539 = vpack.c.b16 %v1491, %v1487
  %v1540 = vpack.c.b16 %v1496, %v1492
  %v1541 = vpack.c.b16 %v1497, %v1493
  %v1542 = vpack.c.b16 %v1498, %v1494
  %v1543 = vpack.c.b16 %v1499, %v1495
  %v1544 = vpack.c.b16 %v1504, %v1500
  %v1545 = vpack.c.b16 %v1505, %v1501
  %v1546 = vpack.c.b16 %v1506, %v1502
  %v1547 = vpack.c.b16 %v1507, %v1503
  %v1548 = vpack.c.b16 %v1512, %v1508
  %v1549 = vpack.c.b16 %v1513, %v1509
  %v1550 = vpack.c.b16 %v1514, %v1510
  %v1551 = vpack.c.b16 %v1515, %v1511
  %v1552 = vpack.c.b16 %v1520, %v1516
  %v1553 = vpack.c.b16 %v1521, %v1517
  %v1554 = vpack.c.b16 %v1522, %v1518
  %v1555 = vpack.c.b16 %v1523, %v1519
  %1588 = vmatpush.bf16.msra.mxu0 %v1552
  %1589 = vmatpush.bf16.msra.mxu0 %v1548
  %1590 = vmatpush.bf16.msra.mxu0 %v1544
  %1591 = vmatpush.bf16.msra.mxu0 %v1540
  %1592 = vmatpush.bf16.msra.mxu0 %v1536
  %1593 = vmatpush.bf16.msra.mxu0 %v1532
  %1594 = vmatpush.bf16.msra.mxu0 %v1528
  %1595 = vmatpush.bf16.msra.mxu0 %v1524
  %1596 = vmatmul.bf16.gmra.mxu0 %v1388
  %v1597 = vpop.f32.mrf.mxu0
  %v1598 = vadd.f32 %v1424, %v1597
  %v1599 = vpop.f32.mrf.mxu0
  %1600 = vdwg.mxu0
  %1601 = vmatpush.bf16.msra.mxu0 %v1553
  %1602 = vmatpush.bf16.msra.mxu0 %v1549
  %1603 = vmatpush.bf16.msra.mxu0 %v1545
  %1604 = vmatpush.bf16.msra.mxu0 %v1541
  %1605 = vmatpush.bf16.msra.mxu0 %v1537
  %1606 = vmatpush.bf16.msra.mxu0 %v1533
  %1607 = vmatpush.bf16.msra.mxu0 %v1529
  %1608 = vmatpush.bf16.msra.mxu0 %v1525
  %1609 = vmatmul.bf16.gmra.mxu0 %v1388
  %v1610 = vpop.f32.mrf.mxu0
  %v1611 = vadd.f32 %v1425, %v1610
  %v1612 = vpop.f32.mrf.mxu0
  %1613 = vdwg.mxu0
  %1614 = vmatpush.bf16.msra.mxu0 %v1554
  %1615 = vmatpush.bf16.msra.mxu0 %v1550
  %1616 = vmatpush.bf16.msra.mxu0 %v1546
  %1617 = vmatpush.bf16.msra.mxu0 %v1542
  %1618 = vmatpush.bf16.msra.mxu0 %v1538
  %1619 = vmatpush.bf16.msra.mxu0 %v1534
  %1620 = vmatpush.bf16.msra.mxu0 %v1530
  %1621 = vmatpush.bf16.msra.mxu0 %v1526
  %1622 = vmatmul.bf16.gmra.mxu0 %v1388
  %v1623 = vpop.f32.mrf.mxu0
  %v1624 = vadd.f32 %v1426, %v1623
  %v1625 = vpop.f32.mrf.mxu0
  %1626 = vdwg.mxu0
  %1627 = vmatpush.bf16.msra.mxu0 %v1555
  %1628 = vmatpush.bf16.msra.mxu0 %v1551
  %1629 = vmatpush.bf16.msra.mxu0 %v1547
  %1630 = vmatpush.bf16.msra.mxu0 %v1543
  %1631 = vmatpush.bf16.msra.mxu0 %v1539
  %1632 = vmatpush.bf16.msra.mxu0 %v1535
  %1633 = vmatpush.bf16.msra.mxu0 %v1531
  %1634 = vmatpush.bf16.msra.mxu0 %v1527
  %1635 = vmatmul.bf16.gmra.mxu0 %v1388
  %v1636 = vpop.f32.mrf.mxu0
  %v1637 = vadd.f32 %v1427, %v1636
  %v1638 = vpop.f32.mrf.mxu0
  %1639 = vdwg.mxu0
  %v1640 = vxor.u32 %v1598, 2147483648
  %v1641 = vmul.f32 %v1640, 1.442695
  %v1642 = vpow.pop %v1641
  %v1643 = vadd.f32 %v1642, 1.0
  %v1644 = vrcp.pop %v1643
  %v1645 = vmul.f32 %v1643, %v1644
  %v1646 = vsub.f32 1.0, %v1645
  %v1647 = vmul.f32 %v1644, %v1646
  %v1648 = vadd.f32 %v1644, %v1647
  %vm1649 = vweird.f32 %v1643
  %vm1650 = vweird.f32 %v1644
  %vm1651 = vmor %vm1649, %vm1650
  %v1652 = vsel %vm1651, %v1644, %v1648
  %v1653 = vand.u32 2147483647, %v1643
  %vm1654 = vcmp.eq.f32.partialorder %v1653, 8.507059e+37
  %v1655 = vand.u32 %v1643, 2147483648
  %v1656 = vor.u32 1.1754944e-38, %v1655
  %v1657 = vsel %vm1654, %v1656, %v1652
  %v1658 = vmul.f32 1.0, %v1657
  %v1659 = vxor.u32 %v1611, 2147483648
  %v1660 = vmul.f32 %v1659, 1.442695
  %v1661 = vpow.pop %v1660
  %v1662 = vadd.f32 %v1661, 1.0
  %v1663 = vrcp.pop %v1662
  %v1664 = vmul.f32 %v1662, %v1663
  %v1665 = vsub.f32 1.0, %v1664
  %v1666 = vmul.f32 %v1663, %v1665
  %v1667 = vadd.f32 %v1663, %v1666
  %vm1668 = vweird.f32 %v1662
  %vm1669 = vweird.f32 %v1663
  %vm1670 = vmor %vm1668, %vm1669
  %v1671 = vsel %vm1670, %v1663, %v1667
  %v1672 = vand.u32 2147483647, %v1662
  %vm1673 = vcmp.eq.f32.partialorder %v1672, 8.507059e+37
  %v1674 = vand.u32 %v1662, 2147483648
  %v1675 = vor.u32 1.1754944e-38, %v1674
  %v1676 = vsel %vm1673, %v1675, %v1671
  %v1677 = vmul.f32 1.0, %v1676
  %v1678 = vtanh.pop %v1624
  %v1679 = vxor.u32 %v1637, 2147483648
  %v1680 = vmul.f32 %v1679, 1.442695
  %v1681 = vpow.pop %v1680
  %v1682 = vadd.f32 %v1681, 1.0
  %v1683 = vrcp.pop %v1682
  %v1684 = vmul.f32 %v1682, %v1683
  %v1685 = vsub.f32 1.0, %v1684
  %v1686 = vmul.f32 %v1683, %v1685
  %v1687 = vadd.f32 %v1683, %v1686
  %vm1688 = vweird.f32 %v1682
  %vm1689 = vweird.f32 %v1683
  %vm1690 = vmor %vm1688, %vm1689
  %v1691 = vsel %vm1690, %v1683, %v1687
  %v1692 = vand.u32 2147483647, %v1682
  %vm1693 = vcmp.eq.f32.partialorder %v1692, 8.507059e+37
  %v1694 = vand.u32 %v1682, 2147483648
  %v1695 = vor.u32 1.1754944e-38, %v1694
  %v1696 = vsel %vm1693, %v1695, %v1691
  %v1697 = vmul.f32 1.0, %v1696
  %v1698 = vmul.f32 %v1677, %v1374
  %v1699 = vmul.f32 %v1658, %v1678
  %v1700 = vadd.f32 %v1698, %v1699
  %v1701 = vtanh.pop %v1700
  %v1702 = vmul.f32 %v1697, %v1701
  %s1703 = scalar_lea.vmem %s6, 24
  %1704 = vst [vmem:[%s1703] sm:$0xff] %v1702
  %v1705 = vmax.f32 %v1379, %v1702
  %v1706 = vsub.f32 %v1379, %v1705
  %v1707 = vmul.f32 %v1706, 1.442695
  %v1708 = vpow.pop %v1707
  %v1709 = vmul.f32 %v1387, %v1708
  %v1710 = vsub.f32 %v1702, %v1705
  %v1711 = vmul.f32 %v1710, 1.442695
  %v1712 = vpow.pop %v1711
  %v1713 = vadd.f32 %v1709, %v1712
  %v1714 = vpack.c.bf16 %v1702, %v1702
  %v1715 = vld [vmem:[%s4] sm:$0xff]
  %v1716 = vld [vmem:[%s4 + $0x8] sm:$0xff]
  %v1717 = vld [vmem:[%s4 + $0x10] sm:$0xff]
  %v1718 = vld [vmem:[%s4 + $0x18] sm:$0xff]
  %v1719 = vld [vmem:[%s4 + $0x20] sm:$0xff]
  %v1720 = vld [vmem:[%s4 + $0x28] sm:$0xff]
  %v1721 = vld [vmem:[%s4 + $0x30] sm:$0xff]
  %v1722 = vld [vmem:[%s4 + $0x38] sm:$0xff]
  %v1723 = vld [vmem:[%s4 + $0x40] sm:$0xff]
  %v1724 = vld [vmem:[%s4 + $0x48] sm:$0xff]
  %v1725 = vld [vmem:[%s4 + $0x50] sm:$0xff]
  %v1726 = vld [vmem:[%s4 + $0x58] sm:$0xff]
  %v1727 = vld [vmem:[%s4 + $0x60] sm:$0xff]
  %v1728 = vld [vmem:[%s4 + $0x68] sm:$0xff]
  %v1729 = vld [vmem:[%s4 + $0x70] sm:$0xff]
  %v1730 = vld [vmem:[%s4 + $0x78] sm:$0xff]
  %v1731 = vld [vmem:[%s4 + $0x80] sm:$0xff]
  %v1732 = vld [vmem:[%s4 + $0x88] sm:$0xff]
  %v1733 = vld [vmem:[%s4 + $0x90] sm:$0xff]
  %v1734 = vld [vmem:[%s4 + $0x98] sm:$0xff]
  %v1735 = vld [vmem:[%s4 + $0xa0] sm:$0xff]
  %v1736 = vld [vmem:[%s4 + $0xa8] sm:$0xff]
  %v1737 = vld [vmem:[%s4 + $0xb0] sm:$0xff]
  %v1738 = vld [vmem:[%s4 + $0xb8] sm:$0xff]
  %v1739 = vld [vmem:[%s4 + $0xc0] sm:$0xff]
  %v1740 = vld [vmem:[%s4 + $0xc8] sm:$0xff]
  %v1741 = vld [vmem:[%s4 + $0xd0] sm:$0xff]
  %v1742 = vld [vmem:[%s4 + $0xd8] sm:$0xff]
  %v1743 = vld [vmem:[%s4 + $0xe0] sm:$0xff]
  %v1744 = vld [vmem:[%s4 + $0xe8] sm:$0xff]
  %v1745 = vld [vmem:[%s4 + $0xf0] sm:$0xff]
  %v1746 = vld [vmem:[%s4 + $0xf8] sm:$0xff]
  %s1747 = scalar_lea.vmem [#allocation2], 64
  %v1748 = vld [vmem:[%s1747] sm:$0xff]
  %v1749 = vld [vmem:[%s1747 + $0x8] sm:$0xff]
  %v1750 = vunpack.c.l.bf16 %v1748
  %v1751 = vunpack.c.h.bf16 %v1748
  %v1752 = vunpack.c.l.bf16 %v1749
  %v1753 = vunpack.c.h.bf16 %v1749
  %v1786 = vunpack.c.l.b16 %v1715
  %v1787 = vunpack.c.h.b16 %v1715
  %v1788 = vunpack.c.l.b16 %v1716
  %v1789 = vunpack.c.h.b16 %v1716
  %v1790 = vunpack.c.l.b16 %v1717
  %v1791 = vunpack.c.h.b16 %v1717
  %v1792 = vunpack.c.l.b16 %v1718
  %v1793 = vunpack.c.h.b16 %v1718
  %v1794 = vunpack.c.l.b16 %v1719
  %v1795 = vunpack.c.h.b16 %v1719
  %v1796 = vunpack.c.l.b16 %v1720
  %v1797 = vunpack.c.h.b16 %v1720
  %v1798 = vunpack.c.l.b16 %v1721
  %v1799 = vunpack.c.h.b16 %v1721
  %v1800 = vunpack.c.l.b16 %v1722
  %v1801 = vunpack.c.h.b16 %v1722
  %v1802 = vunpack.c.l.b16 %v1723
  %v1803 = vunpack.c.h.b16 %v1723
  %v1804 = vunpack.c.l.b16 %v1724
  %v1805 = vunpack.c.h.b16 %v1724
  %v1806 = vunpack.c.l.b16 %v1725
  %v1807 = vunpack.c.h.b16 %v1725
  %v1808 = vunpack.c.l.b16 %v1726
  %v1809 = vunpack.c.h.b16 %v1726
  %v1810 = vunpack.c.l.b16 %v1727
  %v1811 = vunpack.c.h.b16 %v1727
  %v1812 = vunpack.c.l.b16 %v1728
  %v1813 = vunpack.c.h.b16 %v1728
  %v1814 = vunpack.c.l.b16 %v1729
  %v1815 = vunpack.c.h.b16 %v1729
  %v1816 = vunpack.c.l.b16 %v1730
  %v1817 = vunpack.c.h.b16 %v1730
  %v1818 = vunpack.c.l.b16 %v1731
  %v1819 = vunpack.c.h.b16 %v1731
  %v1820 = vunpack.c.l.b16 %v1732
  %v1821 = vunpack.c.h.b16 %v1732
  %v1822 = vunpack.c.l.b16 %v1733
  %v1823 = vunpack.c.h.b16 %v1733
  %v1824 = vunpack.c.l.b16 %v1734
  %v1825 = vunpack.c.h.b16 %v1734
  %v1826 = vunpack.c.l.b16 %v1735
  %v1827 = vunpack.c.h.b16 %v1735
  %v1828 = vunpack.c.l.b16 %v1736
  %v1829 = vunpack.c.h.b16 %v1736
  %v1830 = vunpack.c.l.b16 %v1737
  %v1831 = vunpack.c.h.b16 %v1737
  %v1832 = vunpack.c.l.b16 %v1738
  %v1833 = vunpack.c.h.b16 %v1738
  %v1834 = vunpack.c.l.b16 %v1739
  %v1835 = vunpack.c.h.b16 %v1739
  %v1836 = vunpack.c.l.b16 %v1740
  %v1837 = vunpack.c.h.b16 %v1740
  %v1838 = vunpack.c.l.b16 %v1741
  %v1839 = vunpack.c.h.b16 %v1741
  %v1840 = vunpack.c.l.b16 %v1742
  %v1841 = vunpack.c.h.b16 %v1742
  %v1842 = vunpack.c.l.b16 %v1743
  %v1843 = vunpack.c.h.b16 %v1743
  %v1844 = vunpack.c.l.b16 %v1744
  %v1845 = vunpack.c.h.b16 %v1744
  %v1846 = vunpack.c.l.b16 %v1745
  %v1847 = vunpack.c.h.b16 %v1745
  %v1848 = vunpack.c.l.b16 %v1746
  %v1849 = vunpack.c.h.b16 %v1746
  %v1850 = vpack.c.b16 %v1790, %v1786
  %v1851 = vpack.c.b16 %v1791, %v1787
  %v1852 = vpack.c.b16 %v1792, %v1788
  %v1853 = vpack.c.b16 %v1793, %v1789
  %v1854 = vpack.c.b16 %v1798, %v1794
  %v1855 = vpack.c.b16 %v1799, %v1795
  %v1856 = vpack.c.b16 %v1800, %v1796
  %v1857 = vpack.c.b16 %v1801, %v1797
  %v1858 = vpack.c.b16 %v1806, %v1802
  %v1859 = vpack.c.b16 %v1807, %v1803
  %v1860 = vpack.c.b16 %v1808, %v1804
  %v1861 = vpack.c.b16 %v1809, %v1805
  %v1862 = vpack.c.b16 %v1814, %v1810
  %v1863 = vpack.c.b16 %v1815, %v1811
  %v1864 = vpack.c.b16 %v1816, %v1812
  %v1865 = vpack.c.b16 %v1817, %v1813
  %v1866 = vpack.c.b16 %v1822, %v1818
  %v1867 = vpack.c.b16 %v1823, %v1819
  %v1868 = vpack.c.b16 %v1824, %v1820
  %v1869 = vpack.c.b16 %v1825, %v1821
  %v1870 = vpack.c.b16 %v1830, %v1826
  %v1871 = vpack.c.b16 %v1831, %v1827
  %v1872 = vpack.c.b16 %v1832, %v1828
  %v1873 = vpack.c.b16 %v1833, %v1829
  %v1874 = vpack.c.b16 %v1838, %v1834
  %v1875 = vpack.c.b16 %v1839, %v1835
  %v1876 = vpack.c.b16 %v1840, %v1836
  %v1877 = vpack.c.b16 %v1841, %v1837
  %v1878 = vpack.c.b16 %v1846, %v1842
  %v1879 = vpack.c.b16 %v1847, %v1843
  %v1880 = vpack.c.b16 %v1848, %v1844
  %v1881 = vpack.c.b16 %v1849, %v1845
  %1914 = vmatpush.bf16.msra.mxu0 %v1878
  %1915 = vmatpush.bf16.msra.mxu0 %v1874
  %1916 = vmatpush.bf16.msra.mxu0 %v1870
  %1917 = vmatpush.bf16.msra.mxu0 %v1866
  %1918 = vmatpush.bf16.msra.mxu0 %v1862
  %1919 = vmatpush.bf16.msra.mxu0 %v1858
  %1920 = vmatpush.bf16.msra.mxu0 %v1854
  %1921 = vmatpush.bf16.msra.mxu0 %v1850
  %1922 = vmatmul.bf16.gmra.mxu0 %v1714
  %v1923 = vpop.f32.mrf.mxu0
  %v1924 = vadd.f32 %v1750, %v1923
  %v1925 = vpop.f32.mrf.mxu0
  %1926 = vdwg.mxu0
  %1927 = vmatpush.bf16.msra.mxu0 %v1879
  %1928 = vmatpush.bf16.msra.mxu0 %v1875
  %1929 = vmatpush.bf16.msra.mxu0 %v1871
  %1930 = vmatpush.bf16.msra.mxu0 %v1867
  %1931 = vmatpush.bf16.msra.mxu0 %v1863
  %1932 = vmatpush.bf16.msra.mxu0 %v1859
  %1933 = vmatpush.bf16.msra.mxu0 %v1855
  %1934 = vmatpush.bf16.msra.mxu0 %v1851
  %1935 = vmatmul.bf16.gmra.mxu0 %v1714
  %v1936 = vpop.f32.mrf.mxu0
  %v1937 = vadd.f32 %v1751, %v1936
  %v1938 = vpop.f32.mrf.mxu0
  %1939 = vdwg.mxu0
  %1940 = vmatpush.bf16.msra.mxu0 %v1880
  %1941 = vmatpush.bf16.msra.mxu0 %v1876
  %1942 = vmatpush.bf16.msra.mxu0 %v1872
  %1943 = vmatpush.bf16.msra.mxu0 %v1868
  %1944 = vmatpush.bf16.msra.mxu0 %v1864
  %1945 = vmatpush.bf16.msra.mxu0 %v1860
  %1946 = vmatpush.bf16.msra.mxu0 %v1856
  %1947 = vmatpush.bf16.msra.mxu0 %v1852
  %1948 = vmatmul.bf16.gmra.mxu0 %v1714
  %v1949 = vpop.f32.mrf.mxu0
  %v1950 = vadd.f32 %v1752, %v1949
  %v1951 = vpop.f32.mrf.mxu0
  %1952 = vdwg.mxu0
  %1953 = vmatpush.bf16.msra.mxu0 %v1881
  %1954 = vmatpush.bf16.msra.mxu0 %v1877
  %1955 = vmatpush.bf16.msra.mxu0 %v1873
  %1956 = vmatpush.bf16.msra.mxu0 %v1869
  %1957 = vmatpush.bf16.msra.mxu0 %v1865
  %1958 = vmatpush.bf16.msra.mxu0 %v1861
  %1959 = vmatpush.bf16.msra.mxu0 %v1857
  %1960 = vmatpush.bf16.msra.mxu0 %v1853
  %1961 = vmatmul.bf16.gmra.mxu0 %v1714
  %v1962 = vpop.f32.mrf.mxu0
  %v1963 = vadd.f32 %v1753, %v1962
  %v1964 = vpop.f32.mrf.mxu0
  %1965 = vdwg.mxu0
  %v1966 = vxor.u32 %v1924, 2147483648
  %v1967 = vmul.f32 %v1966, 1.442695
  %v1968 = vpow.pop %v1967
  %v1969 = vadd.f32 %v1968, 1.0
  %v1970 = vrcp.pop %v1969
  %v1971 = vmul.f32 %v1969, %v1970
  %v1972 = vsub.f32 1.0, %v1971
  %v1973 = vmul.f32 %v1970, %v1972
  %v1974 = vadd.f32 %v1970, %v1973
  %vm1975 = vweird.f32 %v1969
  %vm1976 = vweird.f32 %v1970
  %vm1977 = vmor %vm1975, %vm1976
  %v1978 = vsel %vm1977, %v1970, %v1974
  %v1979 = vand.u32 2147483647, %v1969
  %vm1980 = vcmp.eq.f32.partialorder %v1979, 8.507059e+37
  %v1981 = vand.u32 %v1969, 2147483648
  %v1982 = vor.u32 1.1754944e-38, %v1981
  %v1983 = vsel %vm1980, %v1982, %v1978
  %v1984 = vmul.f32 1.0, %v1983
  %v1985 = vxor.u32 %v1937, 2147483648
  %v1986 = vmul.f32 %v1985, 1.442695
  %v1987 = vpow.pop %v1986
  %v1988 = vadd.f32 %v1987, 1.0
  %v1989 = vrcp.pop %v1988
  %v1990 = vmul.f32 %v1988, %v1989
  %v1991 = vsub.f32 1.0, %v1990
  %v1992 = vmul.f32 %v1989, %v1991
  %v1993 = vadd.f32 %v1989, %v1992
  %vm1994 = vweird.f32 %v1988
  %vm1995 = vweird.f32 %v1989
  %vm1996 = vmor %vm1994, %vm1995
  %v1997 = vsel %vm1996, %v1989, %v1993
  %v1998 = vand.u32 2147483647, %v1988
  %vm1999 = vcmp.eq.f32.partialorder %v1998, 8.507059e+37
  %v2000 = vand.u32 %v1988, 2147483648
  %v2001 = vor.u32 1.1754944e-38, %v2000
  %v2002 = vsel %vm1999, %v2001, %v1997
  %v2003 = vmul.f32 1.0, %v2002
  %v2004 = vtanh.pop %v1950
  %v2005 = vxor.u32 %v1963, 2147483648
  %v2006 = vmul.f32 %v2005, 1.442695
  %v2007 = vpow.pop %v2006
  %v2008 = vadd.f32 %v2007, 1.0
  %v2009 = vrcp.pop %v2008
  %v2010 = vmul.f32 %v2008, %v2009
  %v2011 = vsub.f32 1.0, %v2010
  %v2012 = vmul.f32 %v2009, %v2011
  %v2013 = vadd.f32 %v2009, %v2012
  %vm2014 = vweird.f32 %v2008
  %vm2015 = vweird.f32 %v2009
  %vm2016 = vmor %vm2014, %vm2015
  %v2017 = vsel %vm2016, %v2009, %v2013
  %v2018 = vand.u32 2147483647, %v2008
  %vm2019 = vcmp.eq.f32.partialorder %v2018, 8.507059e+37
  %v2020 = vand.u32 %v2008, 2147483648
  %v2021 = vor.u32 1.1754944e-38, %v2020
  %v2022 = vsel %vm2019, %v2021, %v2017
  %v2023 = vmul.f32 1.0, %v2022
  %v2024 = vmul.f32 %v2003, %v1700
  %v2025 = vmul.f32 %v1984, %v2004
  %v2026 = vadd.f32 %v2024, %v2025
  %v2027 = vtanh.pop %v2026
  %v2028 = vmul.f32 %v2023, %v2027
  %s2029 = scalar_lea.vmem %s6, 32
  %2030 = vst [vmem:[%s2029] sm:$0xff] %v2028
  %v2031 = vmax.f32 %v1705, %v2028
  %v2032 = vsub.f32 %v1705, %v2031
  %v2033 = vmul.f32 %v2032, 1.442695
  %v2034 = vpow.pop %v2033
  %v2035 = vmul.f32 %v1713, %v2034
  %v2036 = vsub.f32 %v2028, %v2031
  %v2037 = vmul.f32 %v2036, 1.442695
  %v2038 = vpow.pop %v2037
  %v2039 = vadd.f32 %v2035, %v2038
  %v2040 = vpack.c.bf16 %v2028, %v2028
  %v2041 = vld [vmem:[%s4] sm:$0xff]
  %v2042 = vld [vmem:[%s4 + $0x8] sm:$0xff]
  %v2043 = vld [vmem:[%s4 + $0x10] sm:$0xff]
  %v2044 = vld [vmem:[%s4 + $0x18] sm:$0xff]
  %v2045 = vld [vmem:[%s4 + $0x20] sm:$0xff]
  %v2046 = vld [vmem:[%s4 + $0x28] sm:$0xff]
  %v2047 = vld [vmem:[%s4 + $0x30] sm:$0xff]
  %v2048 = vld [vmem:[%s4 + $0x38] sm:$0xff]
  %v2049 = vld [vmem:[%s4 + $0x40] sm:$0xff]
  %v2050 = vld [vmem:[%s4 + $0x48] sm:$0xff]
  %v2051 = vld [vmem:[%s4 + $0x50] sm:$0xff]
  %v2052 = vld [vmem:[%s4 + $0x58] sm:$0xff]
  %v2053 = vld [vmem:[%s4 + $0x60] sm:$0xff]
  %v2054 = vld [vmem:[%s4 + $0x68] sm:$0xff]
  %v2055 = vld [vmem:[%s4 + $0x70] sm:$0xff]
  %v2056 = vld [vmem:[%s4 + $0x78] sm:$0xff]
  %v2057 = vld [vmem:[%s4 + $0x80] sm:$0xff]
  %v2058 = vld [vmem:[%s4 + $0x88] sm:$0xff]
  %v2059 = vld [vmem:[%s4 + $0x90] sm:$0xff]
  %v2060 = vld [vmem:[%s4 + $0x98] sm:$0xff]
  %v2061 = vld [vmem:[%s4 + $0xa0] sm:$0xff]
  %v2062 = vld [vmem:[%s4 + $0xa8] sm:$0xff]
  %v2063 = vld [vmem:[%s4 + $0xb0] sm:$0xff]
  %v2064 = vld [vmem:[%s4 + $0xb8] sm:$0xff]
  %v2065 = vld [vmem:[%s4 + $0xc0] sm:$0xff]
  %v2066 = vld [vmem:[%s4 + $0xc8] sm:$0xff]
  %v2067 = vld [vmem:[%s4 + $0xd0] sm:$0xff]
  %v2068 = vld [vmem:[%s4 + $0xd8] sm:$0xff]
  %v2069 = vld [vmem:[%s4 + $0xe0] sm:$0xff]
  %v2070 = vld [vmem:[%s4 + $0xe8] sm:$0xff]
  %v2071 = vld [vmem:[%s4 + $0xf0] sm:$0xff]
  %v2072 = vld [vmem:[%s4 + $0xf8] sm:$0xff]
  %s2073 = scalar_lea.vmem [#allocation2], 80
  %v2074 = vld [vmem:[%s2073] sm:$0xff]
  %v2075 = vld [vmem:[%s2073 + $0x8] sm:$0xff]
  %v2076 = vunpack.c.l.bf16 %v2074
  %v2077 = vunpack.c.h.bf16 %v2074
  %v2078 = vunpack.c.l.bf16 %v2075
  %v2079 = vunpack.c.h.bf16 %v2075
  %v2112 = vunpack.c.l.b16 %v2041
  %v2113 = vunpack.c.h.b16 %v2041
  %v2114 = vunpack.c.l.b16 %v2042
  %v2115 = vunpack.c.h.b16 %v2042
  %v2116 = vunpack.c.l.b16 %v2043
  %v2117 = vunpack.c.h.b16 %v2043
  %v2118 = vunpack.c.l.b16 %v2044
  %v2119 = vunpack.c.h.b16 %v2044
  %v2120 = vunpack.c.l.b16 %v2045
  %v2121 = vunpack.c.h.b16 %v2045
  %v2122 = vunpack.c.l.b16 %v2046
  %v2123 = vunpack.c.h.b16 %v2046
  %v2124 = vunpack.c.l.b16 %v2047
  %v2125 = vunpack.c.h.b16 %v2047
  %v2126 = vunpack.c.l.b16 %v2048
  %v2127 = vunpack.c.h.b16 %v2048
  %v2128 = vunpack.c.l.b16 %v2049
  %v2129 = vunpack.c.h.b16 %v2049
  %v2130 = vunpack.c.l.b16 %v2050
  %v2131 = vunpack.c.h.b16 %v2050
  %v2132 = vunpack.c.l.b16 %v2051
  %v2133 = vunpack.c.h.b16 %v2051
  %v2134 = vunpack.c.l.b16 %v2052
  %v2135 = vunpack.c.h.b16 %v2052
  %v2136 = vunpack.c.l.b16 %v2053
  %v2137 = vunpack.c.h.b16 %v2053
  %v2138 = vunpack.c.l.b16 %v2054
  %v2139 = vunpack.c.h.b16 %v2054
  %v2140 = vunpack.c.l.b16 %v2055
  %v2141 = vunpack.c.h.b16 %v2055
  %v2142 = vunpack.c.l.b16 %v2056
  %v2143 = vunpack.c.h.b16 %v2056
  %v2144 = vunpack.c.l.b16 %v2057
  %v2145 = vunpack.c.h.b16 %v2057
  %v2146 = vunpack.c.l.b16 %v2058
  %v2147 = vunpack.c.h.b16 %v2058
  %v2148 = vunpack.c.l.b16 %v2059
  %v2149 = vunpack.c.h.b16 %v2059
  %v2150 = vunpack.c.l.b16 %v2060
  %v2151 = vunpack.c.h.b16 %v2060
  %v2152 = vunpack.c.l.b16 %v2061
  %v2153 = vunpack.c.h.b16 %v2061
  %v2154 = vunpack.c.l.b16 %v2062
  %v2155 = vunpack.c.h.b16 %v2062
  %v2156 = vunpack.c.l.b16 %v2063
  %v2157 = vunpack.c.h.b16 %v2063
  %v2158 = vunpack.c.l.b16 %v2064
  %v2159 = vunpack.c.h.b16 %v2064
  %v2160 = vunpack.c.l.b16 %v2065
  %v2161 = vunpack.c.h.b16 %v2065
  %v2162 = vunpack.c.l.b16 %v2066
  %v2163 = vunpack.c.h.b16 %v2066
  %v2164 = vunpack.c.l.b16 %v2067
  %v2165 = vunpack.c.h.b16 %v2067
  %v2166 = vunpack.c.l.b16 %v2068
  %v2167 = vunpack.c.h.b16 %v2068
  %v2168 = vunpack.c.l.b16 %v2069
  %v2169 = vunpack.c.h.b16 %v2069
  %v2170 = vunpack.c.l.b16 %v2070
  %v2171 = vunpack.c.h.b16 %v2070
  %v2172 = vunpack.c.l.b16 %v2071
  %v2173 = vunpack.c.h.b16 %v2071
  %v2174 = vunpack.c.l.b16 %v2072
  %v2175 = vunpack.c.h.b16 %v2072
  %v2176 = vpack.c.b16 %v2116, %v2112
  %v2177 = vpack.c.b16 %v2117, %v2113
  %v2178 = vpack.c.b16 %v2118, %v2114
  %v2179 = vpack.c.b16 %v2119, %v2115
  %v2180 = vpack.c.b16 %v2124, %v2120
  %v2181 = vpack.c.b16 %v2125, %v2121
  %v2182 = vpack.c.b16 %v2126, %v2122
  %v2183 = vpack.c.b16 %v2127, %v2123
  %v2184 = vpack.c.b16 %v2132, %v2128
  %v2185 = vpack.c.b16 %v2133, %v2129
  %v2186 = vpack.c.b16 %v2134, %v2130
  %v2187 = vpack.c.b16 %v2135, %v2131
  %v2188 = vpack.c.b16 %v2140, %v2136
  %v2189 = vpack.c.b16 %v2141, %v2137
  %v2190 = vpack.c.b16 %v2142, %v2138
  %v2191 = vpack.c.b16 %v2143, %v2139
  %v2192 = vpack.c.b16 %v2148, %v2144
  %v2193 = vpack.c.b16 %v2149, %v2145
  %v2194 = vpack.c.b16 %v2150, %v2146
  %v2195 = vpack.c.b16 %v2151, %v2147
  %v2196 = vpack.c.b16 %v2156, %v2152
  %v2197 = vpack.c.b16 %v2157, %v2153
  %v2198 = vpack.c.b16 %v2158, %v2154
  %v2199 = vpack.c.b16 %v2159, %v2155
  %v2200 = vpack.c.b16 %v2164, %v2160
  %v2201 = vpack.c.b16 %v2165, %v2161
  %v2202 = vpack.c.b16 %v2166, %v2162
  %v2203 = vpack.c.b16 %v2167, %v2163
  %v2204 = vpack.c.b16 %v2172, %v2168
  %v2205 = vpack.c.b16 %v2173, %v2169
  %v2206 = vpack.c.b16 %v2174, %v2170
  %v2207 = vpack.c.b16 %v2175, %v2171
  %2240 = vmatpush.bf16.msra.mxu0 %v2204
  %2241 = vmatpush.bf16.msra.mxu0 %v2200
  %2242 = vmatpush.bf16.msra.mxu0 %v2196
  %2243 = vmatpush.bf16.msra.mxu0 %v2192
  %2244 = vmatpush.bf16.msra.mxu0 %v2188
  %2245 = vmatpush.bf16.msra.mxu0 %v2184
  %2246 = vmatpush.bf16.msra.mxu0 %v2180
  %2247 = vmatpush.bf16.msra.mxu0 %v2176
  %2248 = vmatmul.bf16.gmra.mxu0 %v2040
  %v2249 = vpop.f32.mrf.mxu0
  %v2250 = vadd.f32 %v2076, %v2249
  %v2251 = vpop.f32.mrf.mxu0
  %2252 = vdwg.mxu0
  %2253 = vmatpush.bf16.msra.mxu0 %v2205
  %2254 = vmatpush.bf16.msra.mxu0 %v2201
  %2255 = vmatpush.bf16.msra.mxu0 %v2197
  %2256 = vmatpush.bf16.msra.mxu0 %v2193
  %2257 = vmatpush.bf16.msra.mxu0 %v2189
  %2258 = vmatpush.bf16.msra.mxu0 %v2185
  %2259 = vmatpush.bf16.msra.mxu0 %v2181
  %2260 = vmatpush.bf16.msra.mxu0 %v2177
  %2261 = vmatmul.bf16.gmra.mxu0 %v2040
  %v2262 = vpop.f32.mrf.mxu0
  %v2263 = vadd.f32 %v2077, %v2262
  %v2264 = vpop.f32.mrf.mxu0
  %2265 = vdwg.mxu0
  %2266 = vmatpush.bf16.msra.mxu0 %v2206
  %2267 = vmatpush.bf16.msra.mxu0 %v2202
  %2268 = vmatpush.bf16.msra.mxu0 %v2198
  %2269 = vmatpush.bf16.msra.mxu0 %v2194
  %2270 = vmatpush.bf16.msra.mxu0 %v2190
  %2271 = vmatpush.bf16.msra.mxu0 %v2186
  %2272 = vmatpush.bf16.msra.mxu0 %v2182
  %2273 = vmatpush.bf16.msra.mxu0 %v2178
  %2274 = vmatmul.bf16.gmra.mxu0 %v2040
  %v2275 = vpop.f32.mrf.mxu0
  %v2276 = vadd.f32 %v2078, %v2275
  %v2277 = vpop.f32.mrf.mxu0
  %2278 = vdwg.mxu0
  %2279 = vmatpush.bf16.msra.mxu0 %v2207
  %2280 = vmatpush.bf16.msra.mxu0 %v2203
  %2281 = vmatpush.bf16.msra.mxu0 %v2199
  %2282 = vmatpush.bf16.msra.mxu0 %v2195
  %2283 = vmatpush.bf16.msra.mxu0 %v2191
  %2284 = vmatpush.bf16.msra.mxu0 %v2187
  %2285 = vmatpush.bf16.msra.mxu0 %v2183
  %2286 = vmatpush.bf16.msra.mxu0 %v2179
  %2287 = vmatmul.bf16.gmra.mxu0 %v2040
  %v2288 = vpop.f32.mrf.mxu0
  %v2289 = vadd.f32 %v2079, %v2288
  %v2290 = vpop.f32.mrf.mxu0
  %2291 = vdwg.mxu0
  %v2292 = vxor.u32 %v2250, 2147483648
  %v2293 = vmul.f32 %v2292, 1.442695
  %v2294 = vpow.pop %v2293
  %v2295 = vadd.f32 %v2294, 1.0
  %v2296 = vrcp.pop %v2295
  %v2297 = vmul.f32 %v2295, %v2296
  %v2298 = vsub.f32 1.0, %v2297
  %v2299 = vmul.f32 %v2296, %v2298
  %v2300 = vadd.f32 %v2296, %v2299
  %vm2301 = vweird.f32 %v2295
  %vm2302 = vweird.f32 %v2296
  %vm2303 = vmor %vm2301, %vm2302
  %v2304 = vsel %vm2303, %v2296, %v2300
  %v2305 = vand.u32 2147483647, %v2295
  %vm2306 = vcmp.eq.f32.partialorder %v2305, 8.507059e+37
  %v2307 = vand.u32 %v2295, 2147483648
  %v2308 = vor.u32 1.1754944e-38, %v2307
  %v2309 = vsel %vm2306, %v2308, %v2304
  %v2310 = vmul.f32 1.0, %v2309
  %v2311 = vxor.u32 %v2263, 2147483648
  %v2312 = vmul.f32 %v2311, 1.442695
  %v2313 = vpow.pop %v2312
  %v2314 = vadd.f32 %v2313, 1.0
  %v2315 = vrcp.pop %v2314
  %v2316 = vmul.f32 %v2314, %v2315
  %v2317 = vsub.f32 1.0, %v2316
  %v2318 = vmul.f32 %v2315, %v2317
  %v2319 = vadd.f32 %v2315, %v2318
  %vm2320 = vweird.f32 %v2314
  %vm2321 = vweird.f32 %v2315
  %vm2322 = vmor %vm2320, %vm2321
  %v2323 = vsel %vm2322, %v2315, %v2319
  %v2324 = vand.u32 2147483647, %v2314
  %vm2325 = vcmp.eq.f32.partialorder %v2324, 8.507059e+37
  %v2326 = vand.u32 %v2314, 2147483648
  %v2327 = vor.u32 1.1754944e-38, %v2326
  %v2328 = vsel %vm2325, %v2327, %v2323
  %v2329 = vmul.f32 1.0, %v2328
  %v2330 = vtanh.pop %v2276
  %v2331 = vxor.u32 %v2289, 2147483648
  %v2332 = vmul.f32 %v2331, 1.442695
  %v2333 = vpow.pop %v2332
  %v2334 = vadd.f32 %v2333, 1.0
  %v2335 = vrcp.pop %v2334
  %v2336 = vmul.f32 %v2334, %v2335
  %v2337 = vsub.f32 1.0, %v2336
  %v2338 = vmul.f32 %v2335, %v2337
  %v2339 = vadd.f32 %v2335, %v2338
  %vm2340 = vweird.f32 %v2334
  %vm2341 = vweird.f32 %v2335
  %vm2342 = vmor %vm2340, %vm2341
  %v2343 = vsel %vm2342, %v2335, %v2339
  %v2344 = vand.u32 2147483647, %v2334
  %vm2345 = vcmp.eq.f32.partialorder %v2344, 8.507059e+37
  %v2346 = vand.u32 %v2334, 2147483648
  %v2347 = vor.u32 1.1754944e-38, %v2346
  %v2348 = vsel %vm2345, %v2347, %v2343
  %v2349 = vmul.f32 1.0, %v2348
  %v2350 = vmul.f32 %v2329, %v2026
  %v2351 = vmul.f32 %v2310, %v2330
  %v2352 = vadd.f32 %v2350, %v2351
  %v2353 = vtanh.pop %v2352
  %v2354 = vmul.f32 %v2349, %v2353
  %s2355 = scalar_lea.vmem %s6, 40
  %2356 = vst [vmem:[%s2355] sm:$0xff] %v2354
  %v2357 = vmax.f32 %v2031, %v2354
  %v2358 = vsub.f32 %v2031, %v2357
  %v2359 = vmul.f32 %v2358, 1.442695
  %v2360 = vpow.pop %v2359
  %v2361 = vmul.f32 %v2039, %v2360
  %v2362 = vsub.f32 %v2354, %v2357
  %v2363 = vmul.f32 %v2362, 1.442695
  %v2364 = vpow.pop %v2363
  %v2365 = vadd.f32 %v2361, %v2364
  %v2366 = vpack.c.bf16 %v2354, %v2354
  %v2367 = vld [vmem:[%s4] sm:$0xff]
  %v2368 = vld [vmem:[%s4 + $0x8] sm:$0xff]
  %v2369 = vld [vmem:[%s4 + $0x10] sm:$0xff]
  %v2370 = vld [vmem:[%s4 + $0x18] sm:$0xff]
  %v2371 = vld [vmem:[%s4 + $0x20] sm:$0xff]
  %v2372 = vld [vmem:[%s4 + $0x28] sm:$0xff]
  %v2373 = vld [vmem:[%s4 + $0x30] sm:$0xff]
  %v2374 = vld [vmem:[%s4 + $0x38] sm:$0xff]
  %v2375 = vld [vmem:[%s4 + $0x40] sm:$0xff]
  %v2376 = vld [vmem:[%s4 + $0x48] sm:$0xff]
  %v2377 = vld [vmem:[%s4 + $0x50] sm:$0xff]
  %v2378 = vld [vmem:[%s4 + $0x58] sm:$0xff]
  %v2379 = vld [vmem:[%s4 + $0x60] sm:$0xff]
  %v2380 = vld [vmem:[%s4 + $0x68] sm:$0xff]
  %v2381 = vld [vmem:[%s4 + $0x70] sm:$0xff]
  %v2382 = vld [vmem:[%s4 + $0x78] sm:$0xff]
  %v2383 = vld [vmem:[%s4 + $0x80] sm:$0xff]
  %v2384 = vld [vmem:[%s4 + $0x88] sm:$0xff]
  %v2385 = vld [vmem:[%s4 + $0x90] sm:$0xff]
  %v2386 = vld [vmem:[%s4 + $0x98] sm:$0xff]
  %v2387 = vld [vmem:[%s4 + $0xa0] sm:$0xff]
  %v2388 = vld [vmem:[%s4 + $0xa8] sm:$0xff]
  %v2389 = vld [vmem:[%s4 + $0xb0] sm:$0xff]
  %v2390 = vld [vmem:[%s4 + $0xb8] sm:$0xff]
  %v2391 = vld [vmem:[%s4 + $0xc0] sm:$0xff]
  %v2392 = vld [vmem:[%s4 + $0xc8] sm:$0xff]
  %v2393 = vld [vmem:[%s4 + $0xd0] sm:$0xff]
  %v2394 = vld [vmem:[%s4 + $0xd8] sm:$0xff]
  %v2395 = vld [vmem:[%s4 + $0xe0] sm:$0xff]
  %v2396 = vld [vmem:[%s4 + $0xe8] sm:$0xff]
  %v2397 = vld [vmem:[%s4 + $0xf0] sm:$0xff]
  %v2398 = vld [vmem:[%s4 + $0xf8] sm:$0xff]
  %s2399 = scalar_lea.vmem [#allocation2], 96
  %v2400 = vld [vmem:[%s2399] sm:$0xff]
  %v2401 = vld [vmem:[%s2399 + $0x8] sm:$0xff]
  %v2402 = vunpack.c.l.bf16 %v2400
  %v2403 = vunpack.c.h.bf16 %v2400
  %v2404 = vunpack.c.l.bf16 %v2401
  %v2405 = vunpack.c.h.bf16 %v2401
  %v2438 = vunpack.c.l.b16 %v2367
  %v2439 = vunpack.c.h.b16 %v2367
  %v2440 = vunpack.c.l.b16 %v2368
  %v2441 = vunpack.c.h.b16 %v2368
  %v2442 = vunpack.c.l.b16 %v2369
  %v2443 = vunpack.c.h.b16 %v2369
  %v2444 = vunpack.c.l.b16 %v2370
  %v2445 = vunpack.c.h.b16 %v2370
  %v2446 = vunpack.c.l.b16 %v2371
  %v2447 = vunpack.c.h.b16 %v2371
  %v2448 = vunpack.c.l.b16 %v2372
  %v2449 = vunpack.c.h.b16 %v2372
  %v2450 = vunpack.c.l.b16 %v2373
  %v2451 = vunpack.c.h.b16 %v2373
  %v2452 = vunpack.c.l.b16 %v2374
  %v2453 = vunpack.c.h.b16 %v2374
  %v2454 = vunpack.c.l.b16 %v2375
  %v2455 = vunpack.c.h.b16 %v2375
  %v2456 = vunpack.c.l.b16 %v2376
  %v2457 = vunpack.c.h.b16 %v2376
  %v2458 = vunpack.c.l.b16 %v2377
  %v2459 = vunpack.c.h.b16 %v2377
  %v2460 = vunpack.c.l.b16 %v2378
  %v2461 = vunpack.c.h.b16 %v2378
  %v2462 = vunpack.c.l.b16 %v2379
  %v2463 = vunpack.c.h.b16 %v2379
  %v2464 = vunpack.c.l.b16 %v2380
  %v2465 = vunpack.c.h.b16 %v2380
  %v2466 = vunpack.c.l.b16 %v2381
  %v2467 = vunpack.c.h.b16 %v2381
  %v2468 = vunpack.c.l.b16 %v2382
  %v2469 = vunpack.c.h.b16 %v2382
  %v2470 = vunpack.c.l.b16 %v2383
  %v2471 = vunpack.c.h.b16 %v2383
  %v2472 = vunpack.c.l.b16 %v2384
  %v2473 = vunpack.c.h.b16 %v2384
  %v2474 = vunpack.c.l.b16 %v2385
  %v2475 = vunpack.c.h.b16 %v2385
  %v2476 = vunpack.c.l.b16 %v2386
  %v2477 = vunpack.c.h.b16 %v2386
  %v2478 = vunpack.c.l.b16 %v2387
  %v2479 = vunpack.c.h.b16 %v2387
  %v2480 = vunpack.c.l.b16 %v2388
  %v2481 = vunpack.c.h.b16 %v2388
  %v2482 = vunpack.c.l.b16 %v2389
  %v2483 = vunpack.c.h.b16 %v2389
  %v2484 = vunpack.c.l.b16 %v2390
  %v2485 = vunpack.c.h.b16 %v2390
  %v2486 = vunpack.c.l.b16 %v2391
  %v2487 = vunpack.c.h.b16 %v2391
  %v2488 = vunpack.c.l.b16 %v2392
  %v2489 = vunpack.c.h.b16 %v2392
  %v2490 = vunpack.c.l.b16 %v2393
  %v2491 = vunpack.c.h.b16 %v2393
  %v2492 = vunpack.c.l.b16 %v2394
  %v2493 = vunpack.c.h.b16 %v2394
  %v2494 = vunpack.c.l.b16 %v2395
  %v2495 = vunpack.c.h.b16 %v2395
  %v2496 = vunpack.c.l.b16 %v2396
  %v2497 = vunpack.c.h.b16 %v2396
  %v2498 = vunpack.c.l.b16 %v2397
  %v2499 = vunpack.c.h.b16 %v2397
  %v2500 = vunpack.c.l.b16 %v2398
  %v2501 = vunpack.c.h.b16 %v2398
  %v2502 = vpack.c.b16 %v2442, %v2438
  %v2503 = vpack.c.b16 %v2443, %v2439
  %v2504 = vpack.c.b16 %v2444, %v2440
  %v2505 = vpack.c.b16 %v2445, %v2441
  %v2506 = vpack.c.b16 %v2450, %v2446
  %v2507 = vpack.c.b16 %v2451, %v2447
  %v2508 = vpack.c.b16 %v2452, %v2448
  %v2509 = vpack.c.b16 %v2453, %v2449
  %v2510 = vpack.c.b16 %v2458, %v2454
  %v2511 = vpack.c.b16 %v2459, %v2455
  %v2512 = vpack.c.b16 %v2460, %v2456
  %v2513 = vpack.c.b16 %v2461, %v2457
  %v2514 = vpack.c.b16 %v2466, %v2462
  %v2515 = vpack.c.b16 %v2467, %v2463
  %v2516 = vpack.c.b16 %v2468, %v2464
  %v2517 = vpack.c.b16 %v2469, %v2465
  %v2518 = vpack.c.b16 %v2474, %v2470
  %v2519 = vpack.c.b16 %v2475, %v2471
  %v2520 = vpack.c.b16 %v2476, %v2472
  %v2521 = vpack.c.b16 %v2477, %v2473
  %v2522 = vpack.c.b16 %v2482, %v2478
  %v2523 = vpack.c.b16 %v2483, %v2479
  %v2524 = vpack.c.b16 %v2484, %v2480
  %v2525 = vpack.c.b16 %v2485, %v2481
  %v2526 = vpack.c.b16 %v2490, %v2486
  %v2527 = vpack.c.b16 %v2491, %v2487
  %v2528 = vpack.c.b16 %v2492, %v2488
  %v2529 = vpack.c.b16 %v2493, %v2489
  %v2530 = vpack.c.b16 %v2498, %v2494
  %v2531 = vpack.c.b16 %v2499, %v2495
  %v2532 = vpack.c.b16 %v2500, %v2496
  %v2533 = vpack.c.b16 %v2501, %v2497
  %2566 = vmatpush.bf16.msra.mxu0 %v2530
  %2567 = vmatpush.bf16.msra.mxu0 %v2526
  %2568 = vmatpush.bf16.msra.mxu0 %v2522
  %2569 = vmatpush.bf16.msra.mxu0 %v2518
  %2570 = vmatpush.bf16.msra.mxu0 %v2514
  %2571 = vmatpush.bf16.msra.mxu0 %v2510
  %2572 = vmatpush.bf16.msra.mxu0 %v2506
  %2573 = vmatpush.bf16.msra.mxu0 %v2502
  %2574 = vmatmul.bf16.gmra.mxu0 %v2366
  %v2575 = vpop.f32.mrf.mxu0
  %v2576 = vadd.f32 %v2402, %v2575
  %v2577 = vpop.f32.mrf.mxu0
  %2578 = vdwg.mxu0
  %2579 = vmatpush.bf16.msra.mxu0 %v2531
  %2580 = vmatpush.bf16.msra.mxu0 %v2527
  %2581 = vmatpush.bf16.msra.mxu0 %v2523
  %2582 = vmatpush.bf16.msra.mxu0 %v2519
  %2583 = vmatpush.bf16.msra.mxu0 %v2515
  %2584 = vmatpush.bf16.msra.mxu0 %v2511
  %2585 = vmatpush.bf16.msra.mxu0 %v2507
  %2586 = vmatpush.bf16.msra.mxu0 %v2503
  %2587 = vmatmul.bf16.gmra.mxu0 %v2366
  %v2588 = vpop.f32.mrf.mxu0
  %v2589 = vadd.f32 %v2403, %v2588
  %v2590 = vpop.f32.mrf.mxu0
  %2591 = vdwg.mxu0
  %2592 = vmatpush.bf16.msra.mxu0 %v2532
  %2593 = vmatpush.bf16.msra.mxu0 %v2528
  %2594 = vmatpush.bf16.msra.mxu0 %v2524
  %2595 = vmatpush.bf16.msra.mxu0 %v2520
  %2596 = vmatpush.bf16.msra.mxu0 %v2516
  %2597 = vmatpush.bf16.msra.mxu0 %v2512
  %2598 = vmatpush.bf16.msra.mxu0 %v2508
  %2599 = vmatpush.bf16.msra.mxu0 %v2504
  %2600 = vmatmul.bf16.gmra.mxu0 %v2366
  %v2601 = vpop.f32.mrf.mxu0
  %v2602 = vadd.f32 %v2404, %v2601
  %v2603 = vpop.f32.mrf.mxu0
  %2604 = vdwg.mxu0
  %2605 = vmatpush.bf16.msra.mxu0 %v2533
  %2606 = vmatpush.bf16.msra.mxu0 %v2529
  %2607 = vmatpush.bf16.msra.mxu0 %v2525
  %2608 = vmatpush.bf16.msra.mxu0 %v2521
  %2609 = vmatpush.bf16.msra.mxu0 %v2517
  %2610 = vmatpush.bf16.msra.mxu0 %v2513
  %2611 = vmatpush.bf16.msra.mxu0 %v2509
  %2612 = vmatpush.bf16.msra.mxu0 %v2505
  %2613 = vmatmul.bf16.gmra.mxu0 %v2366
  %v2614 = vpop.f32.mrf.mxu0
  %v2615 = vadd.f32 %v2405, %v2614
  %v2616 = vpop.f32.mrf.mxu0
  %2617 = vdwg.mxu0
  %v2618 = vxor.u32 %v2576, 2147483648
  %v2619 = vmul.f32 %v2618, 1.442695
  %v2620 = vpow.pop %v2619
  %v2621 = vadd.f32 %v2620, 1.0
  %v2622 = vrcp.pop %v2621
  %v2623 = vmul.f32 %v2621, %v2622
  %v2624 = vsub.f32 1.0, %v2623
  %v2625 = vmul.f32 %v2622, %v2624
  %v2626 = vadd.f32 %v2622, %v2625
  %vm2627 = vweird.f32 %v2621
  %vm2628 = vweird.f32 %v2622
  %vm2629 = vmor %vm2627, %vm2628
  %v2630 = vsel %vm2629, %v2622, %v2626
  %v2631 = vand.u32 2147483647, %v2621
  %vm2632 = vcmp.eq.f32.partialorder %v2631, 8.507059e+37
  %v2633 = vand.u32 %v2621, 2147483648
  %v2634 = vor.u32 1.1754944e-38, %v2633
  %v2635 = vsel %vm2632, %v2634, %v2630
  %v2636 = vmul.f32 1.0, %v2635
  %v2637 = vxor.u32 %v2589, 2147483648
  %v2638 = vmul.f32 %v2637, 1.442695
  %v2639 = vpow.pop %v2638
  %v2640 = vadd.f32 %v2639, 1.0
  %v2641 = vrcp.pop %v2640
  %v2642 = vmul.f32 %v2640, %v2641
  %v2643 = vsub.f32 1.0, %v2642
  %v2644 = vmul.f32 %v2641, %v2643
  %v2645 = vadd.f32 %v2641, %v2644
  %vm2646 = vweird.f32 %v2640
  %vm2647 = vweird.f32 %v2641
  %vm2648 = vmor %vm2646, %vm2647
  %v2649 = vsel %vm2648, %v2641, %v2645
  %v2650 = vand.u32 2147483647, %v2640
  %vm2651 = vcmp.eq.f32.partialorder %v2650, 8.507059e+37
  %v2652 = vand.u32 %v2640, 2147483648
  %v2653 = vor.u32 1.1754944e-38, %v2652
  %v2654 = vsel %vm2651, %v2653, %v2649
  %v2655 = vmul.f32 1.0, %v2654
  %v2656 = vtanh.pop %v2602
  %v2657 = vxor.u32 %v2615, 2147483648
  %v2658 = vmul.f32 %v2657, 1.442695
  %v2659 = vpow.pop %v2658
  %v2660 = vadd.f32 %v2659, 1.0
  %v2661 = vrcp.pop %v2660
  %v2662 = vmul.f32 %v2660, %v2661
  %v2663 = vsub.f32 1.0, %v2662
  %v2664 = vmul.f32 %v2661, %v2663
  %v2665 = vadd.f32 %v2661, %v2664
  %vm2666 = vweird.f32 %v2660
  %vm2667 = vweird.f32 %v2661
  %vm2668 = vmor %vm2666, %vm2667
  %v2669 = vsel %vm2668, %v2661, %v2665
  %v2670 = vand.u32 2147483647, %v2660
  %vm2671 = vcmp.eq.f32.partialorder %v2670, 8.507059e+37
  %v2672 = vand.u32 %v2660, 2147483648
  %v2673 = vor.u32 1.1754944e-38, %v2672
  %v2674 = vsel %vm2671, %v2673, %v2669
  %v2675 = vmul.f32 1.0, %v2674
  %v2676 = vmul.f32 %v2655, %v2352
  %v2677 = vmul.f32 %v2636, %v2656
  %v2678 = vadd.f32 %v2676, %v2677
  %v2679 = vtanh.pop %v2678
  %v2680 = vmul.f32 %v2675, %v2679
  %s2681 = scalar_lea.vmem %s6, 48
  %2682 = vst [vmem:[%s2681] sm:$0xff] %v2680
  %v2683 = vmax.f32 %v2357, %v2680
  %v2684 = vsub.f32 %v2357, %v2683
  %v2685 = vmul.f32 %v2684, 1.442695
  %v2686 = vpow.pop %v2685
  %v2687 = vmul.f32 %v2365, %v2686
  %v2688 = vsub.f32 %v2680, %v2683
  %v2689 = vmul.f32 %v2688, 1.442695
  %v2690 = vpow.pop %v2689
  %v2691 = vadd.f32 %v2687, %v2690
  %v2692 = vpack.c.bf16 %v2680, %v2680
  %v2693 = vld [vmem:[%s4] sm:$0xff]
  %v2694 = vld [vmem:[%s4 + $0x8] sm:$0xff]
  %v2695 = vld [vmem:[%s4 + $0x10] sm:$0xff]
  %v2696 = vld [vmem:[%s4 + $0x18] sm:$0xff]
  %v2697 = vld [vmem:[%s4 + $0x20] sm:$0xff]
  %v2698 = vld [vmem:[%s4 + $0x28] sm:$0xff]
  %v2699 = vld [vmem:[%s4 + $0x30] sm:$0xff]
  %v2700 = vld [vmem:[%s4 + $0x38] sm:$0xff]
  %v2701 = vld [vmem:[%s4 + $0x40] sm:$0xff]
  %v2702 = vld [vmem:[%s4 + $0x48] sm:$0xff]
  %v2703 = vld [vmem:[%s4 + $0x50] sm:$0xff]
  %v2704 = vld [vmem:[%s4 + $0x58] sm:$0xff]
  %v2705 = vld [vmem:[%s4 + $0x60] sm:$0xff]
  %v2706 = vld [vmem:[%s4 + $0x68] sm:$0xff]
  %v2707 = vld [vmem:[%s4 + $0x70] sm:$0xff]
  %v2708 = vld [vmem:[%s4 + $0x78] sm:$0xff]
  %v2709 = vld [vmem:[%s4 + $0x80] sm:$0xff]
  %v2710 = vld [vmem:[%s4 + $0x88] sm:$0xff]
  %v2711 = vld [vmem:[%s4 + $0x90] sm:$0xff]
  %v2712 = vld [vmem:[%s4 + $0x98] sm:$0xff]
  %v2713 = vld [vmem:[%s4 + $0xa0] sm:$0xff]
  %v2714 = vld [vmem:[%s4 + $0xa8] sm:$0xff]
  %v2715 = vld [vmem:[%s4 + $0xb0] sm:$0xff]
  %v2716 = vld [vmem:[%s4 + $0xb8] sm:$0xff]
  %v2717 = vld [vmem:[%s4 + $0xc0] sm:$0xff]
  %v2718 = vld [vmem:[%s4 + $0xc8] sm:$0xff]
  %v2719 = vld [vmem:[%s4 + $0xd0] sm:$0xff]
  %v2720 = vld [vmem:[%s4 + $0xd8] sm:$0xff]
  %v2721 = vld [vmem:[%s4 + $0xe0] sm:$0xff]
  %v2722 = vld [vmem:[%s4 + $0xe8] sm:$0xff]
  %v2723 = vld [vmem:[%s4 + $0xf0] sm:$0xff]
  %v2724 = vld [vmem:[%s4 + $0xf8] sm:$0xff]
  %s2725 = scalar_lea.vmem [#allocation2], 112
  %v2726 = vld [vmem:[%s2725] sm:$0xff]
  %v2727 = vld [vmem:[%s2725 + $0x8] sm:$0xff]
  %v2728 = vunpack.c.l.bf16 %v2726
  %v2729 = vunpack.c.h.bf16 %v2726
  %v2730 = vunpack.c.l.bf16 %v2727
  %v2731 = vunpack.c.h.bf16 %v2727
  %v2764 = vunpack.c.l.b16 %v2693
  %v2765 = vunpack.c.h.b16 %v2693
  %v2766 = vunpack.c.l.b16 %v2694
  %v2767 = vunpack.c.h.b16 %v2694
  %v2768 = vunpack.c.l.b16 %v2695
  %v2769 = vunpack.c.h.b16 %v2695
  %v2770 = vunpack.c.l.b16 %v2696
  %v2771 = vunpack.c.h.b16 %v2696
  %v2772 = vunpack.c.l.b16 %v2697
  %v2773 = vunpack.c.h.b16 %v2697
  %v2774 = vunpack.c.l.b16 %v2698
  %v2775 = vunpack.c.h.b16 %v2698
  %v2776 = vunpack.c.l.b16 %v2699
  %v2777 = vunpack.c.h.b16 %v2699
  %v2778 = vunpack.c.l.b16 %v2700
  %v2779 = vunpack.c.h.b16 %v2700
  %v2780 = vunpack.c.l.b16 %v2701
  %v2781 = vunpack.c.h.b16 %v2701
  %v2782 = vunpack.c.l.b16 %v2702
  %v2783 = vunpack.c.h.b16 %v2702
  %v2784 = vunpack.c.l.b16 %v2703
  %v2785 = vunpack.c.h.b16 %v2703
  %v2786 = vunpack.c.l.b16 %v2704
  %v2787 = vunpack.c.h.b16 %v2704
  %v2788 = vunpack.c.l.b16 %v2705
  %v2789 = vunpack.c.h.b16 %v2705
  %v2790 = vunpack.c.l.b16 %v2706
  %v2791 = vunpack.c.h.b16 %v2706
  %v2792 = vunpack.c.l.b16 %v2707
  %v2793 = vunpack.c.h.b16 %v2707
  %v2794 = vunpack.c.l.b16 %v2708
  %v2795 = vunpack.c.h.b16 %v2708
  %v2796 = vunpack.c.l.b16 %v2709
  %v2797 = vunpack.c.h.b16 %v2709
  %v2798 = vunpack.c.l.b16 %v2710
  %v2799 = vunpack.c.h.b16 %v2710
  %v2800 = vunpack.c.l.b16 %v2711
  %v2801 = vunpack.c.h.b16 %v2711
  %v2802 = vunpack.c.l.b16 %v2712
  %v2803 = vunpack.c.h.b16 %v2712
  %v2804 = vunpack.c.l.b16 %v2713
  %v2805 = vunpack.c.h.b16 %v2713
  %v2806 = vunpack.c.l.b16 %v2714
  %v2807 = vunpack.c.h.b16 %v2714
  %v2808 = vunpack.c.l.b16 %v2715
  %v2809 = vunpack.c.h.b16 %v2715
  %v2810 = vunpack.c.l.b16 %v2716
  %v2811 = vunpack.c.h.b16 %v2716
  %v2812 = vunpack.c.l.b16 %v2717
  %v2813 = vunpack.c.h.b16 %v2717
  %v2814 = vunpack.c.l.b16 %v2718
  %v2815 = vunpack.c.h.b16 %v2718
  %v2816 = vunpack.c.l.b16 %v2719
  %v2817 = vunpack.c.h.b16 %v2719
  %v2818 = vunpack.c.l.b16 %v2720
  %v2819 = vunpack.c.h.b16 %v2720
  %v2820 = vunpack.c.l.b16 %v2721
  %v2821 = vunpack.c.h.b16 %v2721
  %v2822 = vunpack.c.l.b16 %v2722
  %v2823 = vunpack.c.h.b16 %v2722
  %v2824 = vunpack.c.l.b16 %v2723
  %v2825 = vunpack.c.h.b16 %v2723
  %v2826 = vunpack.c.l.b16 %v2724
  %v2827 = vunpack.c.h.b16 %v2724
  %v2828 = vpack.c.b16 %v2768, %v2764
  %v2829 = vpack.c.b16 %v2769, %v2765
  %v2830 = vpack.c.b16 %v2770, %v2766
  %v2831 = vpack.c.b16 %v2771, %v2767
  %v2832 = vpack.c.b16 %v2776, %v2772
  %v2833 = vpack.c.b16 %v2777, %v2773
  %v2834 = vpack.c.b16 %v2778, %v2774
  %v2835 = vpack.c.b16 %v2779, %v2775
  %v2836 = vpack.c.b16 %v2784, %v2780
  %v2837 = vpack.c.b16 %v2785, %v2781
  %v2838 = vpack.c.b16 %v2786, %v2782
  %v2839 = vpack.c.b16 %v2787, %v2783
  %v2840 = vpack.c.b16 %v2792, %v2788
  %v2841 = vpack.c.b16 %v2793, %v2789
  %v2842 = vpack.c.b16 %v2794, %v2790
  %v2843 = vpack.c.b16 %v2795, %v2791
  %v2844 = vpack.c.b16 %v2800, %v2796
  %v2845 = vpack.c.b16 %v2801, %v2797
  %v2846 = vpack.c.b16 %v2802, %v2798
  %v2847 = vpack.c.b16 %v2803, %v2799
  %v2848 = vpack.c.b16 %v2808, %v2804
  %v2849 = vpack.c.b16 %v2809, %v2805
  %v2850 = vpack.c.b16 %v2810, %v2806
  %v2851 = vpack.c.b16 %v2811, %v2807
  %v2852 = vpack.c.b16 %v2816, %v2812
  %v2853 = vpack.c.b16 %v2817, %v2813
  %v2854 = vpack.c.b16 %v2818, %v2814
  %v2855 = vpack.c.b16 %v2819, %v2815
  %v2856 = vpack.c.b16 %v2824, %v2820
  %v2857 = vpack.c.b16 %v2825, %v2821
  %v2858 = vpack.c.b16 %v2826, %v2822
  %v2859 = vpack.c.b16 %v2827, %v2823
  %2892 = vmatpush.bf16.msra.mxu0 %v2856
  %2893 = vmatpush.bf16.msra.mxu0 %v2852
  %2894 = vmatpush.bf16.msra.mxu0 %v2848
  %2895 = vmatpush.bf16.msra.mxu0 %v2844
  %2896 = vmatpush.bf16.msra.mxu0 %v2840
  %2897 = vmatpush.bf16.msra.mxu0 %v2836
  %2898 = vmatpush.bf16.msra.mxu0 %v2832
  %2899 = vmatpush.bf16.msra.mxu0 %v2828
  %2900 = vmatmul.bf16.gmra.mxu0 %v2692
  %v2901 = vpop.f32.mrf.mxu0
  %v2902 = vadd.f32 %v2728, %v2901
  %v2903 = vpop.f32.mrf.mxu0
  %2904 = vdwg.mxu0
  %2905 = vmatpush.bf16.msra.mxu0 %v2857
  %2906 = vmatpush.bf16.msra.mxu0 %v2853
  %2907 = vmatpush.bf16.msra.mxu0 %v2849
  %2908 = vmatpush.bf16.msra.mxu0 %v2845
  %2909 = vmatpush.bf16.msra.mxu0 %v2841
  %2910 = vmatpush.bf16.msra.mxu0 %v2837
  %2911 = vmatpush.bf16.msra.mxu0 %v2833
  %2912 = vmatpush.bf16.msra.mxu0 %v2829
  %2913 = vmatmul.bf16.gmra.mxu0 %v2692
  %v2914 = vpop.f32.mrf.mxu0
  %v2915 = vadd.f32 %v2729, %v2914
  %v2916 = vpop.f32.mrf.mxu0
  %2917 = vdwg.mxu0
  %2918 = vmatpush.bf16.msra.mxu0 %v2858
  %2919 = vmatpush.bf16.msra.mxu0 %v2854
  %2920 = vmatpush.bf16.msra.mxu0 %v2850
  %2921 = vmatpush.bf16.msra.mxu0 %v2846
  %2922 = vmatpush.bf16.msra.mxu0 %v2842
  %2923 = vmatpush.bf16.msra.mxu0 %v2838
  %2924 = vmatpush.bf16.msra.mxu0 %v2834
  %2925 = vmatpush.bf16.msra.mxu0 %v2830
  %2926 = vmatmul.bf16.gmra.mxu0 %v2692
  %v2927 = vpop.f32.mrf.mxu0
  %v2928 = vadd.f32 %v2730, %v2927
  %v2929 = vpop.f32.mrf.mxu0
  %2930 = vdwg.mxu0
  %2931 = vmatpush.bf16.msra.mxu0 %v2859
  %2932 = vmatpush.bf16.msra.mxu0 %v2855
  %2933 = vmatpush.bf16.msra.mxu0 %v2851
  %2934 = vmatpush.bf16.msra.mxu0 %v2847
  %2935 = vmatpush.bf16.msra.mxu0 %v2843
  %2936 = vmatpush.bf16.msra.mxu0 %v2839
  %2937 = vmatpush.bf16.msra.mxu0 %v2835
  %2938 = vmatpush.bf16.msra.mxu0 %v2831
  %2939 = vmatmul.bf16.gmra.mxu0 %v2692
  %v2940 = vpop.f32.mrf.mxu0
  %v2941 = vadd.f32 %v2731, %v2940
  %v2942 = vpop.f32.mrf.mxu0
  %2943 = vdwg.mxu0
  %v2944 = vxor.u32 %v2902, 2147483648
  %v2945 = vmul.f32 %v2944, 1.442695
  %v2946 = vpow.pop %v2945
  %v2947 = vadd.f32 %v2946, 1.0
  %v2948 = vrcp.pop %v2947
  %v2949 = vmul.f32 %v2947, %v2948
  %v2950 = vsub.f32 1.0, %v2949
  %v2951 = vmul.f32 %v2948, %v2950
  %v2952 = vadd.f32 %v2948, %v2951
  %vm2953 = vweird.f32 %v2947
  %vm2954 = vweird.f32 %v2948
  %vm2955 = vmor %vm2953, %vm2954
  %v2956 = vsel %vm2955, %v2948, %v2952
  %v2957 = vand.u32 2147483647, %v2947
  %vm2958 = vcmp.eq.f32.partialorder %v2957, 8.507059e+37
  %v2959 = vand.u32 %v2947, 2147483648
  %v2960 = vor.u32 1.1754944e-38, %v2959
  %v2961 = vsel %vm2958, %v2960, %v2956
  %v2962 = vmul.f32 1.0, %v2961
  %v2963 = vxor.u32 %v2915, 2147483648
  %v2964 = vmul.f32 %v2963, 1.442695
  %v2965 = vpow.pop %v2964
  %v2966 = vadd.f32 %v2965, 1.0
  %v2967 = vrcp.pop %v2966
  %v2968 = vmul.f32 %v2966, %v2967
  %v2969 = vsub.f32 1.0, %v2968
  %v2970 = vmul.f32 %v2967, %v2969
  %v2971 = vadd.f32 %v2967, %v2970
  %vm2972 = vweird.f32 %v2966
  %vm2973 = vweird.f32 %v2967
  %vm2974 = vmor %vm2972, %vm2973
  %v2975 = vsel %vm2974, %v2967, %v2971
  %v2976 = vand.u32 2147483647, %v2966
  %vm2977 = vcmp.eq.f32.partialorder %v2976, 8.507059e+37
  %v2978 = vand.u32 %v2966, 2147483648
  %v2979 = vor.u32 1.1754944e-38, %v2978
  %v2980 = vsel %vm2977, %v2979, %v2975
  %v2981 = vmul.f32 1.0, %v2980
  %v2982 = vtanh.pop %v2928
  %v2983 = vxor.u32 %v2941, 2147483648
  %v2984 = vmul.f32 %v2983, 1.442695
  %v2985 = vpow.pop %v2984
  %v2986 = vadd.f32 %v2985, 1.0
  %v2987 = vrcp.pop %v2986
  %v2988 = vmul.f32 %v2986, %v2987
  %v2989 = vsub.f32 1.0, %v2988
  %v2990 = vmul.f32 %v2987, %v2989
  %v2991 = vadd.f32 %v2987, %v2990
  %vm2992 = vweird.f32 %v2986
  %vm2993 = vweird.f32 %v2987
  %vm2994 = vmor %vm2992, %vm2993
  %v2995 = vsel %vm2994, %v2987, %v2991
  %v2996 = vand.u32 2147483647, %v2986
  %vm2997 = vcmp.eq.f32.partialorder %v2996, 8.507059e+37
  %v2998 = vand.u32 %v2986, 2147483648
  %v2999 = vor.u32 1.1754944e-38, %v2998
  %v3000 = vsel %vm2997, %v2999, %v2995
  %v3001 = vmul.f32 1.0, %v3000
  %v3002 = vmul.f32 %v2981, %v2678
  %v3003 = vmul.f32 %v2962, %v2982
  %v3004 = vadd.f32 %v3002, %v3003
  %v3005 = vtanh.pop %v3004
  %v3006 = vmul.f32 %v3001, %v3005
  %s3007 = scalar_lea.vmem %s6, 56
  %3008 = vst [vmem:[%s3007] sm:$0xff] %v3006
  %v3009 = vmax.f32 %v2683, %v3006
  %v3010 = vsub.f32 %v2683, %v3009
  %v3011 = vmul.f32 %v3010, 1.442695
  %v3012 = vpow.pop %v3011
  %v3013 = vmul.f32 %v2691, %v3012
  %v3014 = vsub.f32 %v3006, %v3009
  %v3015 = vmul.f32 %v3014, 1.442695
  %v3016 = vpow.pop %v3015
  %v3017 = vadd.f32 %v3013, %v3016
  %3018 = vst [vmem:[%s7] sm:$0xff] %v3006
  %3019 = vst [vmem:[%s8] sm:$0xff] %v3004
  %v3020 = vlog2.pop %v3017
  %v3021 = vmul.f32 %v3020, 0.6931472
  %v3022 = vadd.f32 %v3009, %v3021
  %v3023 = vld [vmem:[%s6] sm:$0xff]
  %v3024 = vsub.f32 %v3023, %v3022
  %3025 = vst [vmem:[%s6] sm:$0xff] %v3024
  %v3026 = vld [vmem:[%s1051] sm:$0xff]
  %v3027 = vsub.f32 %v3026, %v3022
  %3028 = vst [vmem:[%s1051] sm:$0xff] %v3027
  %v3029 = vld [vmem:[%s1377] sm:$0xff]
  %v3030 = vsub.f32 %v3029, %v3022
  %3031 = vst [vmem:[%s1377] sm:$0xff] %v3030
  %v3032 = vld [vmem:[%s1703] sm:$0xff]
  %v3033 = vsub.f32 %v3032, %v3022
  %3034 = vst [vmem:[%s1703] sm:$0xff] %v3033
  %v3035 = vld [vmem:[%s2029] sm:$0xff]
  %v3036 = vsub.f32 %v3035, %v3022
  %3037 = vst [vmem:[%s2029] sm:$0xff] %v3036
  %v3038 = vld [vmem:[%s2355] sm:$0xff]
  %v3039 = vsub.f32 %v3038, %v3022
  %3040 = vst [vmem:[%s2355] sm:$0xff] %v3039
  %v3041 = vld [vmem:[%s2681] sm:$0xff]
  %v3042 = vsub.f32 %v3041, %v3022
  %3043 = vst [vmem:[%s2681] sm:$0xff] %v3042
  %v3044 = vld [vmem:[%s3007] sm:$0xff]
  %v3045 = vsub.f32 %v3044, %v3022
  %3046 = vst [vmem:[%s3007] sm:$0xff] %v3045
  // Predicated region
  $region26: #{decoder_rnn_forward.1} parent=0 // pred_check
    _
  $region27: #{decoder_rnn_forward.1} parent=0 // pred_check_branch
    %3048 = sbr.rel (0) target = $region29
  $region28: #{decoder_rnn_forward.1} parent=0 // pred_region
    _
  $region29: #{decoder_rnn_forward.1} parent=0 // pred_fallthru
    _
  // Predicated region
  $region30: #{decoder_rnn_forward.1} parent=0 // pred_check
    _
  $region31: #{decoder_rnn_forward.1} parent=0 // pred_check_branch
    %3050 = sbr.rel (0) target = $region33
  $region32: #{decoder_rnn_forward.1} parent=0 // pred_region
    _
  $region33: #{decoder_rnn_forward.1} parent=0 // pred_fallthru
    _
  // Predicated region
  $region34: #{decoder_rnn_forward.1} parent=0 // pred_check
    _
  $region35: #{decoder_rnn_forward.1} parent=0 // pred_check_branch
    %3052 = sbr.rel (0) target = $region37
  $region36: #{decoder_rnn_forward.1} parent=0 // pred_region
    _
  $region37: #{decoder_rnn_forward.1} parent=0 // pred_fallthru
    _
  // Predicated region
  $region38: #{decoder_rnn_forward.1} parent=0 // pred_check
    _
  $region39: #{decoder_rnn_forward.1} parent=0 // pred_check_branch
    %3054 = sbr.rel (0) target = $region41
  $region40: #{decoder_rnn_forward.1} parent=0 // pred_region
    _
  $region41: #{decoder_rnn_forward.1} parent=0 // pred_fallthru
    _
  // Predicated region
  $region42: #{decoder_rnn_forward.1} parent=0 // pred_check
    _
  $region43: #{decoder_rnn_forward.1} parent=0 // pred_check_branch
    %3056 = sbr.rel (0) target = $region45
  $region44: #{decoder_rnn_forward.1} parent=0 // pred_region
    _
  $region45: #{decoder_rnn_forward.1} parent=0 // pred_fallthru
    _
  // Predicated region
  $region46: #{decoder_rnn_forward.1} parent=0 // pred_check
    _
  $region47: #{decoder_rnn_forward.1} parent=0 // pred_check_branch
    %3058 = sbr.rel (0) target = $region49
  $region48: #{decoder_rnn_forward.1} parent=0 // pred_region
    _
  $region49: #{decoder_rnn_forward.1} parent=0 // pred_fallthru
    _

</llo_original>
